<compile_context>
chip_gen: v6e
topology: v6e:2x2x1
jax: 0.10.0
libtpu: 0.0.40
codegen_flags: <defaults>
</compile_context>

<pallas_src>
import math

import numpy as np
import jax
import jax.numpy as jnp
from jax.experimental import pallas as pl
from jax.experimental.pallas import tpu as pltpu


# ---------------------------------------------------------------------------
# Fused Pallas kernel
# ---------------------------------------------------------------------------

def _conv_layer(a, r_ref, q_ref, b_ref, relu):
    """One conv layer on a 2-D activation a[Hin, Win*Cin].

    Y = sum_kh (R_kh @ A) @ Q_kh + bias   (optionally ReLU), f32 on the MXU.
    """
    n_taps, h_out, _ = r_ref.shape
    n_out = q_ref.shape[2]
    acc = jnp.zeros((h_out, n_out), jnp.float32)
    for kh in range(n_taps):  # static unroll: 3 or 5 row taps
        rows = jnp.dot(r_ref[kh], a, preferred_element_type=jnp.float32)
        acc = acc + jnp.dot(rows, q_ref[kh], preferred_element_type=jnp.float32)
    acc = acc + b_ref[...]
    if relu:
        acc = jnp.maximum(acc, 0.0)
    return acc


def _fused_kernel(x_ref,
                  r1_ref, q1_ref, b1_ref,
                  r2_ref, q2_ref, b2_ref,
                  r3_ref, q3_ref, b3_ref,
                  o_ref):
    # |x| fused into the first layer (no separate abs pass over HBM).
    a0 = jnp.abs(x_ref[0].astype(jnp.float32))              # [H, W*Cin]
    y1 = _conv_layer(a0, r1_ref, q1_ref, b1_ref, relu=True)   # conv1 3x3 s1 p1
    y2 = _conv_layer(y1, r2_ref, q2_ref, b2_ref, relu=True)   # conv2 5x5 s2 p2
    y3 = _conv_layer(y2, r3_ref, q3_ref, b3_ref, relu=False)  # conv3 5x5 s2 p2
    o_ref[0] = y3.astype(o_ref.dtype)


# ---------------------------------------------------------------------------
# Constant operand builders (wrapper-side, tiny; weight preprocessing only)
# ---------------------------------------------------------------------------

def _row_select(h_in, h_out, k_h, stride, pad):
    """R[kh, ho, hi] = 1 iff hi == stride*ho + kh - pad (zero-pad rows -> 0)."""
    kh = np.arange(k_h)[:, None, None]
    ho = np.arange(h_out)[None, :, None]
    hi = np.arange(h_in)[None, None, :]
    r = (hi == stride * ho + kh - pad).astype(np.float32)
    return jnp.asarray(r)                                     # [Kh, Hout, Hin]


def _col_weight(w_oihw, w_in, w_out, stride, pad):
    """Q[kh, wi*Cin+ci, wo*Cout+co] = W[co,ci,kh, wi - stride*wo + pad] (or 0)."""
    c_out, c_in, k_h, k_w = w_oihw.shape
    wi = np.arange(w_in)[:, None]
    wo = np.arange(w_out)[None, :]
    kw = wi - stride * wo + pad                               # [Win, Wout]
    valid = (kw >= 0) & (kw < k_w)
    kw_c = np.clip(kw, 0, k_w - 1)
    wk = w_oihw[:, :, :, kw_c]                                # [Co, Ci, Kh, Win, Wout]
    wk = wk * jnp.asarray(valid, w_oihw.dtype)[None, None, None, :, :]
    q = jnp.transpose(wk, (2, 3, 1, 4, 0))                    # [Kh, Win, Ci, Wout, Co]
    return q.reshape(k_h, w_in * c_in, w_out * c_out)


def _bias_row(b, w_out):
    """bias row indexed by wo*Cout + co."""
    return jnp.tile(b, w_out)[None, :]                        # [1, Wout*Cout]


# ---------------------------------------------------------------------------
# Forward pass (matches Analysis_Hyper_Net.forward), NCHW in / NCHW out
# ---------------------------------------------------------------------------

def analysis_hyper_net(x_nchw, params):
    B, M, H, W = x_nchw.shape
    N = params["b1"].shape[0]

    def down(s, k=5, st=2, p=2):
        return (s + 2 * p - k) // st + 1

    H1, W1 = H, W                     # conv1: 3x3, stride 1, pad 1 -> same size
    H2, W2 = down(H1), down(W1)       # conv2: 5x5, stride 2, pad 2
    H3, W3 = down(H2), down(W2)       # conv3: 5x5, stride 2, pad 2

    # Input: NCHW -> [B, H, W*Cin]  (one tiny transpose; lane dim = W*Cin)
    x2d = jnp.transpose(x_nchw, (0, 2, 3, 1)).reshape(B, H, W * M)

    r1 = _row_select(H, H1, 3, 1, 1)
    q1 = _col_weight(params["w1"], W, W1, 1, 1)
    b1 = _bias_row(params["b1"], W1)
    r2 = _row_select(H1, H2, 5, 2, 2)
    q2 = _col_weight(params["w2"], W1, W2, 2, 2)
    b2 = _bias_row(params["b2"], W2)
    r3 = _row_select(H2, H3, 5, 2, 2)
    q3 = _col_weight(params["w3"], W2, W3, 2, 2)
    b3 = _bias_row(params["b3"], W3)

    bcast3 = lambda b: (0, 0, 0)      # weight/selector operands: same block every step
    bcast2 = lambda b: (0, 0)

    out2d = pl.pallas_call(
        _fused_kernel,
        out_shape=jax.ShapeDtypeStruct((B, H3, W3 * N), jnp.float32),
        grid=(B,),
        in_specs=[
            pl.BlockSpec((1, H, W * M), lambda b: (b, 0, 0)),
            pl.BlockSpec(r1.shape, bcast3),
            pl.BlockSpec(q1.shape, bcast3),
            pl.BlockSpec(b1.shape, bcast2),
            pl.BlockSpec(r2.shape, bcast3),
            pl.BlockSpec(q2.shape, bcast3),
            pl.BlockSpec(b2.shape, bcast2),
            pl.BlockSpec(r3.shape, bcast3),
            pl.BlockSpec(q3.shape, bcast3),
            pl.BlockSpec(b3.shape, bcast2),
        ],
        out_specs=pl.BlockSpec((1, H3, W3 * N), lambda b: (b, 0, 0)),
        compiler_params=pltpu.CompilerParams(
            dimension_semantics=("parallel",),       # batch across v7x's 2 TCs
            vmem_limit_bytes=32 * 1024 * 1024,
        ),
    )(x2d, r1, q1, b1, r2, q2, b2, r3, q3, b3)

    # [B, H3, W3*N] -> NCHW
    return jnp.transpose(out2d.reshape(B, H3, W3, N), (0, 3, 1, 2))


# ---------------------------------------------------------------------------
# Parameter init (mirrors torch xavier_normal_ + constant bias)
# ---------------------------------------------------------------------------

def xavier_normal(key, shape, gain):
    cout, cin, kh, kw = shape
    fan_in = cin * kh * kw
    fan_out = cout * kh * kw
    std = gain * math.sqrt(2.0 / (fan_in + fan_out))
    return std * jax.random.normal(key, shape, dtype=jnp.float32)


def init_params(key, num_channel_N, num_channel_M):
    k1, k2, k3 = jax.random.split(key, 3)
    N, M = num_channel_N, num_channel_M
    gain1 = math.sqrt(2 * (N + M) / (M + M))
    return {
        "w1": xavier_normal(k1, (N, M, 3, 3), gain1),
        "b1": jnp.full((N,), 0.01, jnp.float32),
        "w2": xavier_normal(k2, (N, N, 5, 5), math.sqrt(2)),
        "b2": jnp.full((N,), 0.01, jnp.float32),
        "w3": xavier_normal(k3, (N, N, 5, 5), math.sqrt(2)),
        "b3": jnp.full((N,), 0.01, jnp.float32),
    }


# ---------------------------------------------------------------------------
# Pure-JAX reference (for a numerical sanity check)
# ---------------------------------------------------------------------------

def reference_forward(x, params):
    dn = ("NCHW", "OIHW", "NCHW")
    y1 = jnp.abs(x)
    y2 = jax.lax.conv_general_dilated(y1, params["w1"], (1, 1), ((1, 1), (1, 1)),
                                      dimension_numbers=dn)
    y2 = jax.nn.relu(y2 + params["b1"][None, :, None, None])
    y3 = jax.lax.conv_general_dilated(y2, params["w2"], (2, 2), ((2, 2), (2, 2)),
                                      dimension_numbers=dn)
    y3 = jax.nn.relu(y3 + params["b2"][None, :, None, None])
    z = jax.lax.conv_general_dilated(y3, params["w3"], (2, 2), ((2, 2), (2, 2)),
                                     dimension_numbers=dn)
    return z + params["b3"][None, :, None, None]


if __name__ == "__main__":
    # Small shapes consistent with the module: B=2, M(in)=8, N(hidden)=8, 16x16.
    num_channel_M = 8
    num_channel_N = 8
    B, H, W = 2, 16, 16

    key = jax.random.PRNGKey(0)
    k_param, k_input = jax.random.split(key)
    params = init_params(k_param, num_channel_N, num_channel_M)
    x = jax.random.normal(k_input, (B, num_channel_M, H, W), dtype=jnp.float32)

    fwd = jax.jit(analysis_hyper_net)
    z = jax.block_until_ready(fwd(x, params))
    assert z.shape == (B, num_channel_N, H // 4, W // 4), z.shape

    z_ref = jax.block_until_ready(reference_forward(x, params))
    err = float(jnp.max(jnp.abs(z - z_ref)))
    assert err < 1e-2, f"max abs error vs reference conv: {err}"

    print("KERNEL_OK")
</pallas_src>

<mosaic_0001>
module attributes {stable_mosaic.version = 11 : i64} {
  func.func @_fused_kernel(%arg0: i32, %arg1: memref<1x16x128xf32, #tpu.memory_space<vmem>>, %arg2: memref<3x16x16xf32, #tpu.memory_space<vmem>>, %arg3: memref<3x128x128xf32, #tpu.memory_space<vmem>>, %arg4: memref<1x128xf32, #tpu.memory_space<vmem>>, %arg5: memref<5x8x16xf32, #tpu.memory_space<vmem>>, %arg6: memref<5x128x64xf32, #tpu.memory_space<vmem>>, %arg7: memref<1x64xf32, #tpu.memory_space<vmem>>, %arg8: memref<5x4x8xf32, #tpu.memory_space<vmem>>, %arg9: memref<5x64x32xf32, #tpu.memory_space<vmem>>, %arg10: memref<1x32xf32, #tpu.memory_space<vmem>>, %arg11: memref<1x4x32xf32, #tpu.memory_space<vmem>>) attributes {dimension_semantics = [#tpu.dimension_semantics<parallel>], iteration_bounds = array<i64: 2>, scalar_prefetch = 0 : i64, scratch_operands = 0 : i64, tpu.core_type = #tpu.core_type<tc>, window_params = [{transform_indices = @transform_0, window_bounds = array<i64: 1, 16, 128>}, {pipeline_mode = #tpu.pipeline_mode<synchronous>, transform_indices = @transform_1, window_bounds = array<i64: 3, 16, 16>}, {pipeline_mode = #tpu.pipeline_mode<synchronous>, transform_indices = @transform_2, window_bounds = array<i64: 3, 128, 128>}, {pipeline_mode = #tpu.pipeline_mode<synchronous>, transform_indices = @transform_3, window_bounds = array<i64: 1, 128>}, {pipeline_mode = #tpu.pipeline_mode<synchronous>, transform_indices = @transform_4, window_bounds = array<i64: 5, 8, 16>}, {pipeline_mode = #tpu.pipeline_mode<synchronous>, transform_indices = @transform_5, window_bounds = array<i64: 5, 128, 64>}, {pipeline_mode = #tpu.pipeline_mode<synchronous>, transform_indices = @transform_6, window_bounds = array<i64: 1, 64>}, {pipeline_mode = #tpu.pipeline_mode<synchronous>, transform_indices = @transform_7, window_bounds = array<i64: 5, 4, 8>}, {pipeline_mode = #tpu.pipeline_mode<synchronous>, transform_indices = @transform_8, window_bounds = array<i64: 5, 64, 32>}, {pipeline_mode = #tpu.pipeline_mode<synchronous>, transform_indices = @transform_9, window_bounds = array<i64: 1, 32>}, {transform_indices = @transform_10, window_bounds = array<i64: 1, 4, 32>}]} {
    %c0 = arith.constant 0 : index
    %c0_0 = arith.constant 0 : index
    %c0_1 = arith.constant 0 : index
    %0 = vector.load %arg1[%c0, %c0_0, %c0_1] : memref<1x16x128xf32, #tpu.memory_space<vmem>>, vector<1x16x128xf32>
    %1 = vector.shape_cast %0 : vector<1x16x128xf32> to vector<16x128xf32>
    %2 = math.absf %1 : vector<16x128xf32>
    %cst = arith.constant 0.000000e+00 : f32
    %3 = vector.broadcast %cst : f32 to vector<16x128xf32>
    %c0_2 = arith.constant 0 : index
    %c0_3 = arith.constant 0 : index
    %c0_4 = arith.constant 0 : index
    %4 = vector.load %arg2[%c0_2, %c0_3, %c0_4] : memref<3x16x16xf32, #tpu.memory_space<vmem>>, vector<1x16x16xf32>
    %5 = vector.shape_cast %4 : vector<1x16x16xf32> to vector<16x16xf32>
    %cst_5 = arith.constant dense<0.000000e+00> : vector<16x128xf32>
    %6 = tpu.matmul %5, %2, %cst_5 {dimension_numbers = #tpu.dot_dimension_numbers<[1], [0], [0], [1], [0, 0, 1, 1], [], []>} : vector<16x16xf32>, vector<16x128xf32>, vector<16x128xf32> -> vector<16x128xf32>
    %c0_6 = arith.constant 0 : index
    %c0_7 = arith.constant 0 : index
    %c0_8 = arith.constant 0 : index
    %7 = vector.load %arg3[%c0_6, %c0_7, %c0_8] : memref<3x128x128xf32, #tpu.memory_space<vmem>>, vector<1x128x128xf32>
    %8 = vector.shape_cast %7 : vector<1x128x128xf32> to vector<128x128xf32>
    %cst_9 = arith.constant dense<0.000000e+00> : vector<16x128xf32>
    %9 = tpu.matmul %6, %8, %cst_9 {dimension_numbers = #tpu.dot_dimension_numbers<[1], [0], [0], [1], [0, 0, 1, 1], [], []>} : vector<16x128xf32>, vector<128x128xf32>, vector<16x128xf32> -> vector<16x128xf32>
    %10 = arith.addf %3, %9 : vector<16x128xf32>
    %c1 = arith.constant 1 : index
    %c0_10 = arith.constant 0 : index
    %c0_11 = arith.constant 0 : index
    %11 = vector.load %arg2[%c1, %c0_10, %c0_11] : memref<3x16x16xf32, #tpu.memory_space<vmem>>, vector<1x16x16xf32>
    %12 = vector.shape_cast %11 : vector<1x16x16xf32> to vector<16x16xf32>
    %cst_12 = arith.constant dense<0.000000e+00> : vector<16x128xf32>
    %13 = tpu.matmul %12, %2, %cst_12 {dimension_numbers = #tpu.dot_dimension_numbers<[1], [0], [0], [1], [0, 0, 1, 1], [], []>} : vector<16x16xf32>, vector<16x128xf32>, vector<16x128xf32> -> vector<16x128xf32>
    %c1_13 = arith.constant 1 : index
    %c0_14 = arith.constant 0 : index
    %c0_15 = arith.constant 0 : index
    %14 = vector.load %arg3[%c1_13, %c0_14, %c0_15] : memref<3x128x128xf32, #tpu.memory_space<vmem>>, vector<1x128x128xf32>
    %15 = vector.shape_cast %14 : vector<1x128x128xf32> to vector<128x128xf32>
    %cst_16 = arith.constant dense<0.000000e+00> : vector<16x128xf32>
    %16 = tpu.matmul %13, %15, %cst_16 {dimension_numbers = #tpu.dot_dimension_numbers<[1], [0], [0], [1], [0, 0, 1, 1], [], []>} : vector<16x128xf32>, vector<128x128xf32>, vector<16x128xf32> -> vector<16x128xf32>
    %17 = arith.addf %10, %16 : vector<16x128xf32>
    %c2 = arith.constant 2 : index
    %c0_17 = arith.constant 0 : index
    %c0_18 = arith.constant 0 : index
    %18 = vector.load %arg2[%c2, %c0_17, %c0_18] : memref<3x16x16xf32, #tpu.memory_space<vmem>>, vector<1x16x16xf32>
    %19 = vector.shape_cast %18 : vector<1x16x16xf32> to vector<16x16xf32>
    %cst_19 = arith.constant dense<0.000000e+00> : vector<16x128xf32>
    %20 = tpu.matmul %19, %2, %cst_19 {dimension_numbers = #tpu.dot_dimension_numbers<[1], [0], [0], [1], [0, 0, 1, 1], [], []>} : vector<16x16xf32>, vector<16x128xf32>, vector<16x128xf32> -> vector<16x128xf32>
    %c2_20 = arith.constant 2 : index
    %c0_21 = arith.constant 0 : index
    %c0_22 = arith.constant 0 : index
    %21 = vector.load %arg3[%c2_20, %c0_21, %c0_22] : memref<3x128x128xf32, #tpu.memory_space<vmem>>, vector<1x128x128xf32>
    %22 = vector.shape_cast %21 : vector<1x128x128xf32> to vector<128x128xf32>
    %cst_23 = arith.constant dense<0.000000e+00> : vector<16x128xf32>
    %23 = tpu.matmul %20, %22, %cst_23 {dimension_numbers = #tpu.dot_dimension_numbers<[1], [0], [0], [1], [0, 0, 1, 1], [], []>} : vector<16x128xf32>, vector<128x128xf32>, vector<16x128xf32> -> vector<16x128xf32>
    %24 = arith.addf %17, %23 : vector<16x128xf32>
    %c0_24 = arith.constant 0 : index
    %c0_25 = arith.constant 0 : index
    %25 = vector.load %arg4[%c0_24, %c0_25] : memref<1x128xf32, #tpu.memory_space<vmem>>, vector<1x128xf32>
    %26 = vector.broadcast %25 : vector<1x128xf32> to vector<16x128xf32>
    %27 = arith.addf %24, %26 : vector<16x128xf32>
    %cst_26 = arith.constant 0.000000e+00 : f32
    %28 = vector.broadcast %cst_26 : f32 to vector<16x128xf32>
    %29 = arith.maximumf %27, %28 : vector<16x128xf32>
    %cst_27 = arith.constant 0.000000e+00 : f32
    %30 = vector.broadcast %cst_27 : f32 to vector<8x64xf32>
    %c0_28 = arith.constant 0 : index
    %c0_29 = arith.constant 0 : index
    %c0_30 = arith.constant 0 : index
    %31 = vector.load %arg5[%c0_28, %c0_29, %c0_30] : memref<5x8x16xf32, #tpu.memory_space<vmem>>, vector<1x8x16xf32>
    %32 = vector.shape_cast %31 : vector<1x8x16xf32> to vector<8x16xf32>
    %cst_31 = arith.constant dense<0.000000e+00> : vector<8x128xf32>
    %33 = tpu.matmul %32, %29, %cst_31 {dimension_numbers = #tpu.dot_dimension_numbers<[1], [0], [0], [1], [0, 0, 1, 1], [], []>} : vector<8x16xf32>, vector<16x128xf32>, vector<8x128xf32> -> vector<8x128xf32>
    %c0_32 = arith.constant 0 : index
    %c0_33 = arith.constant 0 : index
    %c0_34 = arith.constant 0 : index
    %34 = vector.load %arg6[%c0_32, %c0_33, %c0_34] : memref<5x128x64xf32, #tpu.memory_space<vmem>>, vector<1x128x64xf32>
    %35 = vector.shape_cast %34 : vector<1x128x64xf32> to vector<128x64xf32>
    %cst_35 = arith.constant dense<0.000000e+00> : vector<8x64xf32>
    %36 = tpu.matmul %33, %35, %cst_35 {dimension_numbers = #tpu.dot_dimension_numbers<[1], [0], [0], [1], [0, 0, 1, 1], [], []>} : vector<8x128xf32>, vector<128x64xf32>, vector<8x64xf32> -> vector<8x64xf32>
    %37 = arith.addf %30, %36 : vector<8x64xf32>
    %c1_36 = arith.constant 1 : index
    %c0_37 = arith.constant 0 : index
    %c0_38 = arith.constant 0 : index
    %38 = vector.load %arg5[%c1_36, %c0_37, %c0_38] : memref<5x8x16xf32, #tpu.memory_space<vmem>>, vector<1x8x16xf32>
    %39 = vector.shape_cast %38 : vector<1x8x16xf32> to vector<8x16xf32>
    %cst_39 = arith.constant dense<0.000000e+00> : vector<8x128xf32>
    %40 = tpu.matmul %39, %29, %cst_39 {dimension_numbers = #tpu.dot_dimension_numbers<[1], [0], [0], [1], [0, 0, 1, 1], [], []>} : vector<8x16xf32>, vector<16x128xf32>, vector<8x128xf32> -> vector<8x128xf32>
    %c1_40 = arith.constant 1 : index
    %c0_41 = arith.constant 0 : index
    %c0_42 = arith.constant 0 : index
    %41 = vector.load %arg6[%c1_40, %c0_41, %c0_42] : memref<5x128x64xf32, #tpu.memory_space<vmem>>, vector<1x128x64xf32>
    %42 = vector.shape_cast %41 : vector<1x128x64xf32> to vector<128x64xf32>
    %cst_43 = arith.constant dense<0.000000e+00> : vector<8x64xf32>
    %43 = tpu.matmul %40, %42, %cst_43 {dimension_numbers = #tpu.dot_dimension_numbers<[1], [0], [0], [1], [0, 0, 1, 1], [], []>} : vector<8x128xf32>, vector<128x64xf32>, vector<8x64xf32> -> vector<8x64xf32>
    %44 = arith.addf %37, %43 : vector<8x64xf32>
    %c2_44 = arith.constant 2 : index
    %c0_45 = arith.constant 0 : index
    %c0_46 = arith.constant 0 : index
    %45 = vector.load %arg5[%c2_44, %c0_45, %c0_46] : memref<5x8x16xf32, #tpu.memory_space<vmem>>, vector<1x8x16xf32>
    %46 = vector.shape_cast %45 : vector<1x8x16xf32> to vector<8x16xf32>
    %cst_47 = arith.constant dense<0.000000e+00> : vector<8x128xf32>
    %47 = tpu.matmul %46, %29, %cst_47 {dimension_numbers = #tpu.dot_dimension_numbers<[1], [0], [0], [1], [0, 0, 1, 1], [], []>} : vector<8x16xf32>, vector<16x128xf32>, vector<8x128xf32> -> vector<8x128xf32>
    %c2_48 = arith.constant 2 : index
    %c0_49 = arith.constant 0 : index
    %c0_50 = arith.constant 0 : index
    %48 = vector.load %arg6[%c2_48, %c0_49, %c0_50] : memref<5x128x64xf32, #tpu.memory_space<vmem>>, vector<1x128x64xf32>
    %49 = vector.shape_cast %48 : vector<1x128x64xf32> to vector<128x64xf32>
    %cst_51 = arith.constant dense<0.000000e+00> : vector<8x64xf32>
    %50 = tpu.matmul %47, %49, %cst_51 {dimension_numbers = #tpu.dot_dimension_numbers<[1], [0], [0], [1], [0, 0, 1, 1], [], []>} : vector<8x128xf32>, vector<128x64xf32>, vector<8x64xf32> -> vector<8x64xf32>
    %51 = arith.addf %44, %50 : vector<8x64xf32>
    %c3 = arith.constant 3 : index
    %c0_52 = arith.constant 0 : index
    %c0_53 = arith.constant 0 : index
    %52 = vector.load %arg5[%c3, %c0_52, %c0_53] : memref<5x8x16xf32, #tpu.memory_space<vmem>>, vector<1x8x16xf32>
    %53 = vector.shape_cast %52 : vector<1x8x16xf32> to vector<8x16xf32>
    %cst_54 = arith.constant dense<0.000000e+00> : vector<8x128xf32>
    %54 = tpu.matmul %53, %29, %cst_54 {dimension_numbers = #tpu.dot_dimension_numbers<[1], [0], [0], [1], [0, 0, 1, 1], [], []>} : vector<8x16xf32>, vector<16x128xf32>, vector<8x128xf32> -> vector<8x128xf32>
    %c3_55 = arith.constant 3 : index
    %c0_56 = arith.constant 0 : index
    %c0_57 = arith.constant 0 : index
    %55 = vector.load %arg6[%c3_55, %c0_56, %c0_57] : memref<5x128x64xf32, #tpu.memory_space<vmem>>, vector<1x128x64xf32>
    %56 = vector.shape_cast %55 : vector<1x128x64xf32> to vector<128x64xf32>
    %cst_58 = arith.constant dense<0.000000e+00> : vector<8x64xf32>
    %57 = tpu.matmul %54, %56, %cst_58 {dimension_numbers = #tpu.dot_dimension_numbers<[1], [0], [0], [1], [0, 0, 1, 1], [], []>} : vector<8x128xf32>, vector<128x64xf32>, vector<8x64xf32> -> vector<8x64xf32>
    %58 = arith.addf %51, %57 : vector<8x64xf32>
    %c4 = arith.constant 4 : index
    %c0_59 = arith.constant 0 : index
    %c0_60 = arith.constant 0 : index
    %59 = vector.load %arg5[%c4, %c0_59, %c0_60] : memref<5x8x16xf32, #tpu.memory_space<vmem>>, vector<1x8x16xf32>
    %60 = vector.shape_cast %59 : vector<1x8x16xf32> to vector<8x16xf32>
    %cst_61 = arith.constant dense<0.000000e+00> : vector<8x128xf32>
    %61 = tpu.matmul %60, %29, %cst_61 {dimension_numbers = #tpu.dot_dimension_numbers<[1], [0], [0], [1], [0, 0, 1, 1], [], []>} : vector<8x16xf32>, vector<16x128xf32>, vector<8x128xf32> -> vector<8x128xf32>
    %c4_62 = arith.constant 4 : index
    %c0_63 = arith.constant 0 : index
    %c0_64 = arith.constant 0 : index
    %62 = vector.load %arg6[%c4_62, %c0_63, %c0_64] : memref<5x128x64xf32, #tpu.memory_space<vmem>>, vector<1x128x64xf32>
    %63 = vector.shape_cast %62 : vector<1x128x64xf32> to vector<128x64xf32>
    %cst_65 = arith.constant dense<0.000000e+00> : vector<8x64xf32>
    %64 = tpu.matmul %61, %63, %cst_65 {dimension_numbers = #tpu.dot_dimension_numbers<[1], [0], [0], [1], [0, 0, 1, 1], [], []>} : vector<8x128xf32>, vector<128x64xf32>, vector<8x64xf32> -> vector<8x64xf32>
    %65 = arith.addf %58, %64 : vector<8x64xf32>
    %c0_66 = arith.constant 0 : index
    %c0_67 = arith.constant 0 : index
    %66 = vector.load %arg7[%c0_66, %c0_67] : memref<1x64xf32, #tpu.memory_space<vmem>>, vector<1x64xf32>
    %67 = vector.broadcast %66 : vector<1x64xf32> to vector<8x64xf32>
    %68 = arith.addf %65, %67 : vector<8x64xf32>
    %cst_68 = arith.constant 0.000000e+00 : f32
    %69 = vector.broadcast %cst_68 : f32 to vector<8x64xf32>
    %70 = arith.maximumf %68, %69 : vector<8x64xf32>
    %cst_69 = arith.constant 0.000000e+00 : f32
    %71 = vector.broadcast %cst_69 : f32 to vector<4x32xf32>
    %c0_70 = arith.constant 0 : index
    %c0_71 = arith.constant 0 : index
    %c0_72 = arith.constant 0 : index
    %72 = vector.load %arg8[%c0_70, %c0_71, %c0_72] : memref<5x4x8xf32, #tpu.memory_space<vmem>>, vector<1x4x8xf32>
    %73 = vector.shape_cast %72 : vector<1x4x8xf32> to vector<4x8xf32>
    %cst_73 = arith.constant dense<0.000000e+00> : vector<4x64xf32>
    %74 = tpu.matmul %73, %70, %cst_73 {dimension_numbers = #tpu.dot_dimension_numbers<[1], [0], [0], [1], [0, 0, 1, 1], [], []>} : vector<4x8xf32>, vector<8x64xf32>, vector<4x64xf32> -> vector<4x64xf32>
    %c0_74 = arith.constant 0 : index
    %c0_75 = arith.constant 0 : index
    %c0_76 = arith.constant 0 : index
    %75 = vector.load %arg9[%c0_74, %c0_75, %c0_76] : memref<5x64x32xf32, #tpu.memory_space<vmem>>, vector<1x64x32xf32>
    %76 = vector.shape_cast %75 : vector<1x64x32xf32> to vector<64x32xf32>
    %cst_77 = arith.constant dense<0.000000e+00> : vector<4x32xf32>
    %77 = tpu.matmul %74, %76, %cst_77 {dimension_numbers = #tpu.dot_dimension_numbers<[1], [0], [0], [1], [0, 0, 1, 1], [], []>} : vector<4x64xf32>, vector<64x32xf32>, vector<4x32xf32> -> vector<4x32xf32>
    %78 = arith.addf %71, %77 : vector<4x32xf32>
    %c1_78 = arith.constant 1 : index
    %c0_79 = arith.constant 0 : index
    %c0_80 = arith.constant 0 : index
    %79 = vector.load %arg8[%c1_78, %c0_79, %c0_80] : memref<5x4x8xf32, #tpu.memory_space<vmem>>, vector<1x4x8xf32>
    %80 = vector.shape_cast %79 : vector<1x4x8xf32> to vector<4x8xf32>
    %cst_81 = arith.constant dense<0.000000e+00> : vector<4x64xf32>
    %81 = tpu.matmul %80, %70, %cst_81 {dimension_numbers = #tpu.dot_dimension_numbers<[1], [0], [0], [1], [0, 0, 1, 1], [], []>} : vector<4x8xf32>, vector<8x64xf32>, vector<4x64xf32> -> vector<4x64xf32>
    %c1_82 = arith.constant 1 : index
    %c0_83 = arith.constant 0 : index
    %c0_84 = arith.constant 0 : index
    %82 = vector.load %arg9[%c1_82, %c0_83, %c0_84] : memref<5x64x32xf32, #tpu.memory_space<vmem>>, vector<1x64x32xf32>
    %83 = vector.shape_cast %82 : vector<1x64x32xf32> to vector<64x32xf32>
    %cst_85 = arith.constant dense<0.000000e+00> : vector<4x32xf32>
    %84 = tpu.matmul %81, %83, %cst_85 {dimension_numbers = #tpu.dot_dimension_numbers<[1], [0], [0], [1], [0, 0, 1, 1], [], []>} : vector<4x64xf32>, vector<64x32xf32>, vector<4x32xf32> -> vector<4x32xf32>
    %85 = arith.addf %78, %84 : vector<4x32xf32>
    %c2_86 = arith.constant 2 : index
    %c0_87 = arith.constant 0 : index
    %c0_88 = arith.constant 0 : index
    %86 = vector.load %arg8[%c2_86, %c0_87, %c0_88] : memref<5x4x8xf32, #tpu.memory_space<vmem>>, vector<1x4x8xf32>
    %87 = vector.shape_cast %86 : vector<1x4x8xf32> to vector<4x8xf32>
    %cst_89 = arith.constant dense<0.000000e+00> : vector<4x64xf32>
    %88 = tpu.matmul %87, %70, %cst_89 {dimension_numbers = #tpu.dot_dimension_numbers<[1], [0], [0], [1], [0, 0, 1, 1], [], []>} : vector<4x8xf32>, vector<8x64xf32>, vector<4x64xf32> -> vector<4x64xf32>
    %c2_90 = arith.constant 2 : index
    %c0_91 = arith.constant 0 : index
    %c0_92 = arith.constant 0 : index
    %89 = vector.load %arg9[%c2_90, %c0_91, %c0_92] : memref<5x64x32xf32, #tpu.memory_space<vmem>>, vector<1x64x32xf32>
    %90 = vector.shape_cast %89 : vector<1x64x32xf32> to vector<64x32xf32>
    %cst_93 = arith.constant dense<0.000000e+00> : vector<4x32xf32>
    %91 = tpu.matmul %88, %90, %cst_93 {dimension_numbers = #tpu.dot_dimension_numbers<[1], [0], [0], [1], [0, 0, 1, 1], [], []>} : vector<4x64xf32>, vector<64x32xf32>, vector<4x32xf32> -> vector<4x32xf32>
    %92 = arith.addf %85, %91 : vector<4x32xf32>
    %c3_94 = arith.constant 3 : index
    %c0_95 = arith.constant 0 : index
    %c0_96 = arith.constant 0 : index
    %93 = vector.load %arg8[%c3_94, %c0_95, %c0_96] : memref<5x4x8xf32, #tpu.memory_space<vmem>>, vector<1x4x8xf32>
    %94 = vector.shape_cast %93 : vector<1x4x8xf32> to vector<4x8xf32>
    %cst_97 = arith.constant dense<0.000000e+00> : vector<4x64xf32>
    %95 = tpu.matmul %94, %70, %cst_97 {dimension_numbers = #tpu.dot_dimension_numbers<[1], [0], [0], [1], [0, 0, 1, 1], [], []>} : vector<4x8xf32>, vector<8x64xf32>, vector<4x64xf32> -> vector<4x64xf32>
    %c3_98 = arith.constant 3 : index
    %c0_99 = arith.constant 0 : index
    %c0_100 = arith.constant 0 : index
    %96 = vector.load %arg9[%c3_98, %c0_99, %c0_100] : memref<5x64x32xf32, #tpu.memory_space<vmem>>, vector<1x64x32xf32>
    %97 = vector.shape_cast %96 : vector<1x64x32xf32> to vector<64x32xf32>
    %cst_101 = arith.constant dense<0.000000e+00> : vector<4x32xf32>
    %98 = tpu.matmul %95, %97, %cst_101 {dimension_numbers = #tpu.dot_dimension_numbers<[1], [0], [0], [1], [0, 0, 1, 1], [], []>} : vector<4x64xf32>, vector<64x32xf32>, vector<4x32xf32> -> vector<4x32xf32>
    %99 = arith.addf %92, %98 : vector<4x32xf32>
    %c4_102 = arith.constant 4 : index
    %c0_103 = arith.constant 0 : index
    %c0_104 = arith.constant 0 : index
    %100 = vector.load %arg8[%c4_102, %c0_103, %c0_104] : memref<5x4x8xf32, #tpu.memory_space<vmem>>, vector<1x4x8xf32>
    %101 = vector.shape_cast %100 : vector<1x4x8xf32> to vector<4x8xf32>
    %cst_105 = arith.constant dense<0.000000e+00> : vector<4x64xf32>
    %102 = tpu.matmul %101, %70, %cst_105 {dimension_numbers = #tpu.dot_dimension_numbers<[1], [0], [0], [1], [0, 0, 1, 1], [], []>} : vector<4x8xf32>, vector<8x64xf32>, vector<4x64xf32> -> vector<4x64xf32>
    %c4_106 = arith.constant 4 : index
    %c0_107 = arith.constant 0 : index
    %c0_108 = arith.constant 0 : index
    %103 = vector.load %arg9[%c4_106, %c0_107, %c0_108] : memref<5x64x32xf32, #tpu.memory_space<vmem>>, vector<1x64x32xf32>
    %104 = vector.shape_cast %103 : vector<1x64x32xf32> to vector<64x32xf32>
    %cst_109 = arith.constant dense<0.000000e+00> : vector<4x32xf32>
    %105 = tpu.matmul %102, %104, %cst_109 {dimension_numbers = #tpu.dot_dimension_numbers<[1], [0], [0], [1], [0, 0, 1, 1], [], []>} : vector<4x64xf32>, vector<64x32xf32>, vector<4x32xf32> -> vector<4x32xf32>
    %106 = arith.addf %99, %105 : vector<4x32xf32>
    %c0_110 = arith.constant 0 : index
    %c0_111 = arith.constant 0 : index
    %107 = vector.load %arg10[%c0_110, %c0_111] : memref<1x32xf32, #tpu.memory_space<vmem>>, vector<1x32xf32>
    %108 = vector.broadcast %107 : vector<1x32xf32> to vector<4x32xf32>
    %109 = arith.addf %106, %108 : vector<4x32xf32>
    %c0_112 = arith.constant 0 : index
    %c0_113 = arith.constant 0 : index
    %c0_114 = arith.constant 0 : index
    %110 = vector.load %arg11[%c0_112, %c0_113, %c0_114] : memref<1x4x32xf32, #tpu.memory_space<vmem>>, vector<1x4x32xf32>
    %111 = vector.shape_cast %110 : vector<1x4x32xf32> to vector<4x32xf32>
    %112 = vector.shape_cast %109 : vector<4x32xf32> to vector<1x4x32xf32>
    tpu.vector_store %arg11[%c0_112, %c0_113, %c0_114], %112 {strides = array<i32>} : memref<1x4x32xf32, #tpu.memory_space<vmem>>, vector<1x4x32xf32>,
    return
  }
  func.func @transform_0(%arg0: i32) -> (i32, i32, i32) {
    %c0_i32 = arith.constant 0 : i32
    %c0_i32_0 = arith.constant 0 : i32
    %c0_i32_1 = arith.constant 0 : i32
    return %arg0, %c0_i32, %c0_i32_0 : i32, i32, i32
  }
  func.func @transform_1(%arg0: i32) -> (i32, i32, i32) {
    %c0_i32 = arith.constant 0 : i32
    %c0_i32_0 = arith.constant 0 : i32
    %c0_i32_1 = arith.constant 0 : i32
    %c0_i32_2 = arith.constant 0 : i32
    return %c0_i32, %c0_i32_0, %c0_i32_1 : i32, i32, i32
  }
  func.func @transform_2(%arg0: i32) -> (i32, i32, i32) {
    %c0_i32 = arith.constant 0 : i32
    %c0_i32_0 = arith.constant 0 : i32
    %c0_i32_1 = arith.constant 0 : i32
    %c0_i32_2 = arith.constant 0 : i32
    return %c0_i32, %c0_i32_0, %c0_i32_1 : i32, i32, i32
  }
  func.func @transform_3(%arg0: i32) -> (i32, i32) {
    %c0_i32 = arith.constant 0 : i32
    %c0_i32_0 = arith.constant 0 : i32
    %c0_i32_1 = arith.constant 0 : i32
    return %c0_i32, %c0_i32_0 : i32, i32
  }
  func.func @transform_4(%arg0: i32) -> (i32, i32, i32) {
    %c0_i32 = arith.constant 0 : i32
    %c0_i32_0 = arith.constant 0 : i32
    %c0_i32_1 = arith.constant 0 : i32
    %c0_i32_2 = arith.constant 0 : i32
    return %c0_i32, %c0_i32_0, %c0_i32_1 : i32, i32, i32
  }
  func.func @transform_5(%arg0: i32) -> (i32, i32, i32) {
    %c0_i32 = arith.constant 0 : i32
    %c0_i32_0 = arith.constant 0 : i32
    %c0_i32_1 = arith.constant 0 : i32
    %c0_i32_2 = arith.constant 0 : i32
    return %c0_i32, %c0_i32_0, %c0_i32_1 : i32, i32, i32
  }
  func.func @transform_6(%arg0: i32) -> (i32, i32) {
    %c0_i32 = arith.constant 0 : i32
    %c0_i32_0 = arith.constant 0 : i32
    %c0_i32_1 = arith.constant 0 : i32
    return %c0_i32, %c0_i32_0 : i32, i32
  }
  func.func @transform_7(%arg0: i32) -> (i32, i32, i32) {
    %c0_i32 = arith.constant 0 : i32
    %c0_i32_0 = arith.constant 0 : i32
    %c0_i32_1 = arith.constant 0 : i32
    %c0_i32_2 = arith.constant 0 : i32
    return %c0_i32, %c0_i32_0, %c0_i32_1 : i32, i32, i32
  }
  func.func @transform_8(%arg0: i32) -> (i32, i32, i32) {
    %c0_i32 = arith.constant 0 : i32
    %c0_i32_0 = arith.constant 0 : i32
    %c0_i32_1 = arith.constant 0 : i32
    %c0_i32_2 = arith.constant 0 : i32
    return %c0_i32, %c0_i32_0, %c0_i32_1 : i32, i32, i32
  }
  func.func @transform_9(%arg0: i32) -> (i32, i32) {
    %c0_i32 = arith.constant 0 : i32
    %c0_i32_0 = arith.constant 0 : i32
    %c0_i32_1 = arith.constant 0 : i32
    return %c0_i32, %c0_i32_0 : i32, i32
  }
  func.func @transform_10(%arg0: i32) -> (i32, i32, i32) {
    %c0_i32 = arith.constant 0 : i32
    %c0_i32_0 = arith.constant 0 : i32
    %c0_i32_1 = arith.constant 0 : i32
    return %arg0, %c0_i32, %c0_i32_0 : i32, i32, i32
  }
}

</mosaic_0001>

<llo_original>
// kernel: tile.18
$region0: #{tile.18}
  #allocation0 [shape = 's32[1]{0}', space=sflag, size = 0x4, scoped, tag = 'scoped memory for tile.18']
  %s0 = inlined_call_operand.vmem [shape: f32[8], index: 0, kind: input, shape index: {}]
  %s1 = inlined_call_operand.vmem [shape: f32[16,8], index: 1, kind: output, shape index: {}]
  // Predicated region
  $region2: #{tile.18} parent=0 // pred_check
    _
  $region3: #{tile.18} parent=0 // pred_check_branch
    %3 = sbr.rel (0) target = $region5
  $region4: #{tile.18} parent=0 // pred_region
    _
  $region5: #{tile.18} parent=0 // pred_fallthru
    _
  %v4 = vld [vmem:[%s0] ss:$0 sm:$0xff]
  %5 = vst [vmem:[%s1] sm:$0xff] %v4
  %s6 = scalar_lea.vmem %s1, 8
  %7 = vst [vmem:[%s6] sm:$0xff] %v4

// kernel: tile.19
$region0: #{tile.19}
  %s0 = inlined_call_operand.vmem [shape: f32[16,8], index: 0, kind: input, shape index: {}]
  %s1 = inlined_call_operand.vmem [shape: f32[1,128], index: 1, kind: output, shape index: {}]
  $region1: #{tile.19} parent=0
    #allocation0 [shape = 'u8[4096]{0}', space=vmem, size = 0x1000, scoped, tag = 'scoped mem for output reshape']
    %v2 = vld [vmem:[%s0] sm:$0x1]
    %vm3 = vcmask 64512
    %4 = vst.msk [vmem:[#allocation0] sm:$0x1] %vm3, %v2
    %s5 = scalar_lea.vmem %s0, 15
    %v6 = vld [vmem:[%s5] sm:$0x1]
    %7 = vrot.lane.b32.xlu0 %v6, 120
    %v8 = vpop.permute.xlu0 %7
    %vm9 = vcmask 1048512
    %10 = vst.msk [vmem:[#allocation0] sm:$0x1] %vm9, %v8
    %s11 = scalar_lea.vmem %s0, 14
    %v12 = vld [vmem:[%s11] sm:$0x1]
    %13 = vrot.lane.b32.xlu0 %v12, 112
    %v14 = vpop.permute.xlu0 %13
    %vm15 = vcmask 982912
    %16 = vst.msk [vmem:[#allocation0] sm:$0x1] %vm15, %v14
    %s17 = scalar_lea.vmem %s0, 13
    %v18 = vld [vmem:[%s17] sm:$0x1]
    %19 = vrot.lane.b32.xlu0 %v18, 104
    %v20 = vpop.permute.xlu0 %19
    %vm21 = vcmask 917312
    %22 = vst.msk [vmem:[#allocation0] sm:$0x1] %vm21, %v20
    %s23 = scalar_lea.vmem %s0, 12
    %v24 = vld [vmem:[%s23] sm:$0x1]
    %25 = vrot.lane.b32.xlu0 %v24, 96
    %v26 = vpop.permute.xlu0 %25
    %vm27 = vcmask 851712
    %28 = vst.msk [vmem:[#allocation0] sm:$0x1] %vm27, %v26
    %s29 = scalar_lea.vmem %s0, 11
    %v30 = vld [vmem:[%s29] sm:$0x1]
    %31 = vrot.lane.b32.xlu0 %v30, 88
    %v32 = vpop.permute.xlu0 %31
    %vm33 = vcmask 786112
    %34 = vst.msk [vmem:[#allocation0] sm:$0x1] %vm33, %v32
    %s35 = scalar_lea.vmem %s0, 10
    %v36 = vld [vmem:[%s35] sm:$0x1]
    %37 = vrot.lane.b32.xlu0 %v36, 80
    %v38 = vpop.permute.xlu0 %37
    %vm39 = vcmask 720512
    %40 = vst.msk [vmem:[#allocation0] sm:$0x1] %vm39, %v38
    %s41 = scalar_lea.vmem %s0, 9
    %v42 = vld [vmem:[%s41] sm:$0x1]
    %43 = vrot.lane.b32.xlu0 %v42, 72
    %v44 = vpop.permute.xlu0 %43
    %vm45 = vcmask 654912
    %46 = vst.msk [vmem:[#allocation0] sm:$0x1] %vm45, %v44
    %s47 = scalar_lea.vmem %s0, 8
    %v48 = vld [vmem:[%s47] sm:$0x1]
    %49 = vrot.lane.b32.xlu0 %v48, 64
    %v50 = vpop.permute.xlu0 %49
    %vm51 = vcmask 589312
    %52 = vst.msk [vmem:[#allocation0] sm:$0x1] %vm51, %v50
    %s53 = scalar_lea.vmem %s0, 7
    %v54 = vld [vmem:[%s53] sm:$0x1]
    %55 = vrot.lane.b32.xlu0 %v54, 56
    %v56 = vpop.permute.xlu0 %55
    %vm57 = vcmask 523712
    %58 = vst.msk [vmem:[#allocation0] sm:$0x1] %vm57, %v56
    %s59 = scalar_lea.vmem %s0, 6
    %v60 = vld [vmem:[%s59] sm:$0x1]
    %61 = vrot.lane.b32.xlu0 %v60, 48
    %v62 = vpop.permute.xlu0 %61
    %vm63 = vcmask 458112
    %64 = vst.msk [vmem:[#allocation0] sm:$0x1] %vm63, %v62
    %s65 = scalar_lea.vmem %s0, 5
    %v66 = vld [vmem:[%s65] sm:$0x1]
    %67 = vrot.lane.b32.xlu0 %v66, 40
    %v68 = vpop.permute.xlu0 %67
    %vm69 = vcmask 392512
    %70 = vst.msk [vmem:[#allocation0] sm:$0x1] %vm69, %v68
    %s71 = scalar_lea.vmem %s0, 4
    %v72 = vld [vmem:[%s71] sm:$0x1]
    %73 = vrot.lane.b32.xlu0 %v72, 32
    %v74 = vpop.permute.xlu0 %73
    %vm75 = vcmask 326912
    %76 = vst.msk [vmem:[#allocation0] sm:$0x1] %vm75, %v74
    %s77 = scalar_lea.vmem %s0, 3
    %v78 = vld [vmem:[%s77] sm:$0x1]
    %79 = vrot.lane.b32.xlu0 %v78, 24
    %v80 = vpop.permute.xlu0 %79
    %vm81 = vcmask 261312
    %82 = vst.msk [vmem:[#allocation0] sm:$0x1] %vm81, %v80
    %s83 = scalar_lea.vmem %s0, 2
    %v84 = vld [vmem:[%s83] sm:$0x1]
    %85 = vrot.lane.b32.xlu0 %v84, 16
    %v86 = vpop.permute.xlu0 %85
    %vm87 = vcmask 195712
    %88 = vst.msk [vmem:[#allocation0] sm:$0x1] %vm87, %v86
    %s89 = scalar_lea.vmem %s0, 1
    %v90 = vld [vmem:[%s89] sm:$0x1]
    %91 = vrot.lane.b32.xlu0 %v90, 8
    %v92 = vpop.permute.xlu0 %91
    %vm93 = vcmask 130112
    %94 = vst.msk [vmem:[#allocation0] sm:$0x1] %vm93, %v92
    %s96 = sshll.u32 1, 1
    %s97 = ssub.s32 %s96, 1
    %v99 = vld [vmem:[#allocation0] sm:%s97]
    %s100 = sshll.u32 1, 1
    %s101 = ssub.s32 %s100, 1
    %102 = vst [vmem:[%s1] sm:%s101] %v99

// kernel: tile.23
$region0: #{tile.23}
  #allocation0 [shape = 's32[1]{0}', space=sflag, size = 0x4, scoped, tag = 'scoped memory for tile.23']
  %s0 = inlined_call_operand.vmem [shape: f32[8], index: 0, kind: input, shape index: {}]
  %s1 = inlined_call_operand.vmem [shape: f32[8,8], index: 1, kind: output, shape index: {}]
  // Predicated region
  $region2: #{tile.23} parent=0 // pred_check
    _
  $region3: #{tile.23} parent=0 // pred_check_branch
    %3 = sbr.rel (0) target = $region5
  $region4: #{tile.23} parent=0 // pred_region
    _
  $region5: #{tile.23} parent=0 // pred_fallthru
    _
  %v4 = vld [vmem:[%s0] ss:$0 sm:$0xff]
  %5 = vst [vmem:[%s1] sm:$0xff] %v4

// kernel: tile.24
$region0: #{tile.24}
  %s0 = inlined_call_operand.vmem [shape: f32[8,8], index: 0, kind: input, shape index: {}]
  %s1 = inlined_call_operand.vmem [shape: f32[1,64], index: 1, kind: output, shape index: {}]
  $region1: #{tile.24} parent=0
    #allocation0 [shape = 'u8[4096]{0}', space=vmem, size = 0x1000, scoped, tag = 'scoped mem for output reshape']
    %v2 = vld [vmem:[%s0] sm:$0x1]
    %vm3 = vcmask 64512
    %4 = vst.msk [vmem:[#allocation0] sm:$0x1] %vm3, %v2
    %s5 = scalar_lea.vmem %s0, 7
    %v6 = vld [vmem:[%s5] sm:$0x1]
    %7 = vrot.lane.b32.xlu0 %v6, 56
    %v8 = vpop.permute.xlu0 %7
    %vm9 = vcmask 523712
    %10 = vst.msk [vmem:[#allocation0] sm:$0x1] %vm9, %v8
    %s11 = scalar_lea.vmem %s0, 6
    %v12 = vld [vmem:[%s11] sm:$0x1]
    %13 = vrot.lane.b32.xlu0 %v12, 48
    %v14 = vpop.permute.xlu0 %13
    %vm15 = vcmask 458112
    %16 = vst.msk [vmem:[#allocation0] sm:$0x1] %vm15, %v14
    %s17 = scalar_lea.vmem %s0, 5
    %v18 = vld [vmem:[%s17] sm:$0x1]
    %19 = vrot.lane.b32.xlu0 %v18, 40
    %v20 = vpop.permute.xlu0 %19
    %vm21 = vcmask 392512
    %22 = vst.msk [vmem:[#allocation0] sm:$0x1] %vm21, %v20
    %s23 = scalar_lea.vmem %s0, 4
    %v24 = vld [vmem:[%s23] sm:$0x1]
    %25 = vrot.lane.b32.xlu0 %v24, 32
    %v26 = vpop.permute.xlu0 %25
    %vm27 = vcmask 326912
    %28 = vst.msk [vmem:[#allocation0] sm:$0x1] %vm27, %v26
    %s29 = scalar_lea.vmem %s0, 3
    %v30 = vld [vmem:[%s29] sm:$0x1]
    %31 = vrot.lane.b32.xlu0 %v30, 24
    %v32 = vpop.permute.xlu0 %31
    %vm33 = vcmask 261312
    %34 = vst.msk [vmem:[#allocation0] sm:$0x1] %vm33, %v32
    %s35 = scalar_lea.vmem %s0, 2
    %v36 = vld [vmem:[%s35] sm:$0x1]
    %37 = vrot.lane.b32.xlu0 %v36, 16
    %v38 = vpop.permute.xlu0 %37
    %vm39 = vcmask 195712
    %40 = vst.msk [vmem:[#allocation0] sm:$0x1] %vm39, %v38
    %s41 = scalar_lea.vmem %s0, 1
    %v42 = vld [vmem:[%s41] sm:$0x1]
    %43 = vrot.lane.b32.xlu0 %v42, 8
    %v44 = vpop.permute.xlu0 %43
    %vm45 = vcmask 130112
    %46 = vst.msk [vmem:[#allocation0] sm:$0x1] %vm45, %v44
    %s48 = sshll.u32 1, 1
    %s49 = ssub.s32 %s48, 1
    %v51 = vld [vmem:[#allocation0] sm:%s49]
    %s52 = sshll.u32 1, 1
    %s53 = ssub.s32 %s52, 1
    %54 = vst [vmem:[%s1] sm:%s53] %v51

// kernel: tile.28
$region0: #{tile.28}
  #allocation0 [shape = 's32[1]{0}', space=sflag, size = 0x4, scoped, tag = 'scoped memory for tile.28']
  %s0 = inlined_call_operand.vmem [shape: f32[8], index: 0, kind: input, shape index: {}]
  %s1 = inlined_call_operand.vmem [shape: f32[4,8], index: 1, kind: output, shape index: {}]
  // Predicated region
  $region2: #{tile.28} parent=0 // pred_check
    _
  $region3: #{tile.28} parent=0 // pred_check_branch
    %3 = sbr.rel (0) target = $region5
  $region4: #{tile.28} parent=0 // pred_region
    _
  $region5: #{tile.28} parent=0 // pred_fallthru
    _
  %v4 = vld [vmem:[%s0] ss:$0 sm:$0xff]
  %5 = vst [vmem:[%s1] sm:$0xf] %v4

// kernel: tile.29
$region0: #{tile.29}
  %s0 = inlined_call_operand.vmem [shape: f32[4,8], index: 0, kind: input, shape index: {}]
  %s1 = inlined_call_operand.vmem [shape: f32[1,32], index: 1, kind: output, shape index: {}]
  $region1: #{tile.29} parent=0
    #allocation0 [shape = 'u8[4096]{0}', space=vmem, size = 0x1000, scoped, tag = 'scoped mem for output reshape']
    #allocation1 [shape = 'u8[4096]{0}', space=vmem, size = 0x1000, scoped, tag = 'scoped mem for input reshape']
    %s3 = sshll.u32 1, 4
    %s4 = ssub.s32 %s3, 1
    %v5 = vld [vmem:[%s0] sm:%s4]
    %6 = vst [vmem:[#allocation1] sm:%s4] %v5
    %v7 = vld [vmem:[#allocation1] sm:$0x1]
    %vm8 = vcmask 64512
    %9 = vst.msk [vmem:[#allocation0] sm:$0x1] %vm8, %v7
    %s10 = scalar_lea.vmem [#allocation1], 3
    %v11 = vld [vmem:[%s10] sm:$0x1]
    %12 = vrot.lane.b32.xlu0 %v11, 24
    %v13 = vpop.permute.xlu0 %12
    %vm14 = vcmask 261312
    %15 = vst.msk [vmem:[#allocation0] sm:$0x1] %vm14, %v13
    %s16 = scalar_lea.vmem [#allocation1], 2
    %v17 = vld [vmem:[%s16] sm:$0x1]
    %18 = vrot.lane.b32.xlu0 %v17, 16
    %v19 = vpop.permute.xlu0 %18
    %vm20 = vcmask 195712
    %21 = vst.msk [vmem:[#allocation0] sm:$0x1] %vm20, %v19
    %s22 = scalar_lea.vmem [#allocation1], 1
    %v23 = vld [vmem:[%s22] sm:$0x1]
    %24 = vrot.lane.b32.xlu0 %v23, 8
    %v25 = vpop.permute.xlu0 %24
    %vm26 = vcmask 130112
    %27 = vst.msk [vmem:[#allocation0] sm:$0x1] %vm26, %v25
    %s29 = sshll.u32 1, 1
    %s30 = ssub.s32 %s29, 1
    %v32 = vld [vmem:[#allocation0] sm:%s30]
    %s33 = sshll.u32 1, 1
    %s34 = ssub.s32 %s33, 1
    %35 = vst [vmem:[%s1] sm:%s34] %v32

// kernel: analysis_hyper_net.1
$region0: #{analysis_hyper_net.1}
  #allocation0 [shape = 'u32[]', space=smem, size = 0x4, offset = 0x4, fixed_abs, tag = 'smem constant byte address 0x4 - core index']
  #allocation1 [shape = 'u32[144,128]{1,0:T(1,128)}', space=vmem, size = 0x12000, scoped, tag = 'internal scratch']
  %s0 = inlined_call_operand.vmem [shape: f32[2,16,128], index: 0, kind: input, shape index: {}]
  %s1 = inlined_call_operand.vmem [shape: f32[3,16,16], index: 1, kind: input, shape index: {}]
  %s2 = inlined_call_operand.vmem [shape: f32[3,128,128], index: 2, kind: input, shape index: {}]
  %s3 = inlined_call_operand.vmem [shape: f32[1,128], index: 3, kind: input, shape index: {}]
  %s4 = inlined_call_operand.vmem [shape: f32[5,8,16], index: 4, kind: input, shape index: {}]
  %s5 = inlined_call_operand.vmem [shape: f32[5,128,64], index: 5, kind: input, shape index: {}]
  %s6 = inlined_call_operand.vmem [shape: f32[1,64], index: 6, kind: input, shape index: {}]
  %s7 = inlined_call_operand.vmem [shape: f32[5,4,8], index: 7, kind: input, shape index: {}]
  %s8 = inlined_call_operand.vmem [shape: f32[5,64,32], index: 8, kind: input, shape index: {}]
  %s9 = inlined_call_operand.vmem [shape: f32[1,32], index: 9, kind: input, shape index: {}]
  %s10 = inlined_call_operand.vmem [shape: f32[2,4,32], index: 10, kind: output, shape index: {}]
  %s11 = sld [smem:[#allocation0]]
  $region73: #{analysis_hyper_net.1} parent=0
    _
  %s13 = ssub.s32 1, %s11
  %s14 = scalar_select 0, %s13, %s11
  loop: start=0, step=1, limit=4
  $region2: #{analysis_hyper_net.1} parent=0 // loop_pre_header
    _
  $region3: #{analysis_hyper_net.1} parent=0 // loop_header
    %s16 = sphi 0, %s20
    %p17 = scmp.ge.s32.totalorder %s16, 4
    %s26 = sphi 0, %s28
    %s29 = sphi 0, %s26
    %s30 = sphi 0, %s29
    %s46 = sphi 0, %s30
    %s50 = sphi 0, %s50
    %s52 = sphi 0, %s50
    %s53 = sphi 0, %s52
    %s67 = sphi 0, %s53
    %s71 = sphi 0, %s71
    %s73 = sphi 0, %s71
    %s74 = sphi 0, %s73
    %s88 = sphi 0, %s74
    %s92 = sphi 0, %s92
    %s94 = sphi 0, %s92
    %s95 = sphi 0, %s94
    %s109 = sphi 0, %s95
    %s113 = sphi 0, %s113
    %s115 = sphi 0, %s113
    %s116 = sphi 0, %s115
    %s130 = sphi 0, %s116
    %s134 = sphi 0, %s134
    %s136 = sphi 0, %s134
    %s137 = sphi 0, %s136
    %s151 = sphi 0, %s137
    %s155 = sphi 0, %s155
    %s157 = sphi 0, %s155
    %s158 = sphi 0, %s157
    %s172 = sphi 0, %s158
    %s176 = sphi 0, %s176
    %s178 = sphi 0, %s176
    %s179 = sphi 0, %s178
    %s193 = sphi 0, %s179
    %s197 = sphi 0, %s197
    %s199 = sphi 0, %s197
    %s200 = sphi 0, %s199
    %s214 = sphi 0, %s200
    %s218 = sphi 0, %s218
    %s220 = sphi 0, %s218
    %s221 = sphi 0, %s220
    %s235 = sphi 0, %s221
    %s241 = sphi 0, %s243
    %s244 = sphi 0, %s241
    %s245 = sphi 0, %s244
    %s261 = sphi 0, %s245
  $region4: #{analysis_hyper_net.1} parent=0 // loop_header_branch
    %19 = sbr.rel (%p17) target = $region8
  $region5: #{analysis_hyper_net.1} parent=0 // loop_body
    %s21 = ssub.s32 %s16, 1
    %s22 = ssub.s32 %s16, 2
    %s23 = sadd.s32 %s16, 1
    %s24 = ssub.s32 %s16, %s23
    %p25 = scmp.eq.s32.totalorder %s24, 0
    %s27 = sadd.s32 %s26, 1
    %s28 = scalar_select %p25, %s26, %s27
    %p31 = pneg %p25
    %p32 = scmp.eq.s32.totalorder %s16, 1
    %p33 = por %p31, %p32
    %p34 = scmp.ne.s32.totalorder %s26, %s29
    %p35 = scmp.eq.s32.totalorder %s16, 0
    %p36 = por %p34, %p35
    %p37 = scmp.ne.s32.totalorder %s26, %s29
    %p38 = scmp.eq.s32.totalorder %s21, 1
    %p39 = por %p37, %p38
    %p40 = scmp.ne.s32.totalorder %s29, %s30
    %p41 = scmp.eq.s32.totalorder %s21, 0
    %p42 = por %p40, %p41
    %p43 = scmp.ne.s32.totalorder %s29, %s30
    %p44 = scmp.eq.s32.totalorder %s22, 1
    %p45 = por %p43, %p44
    %p47 = scmp.ne.s32.totalorder %s30, %s46
    %p48 = scmp.eq.s32.totalorder %s22, 0
    %p49 = por %p47, %p48
    %s51 = sadd.s32 %s50, 1
    %p54 = scmp.eq.s32.totalorder %s16, 1
    %p55 = scmp.ne.s32.totalorder %s50, %s52
    %p56 = scmp.eq.s32.totalorder %s16, 0
    %p57 = por %p55, %p56
    %p58 = scmp.ne.s32.totalorder %s50, %s52
    %p59 = scmp.eq.s32.totalorder %s21, 1
    %p60 = por %p58, %p59
    %p61 = scmp.ne.s32.totalorder %s52, %s53
    %p62 = scmp.eq.s32.totalorder %s21, 0
    %p63 = por %p61, %p62
    %p64 = scmp.ne.s32.totalorder %s52, %s53
    %p65 = scmp.eq.s32.totalorder %s22, 1
    %p66 = por %p64, %p65
    %p68 = scmp.ne.s32.totalorder %s53, %s67
    %p69 = scmp.eq.s32.totalorder %s22, 0
    %p70 = por %p68, %p69
    %s72 = sadd.s32 %s71, 1
    %p75 = scmp.eq.s32.totalorder %s16, 1
    %p76 = scmp.ne.s32.totalorder %s71, %s73
    %p77 = scmp.eq.s32.totalorder %s16, 0
    %p78 = por %p76, %p77
    %p79 = scmp.ne.s32.totalorder %s71, %s73
    %p80 = scmp.eq.s32.totalorder %s21, 1
    %p81 = por %p79, %p80
    %p82 = scmp.ne.s32.totalorder %s73, %s74
    %p83 = scmp.eq.s32.totalorder %s21, 0
    %p84 = por %p82, %p83
    %p85 = scmp.ne.s32.totalorder %s73, %s74
    %p86 = scmp.eq.s32.totalorder %s22, 1
    %p87 = por %p85, %p86
    %p89 = scmp.ne.s32.totalorder %s74, %s88
    %p90 = scmp.eq.s32.totalorder %s22, 0
    %p91 = por %p89, %p90
    %s93 = sadd.s32 %s92, 1
    %p96 = scmp.eq.s32.totalorder %s16, 1
    %p97 = scmp.ne.s32.totalorder %s92, %s94
    %p98 = scmp.eq.s32.totalorder %s16, 0
    %p99 = por %p97, %p98
    %p100 = scmp.ne.s32.totalorder %s92, %s94
    %p101 = scmp.eq.s32.totalorder %s21, 1
    %p102 = por %p100, %p101
    %p103 = scmp.ne.s32.totalorder %s94, %s95
    %p104 = scmp.eq.s32.totalorder %s21, 0
    %p105 = por %p103, %p104
    %p106 = scmp.ne.s32.totalorder %s94, %s95
    %p107 = scmp.eq.s32.totalorder %s22, 1
    %p108 = por %p106, %p107
    %p110 = scmp.ne.s32.totalorder %s95, %s109
    %p111 = scmp.eq.s32.totalorder %s22, 0
    %p112 = por %p110, %p111
    %s114 = sadd.s32 %s113, 1
    %p117 = scmp.eq.s32.totalorder %s16, 1
    %p118 = scmp.ne.s32.totalorder %s113, %s115
    %p119 = scmp.eq.s32.totalorder %s16, 0
    %p120 = por %p118, %p119
    %p121 = scmp.ne.s32.totalorder %s113, %s115
    %p122 = scmp.eq.s32.totalorder %s21, 1
    %p123 = por %p121, %p122
    %p124 = scmp.ne.s32.totalorder %s115, %s116
    %p125 = scmp.eq.s32.totalorder %s21, 0
    %p126 = por %p124, %p125
    %p127 = scmp.ne.s32.totalorder %s115, %s116
    %p128 = scmp.eq.s32.totalorder %s22, 1
    %p129 = por %p127, %p128
    %p131 = scmp.ne.s32.totalorder %s116, %s130
    %p132 = scmp.eq.s32.totalorder %s22, 0
    %p133 = por %p131, %p132
    %s135 = sadd.s32 %s134, 1
    %p138 = scmp.eq.s32.totalorder %s16, 1
    %p139 = scmp.ne.s32.totalorder %s134, %s136
    %p140 = scmp.eq.s32.totalorder %s16, 0
    %p141 = por %p139, %p140
    %p142 = scmp.ne.s32.totalorder %s134, %s136
    %p143 = scmp.eq.s32.totalorder %s21, 1
    %p144 = por %p142, %p143
    %p145 = scmp.ne.s32.totalorder %s136, %s137
    %p146 = scmp.eq.s32.totalorder %s21, 0
    %p147 = por %p145, %p146
    %p148 = scmp.ne.s32.totalorder %s136, %s137
    %p149 = scmp.eq.s32.totalorder %s22, 1
    %p150 = por %p148, %p149
    %p152 = scmp.ne.s32.totalorder %s137, %s151
    %p153 = scmp.eq.s32.totalorder %s22, 0
    %p154 = por %p152, %p153
    %s156 = sadd.s32 %s155, 1
    %p159 = scmp.eq.s32.totalorder %s16, 1
    %p160 = scmp.ne.s32.totalorder %s155, %s157
    %p161 = scmp.eq.s32.totalorder %s16, 0
    %p162 = por %p160, %p161
    %p163 = scmp.ne.s32.totalorder %s155, %s157
    %p164 = scmp.eq.s32.totalorder %s21, 1
    %p165 = por %p163, %p164
    %p166 = scmp.ne.s32.totalorder %s157, %s158
    %p167 = scmp.eq.s32.totalorder %s21, 0
    %p168 = por %p166, %p167
    %p169 = scmp.ne.s32.totalorder %s157, %s158
    %p170 = scmp.eq.s32.totalorder %s22, 1
    %p171 = por %p169, %p170
    %p173 = scmp.ne.s32.totalorder %s158, %s172
    %p174 = scmp.eq.s32.totalorder %s22, 0
    %p175 = por %p173, %p174
    %s177 = sadd.s32 %s176, 1
    %p180 = scmp.eq.s32.totalorder %s16, 1
    %p181 = scmp.ne.s32.totalorder %s176, %s178
    %p182 = scmp.eq.s32.totalorder %s16, 0
    %p183 = por %p181, %p182
    %p184 = scmp.ne.s32.totalorder %s176, %s178
    %p185 = scmp.eq.s32.totalorder %s21, 1
    %p186 = por %p184, %p185
    %p187 = scmp.ne.s32.totalorder %s178, %s179
    %p188 = scmp.eq.s32.totalorder %s21, 0
    %p189 = por %p187, %p188
    %p190 = scmp.ne.s32.totalorder %s178, %s179
    %p191 = scmp.eq.s32.totalorder %s22, 1
    %p192 = por %p190, %p191
    %p194 = scmp.ne.s32.totalorder %s179, %s193
    %p195 = scmp.eq.s32.totalorder %s22, 0
    %p196 = por %p194, %p195
    %s198 = sadd.s32 %s197, 1
    %p201 = scmp.eq.s32.totalorder %s16, 1
    %p202 = scmp.ne.s32.totalorder %s197, %s199
    %p203 = scmp.eq.s32.totalorder %s16, 0
    %p204 = por %p202, %p203
    %p205 = scmp.ne.s32.totalorder %s197, %s199
    %p206 = scmp.eq.s32.totalorder %s21, 1
    %p207 = por %p205, %p206
    %p208 = scmp.ne.s32.totalorder %s199, %s200
    %p209 = scmp.eq.s32.totalorder %s21, 0
    %p210 = por %p208, %p209
    %p211 = scmp.ne.s32.totalorder %s199, %s200
    %p212 = scmp.eq.s32.totalorder %s22, 1
    %p213 = por %p211, %p212
    %p215 = scmp.ne.s32.totalorder %s200, %s214
    %p216 = scmp.eq.s32.totalorder %s22, 0
    %p217 = por %p215, %p216
    %s219 = sadd.s32 %s218, 1
    %p222 = scmp.eq.s32.totalorder %s16, 1
    %p223 = scmp.ne.s32.totalorder %s218, %s220
    %p224 = scmp.eq.s32.totalorder %s16, 0
    %p225 = por %p223, %p224
    %p226 = scmp.ne.s32.totalorder %s218, %s220
    %p227 = scmp.eq.s32.totalorder %s21, 1
    %p228 = por %p226, %p227
    %p229 = scmp.ne.s32.totalorder %s220, %s221
    %p230 = scmp.eq.s32.totalorder %s21, 0
    %p231 = por %p229, %p230
    %p232 = scmp.ne.s32.totalorder %s220, %s221
    %p233 = scmp.eq.s32.totalorder %s22, 1
    %p234 = por %p232, %p233
    %p236 = scmp.ne.s32.totalorder %s221, %s235
    %p237 = scmp.eq.s32.totalorder %s22, 0
    %p238 = por %p236, %p237
    %s239 = ssub.s32 %s16, %s23
    %p240 = scmp.eq.s32.totalorder %s239, 0
    %s242 = sadd.s32 %s241, 1
    %s243 = scalar_select %p240, %s241, %s242
    %p246 = pneg %p240
    %p247 = scmp.eq.s32.totalorder %s16, 1
    %p248 = por %p246, %p247
    %p249 = scmp.ne.s32.totalorder %s241, %s244
    %p250 = scmp.eq.s32.totalorder %s16, 0
    %p251 = por %p249, %p250
    %p252 = scmp.ne.s32.totalorder %s241, %s244
    %p253 = scmp.eq.s32.totalorder %s21, 1
    %p254 = por %p252, %p253
    %p255 = scmp.ne.s32.totalorder %s244, %s245
    %p256 = scmp.eq.s32.totalorder %s21, 0
    %p257 = por %p255, %p256
    %p258 = scmp.ne.s32.totalorder %s244, %s245
    %p259 = scmp.eq.s32.totalorder %s22, 1
    %p260 = por %p258, %p259
    %p262 = scmp.ne.s32.totalorder %s245, %s261
    %p263 = scmp.eq.s32.totalorder %s22, 0
    %p264 = por %p262, %p263
    %p265 = scmp.le.s32.totalorder 1, %s16
    %p266 = scmp.lt.s32.totalorder %s16, 3
    %p267 = pnand %p265, %p266
    %p268 = pneg %p267
    // Predicated region
    $region9: #{analysis_hyper_net.1} parent=5 // pred_check
      _
    $region10: #{analysis_hyper_net.1} parent=5 // pred_check_branch
      %270 = sbr.rel (%p267) target = $region12
    $region11: #{analysis_hyper_net.1} parent=5 // pred_region
      %s271 = ssub.s32 %s16, 1
      // Predicated region
      $region13: #{analysis_hyper_net.1} parent=11 // pred_check
        %p272 = pneg %p63
      $region14: #{analysis_hyper_net.1} parent=11 // pred_check_branch
        %274 = sbr.rel (%p272) target = $region16
      $region15: #{analysis_hyper_net.1} parent=11 // pred_region
        _
      $region16: #{analysis_hyper_net.1} parent=11 // pred_fallthru
        _
      // Predicated region
      $region17: #{analysis_hyper_net.1} parent=11 // pred_check
        %p275 = pneg %p84
      $region18: #{analysis_hyper_net.1} parent=11 // pred_check_branch
        %277 = sbr.rel (%p275) target = $region20
      $region19: #{analysis_hyper_net.1} parent=11 // pred_region
        _
      $region20: #{analysis_hyper_net.1} parent=11 // pred_fallthru
        _
      // Predicated region
      $region21: #{analysis_hyper_net.1} parent=11 // pred_check
        %p278 = pneg %p105
      $region22: #{analysis_hyper_net.1} parent=11 // pred_check_branch
        %280 = sbr.rel (%p278) target = $region24
      $region23: #{analysis_hyper_net.1} parent=11 // pred_region
        _
      $region24: #{analysis_hyper_net.1} parent=11 // pred_fallthru
        _
      // Predicated region
      $region25: #{analysis_hyper_net.1} parent=11 // pred_check
        %p281 = pneg %p126
      $region26: #{analysis_hyper_net.1} parent=11 // pred_check_branch
        %283 = sbr.rel (%p281) target = $region28
      $region27: #{analysis_hyper_net.1} parent=11 // pred_region
        _
      $region28: #{analysis_hyper_net.1} parent=11 // pred_fallthru
        _
      // Predicated region
      $region29: #{analysis_hyper_net.1} parent=11 // pred_check
        %p284 = pneg %p147
      $region30: #{analysis_hyper_net.1} parent=11 // pred_check_branch
        %286 = sbr.rel (%p284) target = $region32
      $region31: #{analysis_hyper_net.1} parent=11 // pred_region
        _
      $region32: #{analysis_hyper_net.1} parent=11 // pred_fallthru
        _
      // Predicated region
      $region33: #{analysis_hyper_net.1} parent=11 // pred_check
        %p287 = pneg %p168
      $region34: #{analysis_hyper_net.1} parent=11 // pred_check_branch
        %289 = sbr.rel (%p287) target = $region36
      $region35: #{analysis_hyper_net.1} parent=11 // pred_region
        _
      $region36: #{analysis_hyper_net.1} parent=11 // pred_fallthru
        _
      // Predicated region
      $region37: #{analysis_hyper_net.1} parent=11 // pred_check
        %p290 = pneg %p189
      $region38: #{analysis_hyper_net.1} parent=11 // pred_check_branch
        %292 = sbr.rel (%p290) target = $region40
      $region39: #{analysis_hyper_net.1} parent=11 // pred_region
        _
      $region40: #{analysis_hyper_net.1} parent=11 // pred_fallthru
        _
      // Predicated region
      $region41: #{analysis_hyper_net.1} parent=11 // pred_check
        %p293 = pneg %p210
      $region42: #{analysis_hyper_net.1} parent=11 // pred_check_branch
        %295 = sbr.rel (%p293) target = $region44
      $region43: #{analysis_hyper_net.1} parent=11 // pred_region
        _
      $region44: #{analysis_hyper_net.1} parent=11 // pred_fallthru
        _
      // Predicated region
      $region45: #{analysis_hyper_net.1} parent=11 // pred_check
        %p296 = pneg %p231
      $region46: #{analysis_hyper_net.1} parent=11 // pred_check_branch
        %298 = sbr.rel (%p296) target = $region48
      $region47: #{analysis_hyper_net.1} parent=11 // pred_region
        _
      $region48: #{analysis_hyper_net.1} parent=11 // pred_fallthru
        _
    $region12: #{analysis_hyper_net.1} parent=5 // pred_fallthru
      _
    %p299 = scmp.lt.s32.totalorder %s16, 2
    // Predicated region
    $region49: #{analysis_hyper_net.1} parent=5 // pred_check
      %p300 = pneg %p299
    $region50: #{analysis_hyper_net.1} parent=5 // pred_check_branch
      %302 = sbr.rel (%p300) target = $region52
    $region51: #{analysis_hyper_net.1} parent=5 // pred_region
      // Predicated region
      $region53: #{analysis_hyper_net.1} parent=51 // pred_check
        %p303 = pneg %p36
      $region54: #{analysis_hyper_net.1} parent=51 // pred_check_branch
        %305 = sbr.rel (%p303) target = $region56
      $region55: #{analysis_hyper_net.1} parent=51 // pred_region
        %p306 = scmp.lt.s32.totalorder %s16, 1
        %s307 = scalar_select %p306, %s16, 1
        %s308 = smul.addr %s307, 2
        %s309 = smul.addr %s308, 8
        %s310 = scalar_lea.vmem %s0, %s309
      $region56: #{analysis_hyper_net.1} parent=51 // pred_fallthru
        _
    $region52: #{analysis_hyper_net.1} parent=5 // pred_fallthru
      _
    %p311 = scmp.le.s32.totalorder 1, %s16
    %p312 = scmp.lt.s32.totalorder %s16, 3
    %p313 = pnand %p311, %p312
    %p314 = pneg %p313
    // Predicated region
    $region57: #{analysis_hyper_net.1} parent=5 // pred_check
      _
    $region58: #{analysis_hyper_net.1} parent=5 // pred_check_branch
      %316 = sbr.rel (%p313) target = $region60
    $region59: #{analysis_hyper_net.1} parent=5 // pred_region
      %s317 = ssub.s32 %s16, 1
      %p318 = scmp.lt.s32.totalorder %s21, 1
      %s319 = scalar_select %p318, %s21, 1
      %s320 = smul.addr %s319, 2
      %s321 = smul.addr %s320, 8
      %s322 = scalar_lea.vmem %s0, %s321
      %p323 = pneg %p42
      %p324 = pneg %p39
      %p325 = pneg %p63
      %p326 = pneg %p60
      %p327 = pneg %p84
      %p328 = pneg %p81
      %p329 = pneg %p105
      %p330 = pneg %p102
      %p331 = pneg %p126
      %p332 = pneg %p123
      %p333 = pneg %p147
      %p334 = pneg %p144
      %p335 = pneg %p168
      %p336 = pneg %p165
      %p337 = pneg %p189
      %p338 = pneg %p186
      %p339 = pneg %p210
      %p340 = pneg %p207
      %p341 = pneg %p231
      %p342 = pneg %p228
      %p343 = pneg %p257
      %p344 = pneg %p254
      %p345 = scmp.lt.s32.totalorder %s21, 1
      %s346 = scalar_select %p345, %s21, 1
      %s347 = smul.addr %s346, 4
      %s348 = scalar_lea.vmem %s10, %s347
      %p349 = scmp.lt.s32.totalorder %s21, 1
      %s350 = scalar_select %p349, %s21, 1
      %s351 = smul.addr %s350, 2
      %s352 = smul.addr %s351, 8
      %s353 = scalar_lea.vmem %s0, %s352
      %p354 = scmp.lt.s32.totalorder %s21, 1
      %s355 = scalar_select %p354, %s21, 1
      %s356 = smul.addr %s355, 4
      %s357 = scalar_lea.vmem %s10, %s356
      %v358 = vld [vmem:[%s353] sm:$0xff]
      %v359 = vld [vmem:[%s353 + $0x8] sm:$0xff]
      %v360 = vand.u32 2147483647, %v358
      %v361 = vand.u32 2147483647, %v359
      %v362 = vld [vmem:[%s1] sm:$0xff]
      %v363 = vld [vmem:[%s1 + $0x8] sm:$0xff]
      %vm364 = vcmask 130048
      %v366 = vsel %vm364, %v362, 0
      %v369 = vsel %vm364, %v363, 0
      %371 = vmatprep.subr.mxu0 0.0
      %372 = vmatpush1.msra.mxu0 0.0
      %373 = vmatprep.subr.mxu0 0.0
      %374 = vmatpush1.msra.mxu0 0.0
      %375 = vmatprep.subr.mxu0 0.0
      %376 = vmatpush1.msra.mxu0 0.0
      %377 = vmatprep.subr.mxu0 0.0
      %378 = vmatpush1.msra.mxu0 0.0
      %379 = vmatprep.subr.mxu0 0.0
      %380 = vmatpush1.msra.mxu0 0.0
      %381 = vmatprep.subr.mxu0 0.0
      %382 = vmatpush1.msra.mxu0 0.0
      %383 = vmatprep.subr.mxu0 0.0
      %384 = vmatpush1.msra.mxu0 0.0
      %385 = vmatprep.subr.mxu0 0.0
      %386 = vmatpush1.msra.mxu0 0.0
      %387 = vmatprep.subr.mxu0 0.0
      %388 = vmatpush1.msra.mxu0 0.0
      %389 = vmatprep.subr.mxu0 0.0
      %390 = vmatpush1.msra.mxu0 0.0
      %391 = vmatprep.subr.mxu0 0.0
      %392 = vmatpush1.msra.mxu0 0.0
      %393 = vmatprep.subr.mxu0 0.0
      %394 = vmatpush1.msra.mxu0 0.0
      %395 = vmatprep.subr.mxu0 0.0
      %396 = vmatpush1.msra.mxu0 0.0
      %397 = vmatprep.subr.mxu0 0.0
      %398 = vmatpush1.msra.mxu0 0.0
      %399 = vmatprep.subr.mxu0 0.0
      %400 = vmatpush1.msra.mxu0 %v361
      %401 = vmatprep.subr.mxu0 0.0
      %402 = vmatpush1.msra.mxu0 %v360
      %403 = vmatprep.subr.mxu0 0.0
      %404 = vmatpush2.msra.mxu0 0.0
      %405 = vmatprep.subr.mxu0 0.0
      %406 = vmatpush2.msra.mxu0 0.0
      %407 = vmatprep.subr.mxu0 0.0
      %408 = vmatpush2.msra.mxu0 0.0
      %409 = vmatprep.subr.mxu0 0.0
      %410 = vmatpush2.msra.mxu0 0.0
      %411 = vmatprep.subr.mxu0 0.0
      %412 = vmatpush2.msra.mxu0 0.0
      %413 = vmatprep.subr.mxu0 0.0
      %414 = vmatpush2.msra.mxu0 0.0
      %415 = vmatprep.subr.mxu0 0.0
      %416 = vmatpush2.msra.mxu0 0.0
      %417 = vmatprep.subr.mxu0 0.0
      %418 = vmatpush2.msra.mxu0 0.0
      %419 = vmatprep.subr.mxu0 0.0
      %420 = vmatpush2.msra.mxu0 0.0
      %421 = vmatprep.subr.mxu0 0.0
      %422 = vmatpush2.msra.mxu0 0.0
      %423 = vmatprep.subr.mxu0 0.0
      %424 = vmatpush2.msra.mxu0 0.0
      %425 = vmatprep.subr.mxu0 0.0
      %426 = vmatpush2.msra.mxu0 0.0
      %427 = vmatprep.subr.mxu0 0.0
      %428 = vmatpush2.msra.mxu0 0.0
      %429 = vmatprep.subr.mxu0 0.0
      %430 = vmatpush2.msra.mxu0 0.0
      %431 = vmatprep.subr.mxu0 0.0
      %432 = vmatpush2.msra.mxu0 0.0
      %433 = vmatprep.subr.mxu0 0.0
      %434 = vmatpush2.msra.mxu0 0.0
      %435 = vmatprep.mubr.f32.mxu0 0.0
      %436 = vmatmul.mubr.f32.gmra.mxu0 %v366
      %v437 = vpop.f32.mrf.mxu0
      %v438 = vadd.f32 0.0, %v437
      %v439 = vpop.f32.mrf.mxu0
      %440 = vmatprep.mubr.f32.mxu0 0.0
      %441 = vmatmul.mubr.f32.gmra.mxu0 %v369
      %v442 = vpop.f32.mrf.mxu0
      %v443 = vadd.f32 0.0, %v442
      %v444 = vpop.f32.mrf.mxu0
      %445 = vdwg.mxu0
      %v446 = vld [vmem:[%s2] sm:$0xff]
      %v447 = vld [vmem:[%s2 + $0x8] sm:$0xff]
      %v448 = vld [vmem:[%s2 + $0x10] sm:$0xff]
      %v449 = vld [vmem:[%s2 + $0x18] sm:$0xff]
      %v450 = vld [vmem:[%s2 + $0x20] sm:$0xff]
      %v451 = vld [vmem:[%s2 + $0x28] sm:$0xff]
      %v452 = vld [vmem:[%s2 + $0x30] sm:$0xff]
      %v453 = vld [vmem:[%s2 + $0x38] sm:$0xff]
      %v454 = vld [vmem:[%s2 + $0x40] sm:$0xff]
      %v455 = vld [vmem:[%s2 + $0x48] sm:$0xff]
      %v456 = vld [vmem:[%s2 + $0x50] sm:$0xff]
      %v457 = vld [vmem:[%s2 + $0x58] sm:$0xff]
      %v458 = vld [vmem:[%s2 + $0x60] sm:$0xff]
      %v459 = vld [vmem:[%s2 + $0x68] sm:$0xff]
      %v460 = vld [vmem:[%s2 + $0x70] sm:$0xff]
      %v461 = vld [vmem:[%s2 + $0x78] sm:$0xff]
      %s462 = scalar_lea.vmem %s1, 16
      %v463 = vld [vmem:[%s462] sm:$0xff]
      %v464 = vld [vmem:[%s462 + $0x8] sm:$0xff]
      %v466 = vsel %vm364, %v463, 0
      %v469 = vsel %vm364, %v464, 0
      %471 = vmatprep.subr.mxu0 0.0
      %472 = vmatpush1.msra.mxu0 0.0
      %473 = vmatprep.subr.mxu0 0.0
      %474 = vmatpush1.msra.mxu0 0.0
      %475 = vmatprep.subr.mxu0 0.0
      %476 = vmatpush1.msra.mxu0 0.0
      %477 = vmatprep.subr.mxu0 0.0
      %478 = vmatpush1.msra.mxu0 0.0
      %479 = vmatprep.subr.mxu0 0.0
      %480 = vmatpush1.msra.mxu0 0.0
      %481 = vmatprep.subr.mxu0 0.0
      %482 = vmatpush1.msra.mxu0 0.0
      %483 = vmatprep.subr.mxu0 0.0
      %484 = vmatpush1.msra.mxu0 0.0
      %485 = vmatprep.subr.mxu0 0.0
      %486 = vmatpush1.msra.mxu0 0.0
      %487 = vmatprep.subr.mxu0 0.0
      %488 = vmatpush1.msra.mxu0 0.0
      %489 = vmatprep.subr.mxu0 0.0
      %490 = vmatpush1.msra.mxu0 0.0
      %491 = vmatprep.subr.mxu0 0.0
      %492 = vmatpush1.msra.mxu0 0.0
      %493 = vmatprep.subr.mxu0 0.0
      %494 = vmatpush1.msra.mxu0 0.0
      %495 = vmatprep.subr.mxu0 0.0
      %496 = vmatpush1.msra.mxu0 0.0
      %497 = vmatprep.subr.mxu0 0.0
      %498 = vmatpush1.msra.mxu0 0.0
      %499 = vmatprep.subr.mxu0 0.0
      %500 = vmatpush1.msra.mxu0 %v361
      %501 = vmatprep.subr.mxu0 0.0
      %502 = vmatpush1.msra.mxu0 %v360
      %503 = vmatprep.subr.mxu0 0.0
      %504 = vmatpush2.msra.mxu0 0.0
      %505 = vmatprep.subr.mxu0 0.0
      %506 = vmatpush2.msra.mxu0 0.0
      %507 = vmatprep.subr.mxu0 0.0
      %508 = vmatpush2.msra.mxu0 0.0
      %509 = vmatprep.subr.mxu0 0.0
      %510 = vmatpush2.msra.mxu0 0.0
      %511 = vmatprep.subr.mxu0 0.0
      %512 = vmatpush2.msra.mxu0 0.0
      %513 = vmatprep.subr.mxu0 0.0
      %514 = vmatpush2.msra.mxu0 0.0
      %515 = vmatprep.subr.mxu0 0.0
      %516 = vmatpush2.msra.mxu0 0.0
      %517 = vmatprep.subr.mxu0 0.0
      %518 = vmatpush2.msra.mxu0 0.0
      %519 = vmatprep.subr.mxu0 0.0
      %520 = vmatpush2.msra.mxu0 0.0
      %521 = vmatprep.subr.mxu0 0.0
      %522 = vmatpush2.msra.mxu0 0.0
      %523 = vmatprep.subr.mxu0 0.0
      %524 = vmatpush2.msra.mxu0 0.0
      %525 = vmatprep.subr.mxu0 0.0
      %526 = vmatpush2.msra.mxu0 0.0
      %527 = vmatprep.subr.mxu0 0.0
      %528 = vmatpush2.msra.mxu0 0.0
      %529 = vmatprep.subr.mxu0 0.0
      %530 = vmatpush2.msra.mxu0 0.0
      %531 = vmatprep.subr.mxu0 0.0
      %532 = vmatpush2.msra.mxu0 0.0
      %533 = vmatprep.subr.mxu0 0.0
      %534 = vmatpush2.msra.mxu0 0.0
      %535 = vmatprep.mubr.f32.mxu0 0.0
      %536 = vmatmul.mubr.f32.gmra.mxu0 %v466
      %v537 = vpop.f32.mrf.mxu0
      %v538 = vadd.f32 0.0, %v537
      %v539 = vpop.f32.mrf.mxu0
      %540 = vmatprep.mubr.f32.mxu0 0.0
      %541 = vmatmul.mubr.f32.gmra.mxu0 %v469
      %v542 = vpop.f32.mrf.mxu0
      %v543 = vadd.f32 0.0, %v542
      %v544 = vpop.f32.mrf.mxu0
      %545 = vdwg.mxu0
      %s546 = scalar_lea.vmem %s2, 128
      %v547 = vld [vmem:[%s546] sm:$0xff]
      %v548 = vld [vmem:[%s546 + $0x8] sm:$0xff]
      %v549 = vld [vmem:[%s546 + $0x10] sm:$0xff]
      %v550 = vld [vmem:[%s546 + $0x18] sm:$0xff]
      %v551 = vld [vmem:[%s546 + $0x20] sm:$0xff]
      %v552 = vld [vmem:[%s546 + $0x28] sm:$0xff]
      %v553 = vld [vmem:[%s546 + $0x30] sm:$0xff]
      %v554 = vld [vmem:[%s546 + $0x38] sm:$0xff]
      %v555 = vld [vmem:[%s546 + $0x40] sm:$0xff]
      %v556 = vld [vmem:[%s546 + $0x48] sm:$0xff]
      %v557 = vld [vmem:[%s546 + $0x50] sm:$0xff]
      %v558 = vld [vmem:[%s546 + $0x58] sm:$0xff]
      %v559 = vld [vmem:[%s546 + $0x60] sm:$0xff]
      %v560 = vld [vmem:[%s546 + $0x68] sm:$0xff]
      %v561 = vld [vmem:[%s546 + $0x70] sm:$0xff]
      %v562 = vld [vmem:[%s546 + $0x78] sm:$0xff]
      %563 = vmatprep.subr.mxu0 0.0
      %564 = vmatpush1.msra.mxu0 %v562
      %565 = vmatprep.subr.mxu0 0.0
      %566 = vmatpush1.msra.mxu0 %v561
      %567 = vmatprep.subr.mxu0 0.0
      %568 = vmatpush1.msra.mxu0 %v560
      %569 = vmatprep.subr.mxu0 0.0
      %570 = vmatpush1.msra.mxu0 %v559
      %571 = vmatprep.subr.mxu0 0.0
      %572 = vmatpush1.msra.mxu0 %v558
      %573 = vmatprep.subr.mxu0 0.0
      %574 = vmatpush1.msra.mxu0 %v557
      %575 = vmatprep.subr.mxu0 0.0
      %576 = vmatpush1.msra.mxu0 %v556
      %577 = vmatprep.subr.mxu0 0.0
      %578 = vmatpush1.msra.mxu0 %v555
      %579 = vmatprep.subr.mxu0 0.0
      %580 = vmatpush1.msra.mxu0 %v554
      %581 = vmatprep.subr.mxu0 0.0
      %582 = vmatpush1.msra.mxu0 %v553
      %583 = vmatprep.subr.mxu0 0.0
      %584 = vmatpush1.msra.mxu0 %v552
      %585 = vmatprep.subr.mxu0 0.0
      %586 = vmatpush1.msra.mxu0 %v551
      %587 = vmatprep.subr.mxu0 0.0
      %588 = vmatpush1.msra.mxu0 %v550
      %589 = vmatprep.subr.mxu0 0.0
      %590 = vmatpush1.msra.mxu0 %v549
      %591 = vmatprep.subr.mxu0 0.0
      %592 = vmatpush1.msra.mxu0 %v548
      %593 = vmatprep.subr.mxu0 0.0
      %594 = vmatpush1.msra.mxu0 %v547
      %595 = vmatprep.subr.mxu0 0.0
      %596 = vmatpush2.msra.mxu0 0.0
      %597 = vmatprep.subr.mxu0 0.0
      %598 = vmatpush2.msra.mxu0 0.0
      %599 = vmatprep.subr.mxu0 0.0
      %600 = vmatpush2.msra.mxu0 0.0
      %601 = vmatprep.subr.mxu0 0.0
      %602 = vmatpush2.msra.mxu0 0.0
      %603 = vmatprep.subr.mxu0 0.0
      %604 = vmatpush2.msra.mxu0 0.0
      %605 = vmatprep.subr.mxu0 0.0
      %606 = vmatpush2.msra.mxu0 0.0
      %607 = vmatprep.subr.mxu0 0.0
      %608 = vmatpush2.msra.mxu0 0.0
      %609 = vmatprep.subr.mxu0 0.0
      %610 = vmatpush2.msra.mxu0 0.0
      %611 = vmatprep.subr.mxu0 0.0
      %612 = vmatpush2.msra.mxu0 0.0
      %613 = vmatprep.subr.mxu0 0.0
      %614 = vmatpush2.msra.mxu0 0.0
      %615 = vmatprep.subr.mxu0 0.0
      %616 = vmatpush2.msra.mxu0 0.0
      %617 = vmatprep.subr.mxu0 0.0
      %618 = vmatpush2.msra.mxu0 0.0
      %619 = vmatprep.subr.mxu0 0.0
      %620 = vmatpush2.msra.mxu0 0.0
      %621 = vmatprep.subr.mxu0 0.0
      %622 = vmatpush2.msra.mxu0 0.0
      %623 = vmatprep.subr.mxu0 0.0
      %624 = vmatpush2.msra.mxu0 0.0
      %625 = vmatprep.subr.mxu0 0.0
      %626 = vmatpush2.msra.mxu0 0.0
      %627 = vmatprep.mubr.f32.mxu0 0.0
      %628 = vmatmul.mubr.f32.gmra.mxu0 %v538
      %v629 = vpop.f32.mrf.mxu0
      %v630 = vadd.f32 0.0, %v629
      %v631 = vpop.f32.mrf.mxu0
      %632 = vmatprep.mubr.f32.mxu0 0.0
      %633 = vmatmul.mubr.f32.gmra.mxu0 %v543
      %v634 = vpop.f32.mrf.mxu0
      %v635 = vadd.f32 0.0, %v634
      %v636 = vpop.f32.mrf.mxu0
      %637 = vdwg.mxu0
      %638 = vmatprep.subr.mxu0 0.0
      %639 = vmatpush1.msra.mxu0 %v461
      %640 = vmatprep.subr.mxu0 0.0
      %641 = vmatpush1.msra.mxu0 %v460
      %642 = vmatprep.subr.mxu0 0.0
      %643 = vmatpush1.msra.mxu0 %v459
      %644 = vmatprep.subr.mxu0 0.0
      %645 = vmatpush1.msra.mxu0 %v458
      %646 = vmatprep.subr.mxu0 0.0
      %647 = vmatpush1.msra.mxu0 %v457
      %648 = vmatprep.subr.mxu0 0.0
      %649 = vmatpush1.msra.mxu0 %v456
      %650 = vmatprep.subr.mxu0 0.0
      %651 = vmatpush1.msra.mxu0 %v455
      %652 = vmatprep.subr.mxu0 0.0
      %653 = vmatpush1.msra.mxu0 %v454
      %654 = vmatprep.subr.mxu0 0.0
      %655 = vmatpush1.msra.mxu0 %v453
      %656 = vmatprep.subr.mxu0 0.0
      %657 = vmatpush1.msra.mxu0 %v452
      %658 = vmatprep.subr.mxu0 0.0
      %659 = vmatpush1.msra.mxu0 %v451
      %660 = vmatprep.subr.mxu0 0.0
      %661 = vmatpush1.msra.mxu0 %v450
      %662 = vmatprep.subr.mxu0 0.0
      %663 = vmatpush1.msra.mxu0 %v449
      %664 = vmatprep.subr.mxu0 0.0
      %665 = vmatpush1.msra.mxu0 %v448
      %666 = vmatprep.subr.mxu0 0.0
      %667 = vmatpush1.msra.mxu0 %v447
      %668 = vmatprep.subr.mxu0 0.0
      %669 = vmatpush1.msra.mxu0 %v446
      %670 = vmatprep.subr.mxu0 0.0
      %671 = vmatpush2.msra.mxu0 0.0
      %672 = vmatprep.subr.mxu0 0.0
      %673 = vmatpush2.msra.mxu0 0.0
      %674 = vmatprep.subr.mxu0 0.0
      %675 = vmatpush2.msra.mxu0 0.0
      %676 = vmatprep.subr.mxu0 0.0
      %677 = vmatpush2.msra.mxu0 0.0
      %678 = vmatprep.subr.mxu0 0.0
      %679 = vmatpush2.msra.mxu0 0.0
      %680 = vmatprep.subr.mxu0 0.0
      %681 = vmatpush2.msra.mxu0 0.0
      %682 = vmatprep.subr.mxu0 0.0
      %683 = vmatpush2.msra.mxu0 0.0
      %684 = vmatprep.subr.mxu0 0.0
      %685 = vmatpush2.msra.mxu0 0.0
      %686 = vmatprep.subr.mxu0 0.0
      %687 = vmatpush2.msra.mxu0 0.0
      %688 = vmatprep.subr.mxu0 0.0
      %689 = vmatpush2.msra.mxu0 0.0
      %690 = vmatprep.subr.mxu0 0.0
      %691 = vmatpush2.msra.mxu0 0.0
      %692 = vmatprep.subr.mxu0 0.0
      %693 = vmatpush2.msra.mxu0 0.0
      %694 = vmatprep.subr.mxu0 0.0
      %695 = vmatpush2.msra.mxu0 0.0
      %696 = vmatprep.subr.mxu0 0.0
      %697 = vmatpush2.msra.mxu0 0.0
      %698 = vmatprep.subr.mxu0 0.0
      %699 = vmatpush2.msra.mxu0 0.0
      %700 = vmatprep.subr.mxu0 0.0
      %701 = vmatpush2.msra.mxu0 0.0
      %702 = vmatprep.mubr.f32.mxu0 0.0
      %703 = vmatmul.mubr.f32.gmra.mxu0 %v438
      %v704 = vpop.f32.mrf.mxu0
      %v705 = vadd.f32 %v630, %v704
      %v706 = vpop.f32.mrf.mxu0
      %707 = vmatprep.mubr.f32.mxu0 0.0
      %708 = vmatmul.mubr.f32.gmra.mxu0 %v443
      %v709 = vpop.f32.mrf.mxu0
      %v710 = vadd.f32 %v635, %v709
      %v711 = vpop.f32.mrf.mxu0
      %712 = vdwg.mxu0
      %s713 = scalar_lea.vmem %s1, 32
      %v714 = vld [vmem:[%s713] sm:$0xff]
      %v715 = vld [vmem:[%s713 + $0x8] sm:$0xff]
      %v717 = vsel %vm364, %v714, 0
      %v720 = vsel %vm364, %v715, 0
      %722 = vmatprep.subr.mxu0 0.0
      %723 = vmatpush1.msra.mxu0 0.0
      %724 = vmatprep.subr.mxu0 0.0
      %725 = vmatpush1.msra.mxu0 0.0
      %726 = vmatprep.subr.mxu0 0.0
      %727 = vmatpush1.msra.mxu0 0.0
      %728 = vmatprep.subr.mxu0 0.0
      %729 = vmatpush1.msra.mxu0 0.0
      %730 = vmatprep.subr.mxu0 0.0
      %731 = vmatpush1.msra.mxu0 0.0
      %732 = vmatprep.subr.mxu0 0.0
      %733 = vmatpush1.msra.mxu0 0.0
      %734 = vmatprep.subr.mxu0 0.0
      %735 = vmatpush1.msra.mxu0 0.0
      %736 = vmatprep.subr.mxu0 0.0
      %737 = vmatpush1.msra.mxu0 0.0
      %738 = vmatprep.subr.mxu0 0.0
      %739 = vmatpush1.msra.mxu0 0.0
      %740 = vmatprep.subr.mxu0 0.0
      %741 = vmatpush1.msra.mxu0 0.0
      %742 = vmatprep.subr.mxu0 0.0
      %743 = vmatpush1.msra.mxu0 0.0
      %744 = vmatprep.subr.mxu0 0.0
      %745 = vmatpush1.msra.mxu0 0.0
      %746 = vmatprep.subr.mxu0 0.0
      %747 = vmatpush1.msra.mxu0 0.0
      %748 = vmatprep.subr.mxu0 0.0
      %749 = vmatpush1.msra.mxu0 0.0
      %750 = vmatprep.subr.mxu0 0.0
      %751 = vmatpush1.msra.mxu0 %v361
      %752 = vmatprep.subr.mxu0 0.0
      %753 = vmatpush1.msra.mxu0 %v360
      %754 = vmatprep.subr.mxu0 0.0
      %755 = vmatpush2.msra.mxu0 0.0
      %756 = vmatprep.subr.mxu0 0.0
      %757 = vmatpush2.msra.mxu0 0.0
      %758 = vmatprep.subr.mxu0 0.0
      %759 = vmatpush2.msra.mxu0 0.0
      %760 = vmatprep.subr.mxu0 0.0
      %761 = vmatpush2.msra.mxu0 0.0
      %762 = vmatprep.subr.mxu0 0.0
      %763 = vmatpush2.msra.mxu0 0.0
      %764 = vmatprep.subr.mxu0 0.0
      %765 = vmatpush2.msra.mxu0 0.0
      %766 = vmatprep.subr.mxu0 0.0
      %767 = vmatpush2.msra.mxu0 0.0
      %768 = vmatprep.subr.mxu0 0.0
      %769 = vmatpush2.msra.mxu0 0.0
      %770 = vmatprep.subr.mxu0 0.0
      %771 = vmatpush2.msra.mxu0 0.0
      %772 = vmatprep.subr.mxu0 0.0
      %773 = vmatpush2.msra.mxu0 0.0
      %774 = vmatprep.subr.mxu0 0.0
      %775 = vmatpush2.msra.mxu0 0.0
      %776 = vmatprep.subr.mxu0 0.0
      %777 = vmatpush2.msra.mxu0 0.0
      %778 = vmatprep.subr.mxu0 0.0
      %779 = vmatpush2.msra.mxu0 0.0
      %780 = vmatprep.subr.mxu0 0.0
      %781 = vmatpush2.msra.mxu0 0.0
      %782 = vmatprep.subr.mxu0 0.0
      %783 = vmatpush2.msra.mxu0 0.0
      %784 = vmatprep.subr.mxu0 0.0
      %785 = vmatpush2.msra.mxu0 0.0
      %786 = vmatprep.mubr.f32.mxu0 0.0
      %787 = vmatmul.mubr.f32.gmra.mxu0 %v717
      %v788 = vpop.f32.mrf.mxu0
      %v789 = vadd.f32 0.0, %v788
      %v790 = vpop.f32.mrf.mxu0
      %791 = vmatprep.mubr.f32.mxu0 0.0
      %792 = vmatmul.mubr.f32.gmra.mxu0 %v720
      %v793 = vpop.f32.mrf.mxu0
      %v794 = vadd.f32 0.0, %v793
      %v795 = vpop.f32.mrf.mxu0
      %796 = vdwg.mxu0
      %s797 = scalar_lea.vmem %s2, 256
      %v798 = vld [vmem:[%s797] sm:$0xff]
      %v799 = vld [vmem:[%s797 + $0x8] sm:$0xff]
      %v800 = vld [vmem:[%s797 + $0x10] sm:$0xff]
      %v801 = vld [vmem:[%s797 + $0x18] sm:$0xff]
      %v802 = vld [vmem:[%s797 + $0x20] sm:$0xff]
      %v803 = vld [vmem:[%s797 + $0x28] sm:$0xff]
      %v804 = vld [vmem:[%s797 + $0x30] sm:$0xff]
      %v805 = vld [vmem:[%s797 + $0x38] sm:$0xff]
      %v806 = vld [vmem:[%s797 + $0x40] sm:$0xff]
      %v807 = vld [vmem:[%s797 + $0x48] sm:$0xff]
      %v808 = vld [vmem:[%s797 + $0x50] sm:$0xff]
      %v809 = vld [vmem:[%s797 + $0x58] sm:$0xff]
      %v810 = vld [vmem:[%s797 + $0x60] sm:$0xff]
      %v811 = vld [vmem:[%s797 + $0x68] sm:$0xff]
      %v812 = vld [vmem:[%s797 + $0x70] sm:$0xff]
      %v813 = vld [vmem:[%s797 + $0x78] sm:$0xff]
      %814 = vmatprep.subr.mxu0 0.0
      %815 = vmatpush1.msra.mxu0 %v813
      %816 = vmatprep.subr.mxu0 0.0
      %817 = vmatpush1.msra.mxu0 %v812
      %818 = vmatprep.subr.mxu0 0.0
      %819 = vmatpush1.msra.mxu0 %v811
      %820 = vmatprep.subr.mxu0 0.0
      %821 = vmatpush1.msra.mxu0 %v810
      %822 = vmatprep.subr.mxu0 0.0
      %823 = vmatpush1.msra.mxu0 %v809
      %824 = vmatprep.subr.mxu0 0.0
      %825 = vmatpush1.msra.mxu0 %v808
      %826 = vmatprep.subr.mxu0 0.0
      %827 = vmatpush1.msra.mxu0 %v807
      %828 = vmatprep.subr.mxu0 0.0
      %829 = vmatpush1.msra.mxu0 %v806
      %830 = vmatprep.subr.mxu0 0.0
      %831 = vmatpush1.msra.mxu0 %v805
      %832 = vmatprep.subr.mxu0 0.0
      %833 = vmatpush1.msra.mxu0 %v804
      %834 = vmatprep.subr.mxu0 0.0
      %835 = vmatpush1.msra.mxu0 %v803
      %836 = vmatprep.subr.mxu0 0.0
      %837 = vmatpush1.msra.mxu0 %v802
      %838 = vmatprep.subr.mxu0 0.0
      %839 = vmatpush1.msra.mxu0 %v801
      %840 = vmatprep.subr.mxu0 0.0
      %841 = vmatpush1.msra.mxu0 %v800
      %842 = vmatprep.subr.mxu0 0.0
      %843 = vmatpush1.msra.mxu0 %v799
      %844 = vmatprep.subr.mxu0 0.0
      %845 = vmatpush1.msra.mxu0 %v798
      %846 = vmatprep.subr.mxu0 0.0
      %847 = vmatpush2.msra.mxu0 0.0
      %848 = vmatprep.subr.mxu0 0.0
      %849 = vmatpush2.msra.mxu0 0.0
      %850 = vmatprep.subr.mxu0 0.0
      %851 = vmatpush2.msra.mxu0 0.0
      %852 = vmatprep.subr.mxu0 0.0
      %853 = vmatpush2.msra.mxu0 0.0
      %854 = vmatprep.subr.mxu0 0.0
      %855 = vmatpush2.msra.mxu0 0.0
      %856 = vmatprep.subr.mxu0 0.0
      %857 = vmatpush2.msra.mxu0 0.0
      %858 = vmatprep.subr.mxu0 0.0
      %859 = vmatpush2.msra.mxu0 0.0
      %860 = vmatprep.subr.mxu0 0.0
      %861 = vmatpush2.msra.mxu0 0.0
      %862 = vmatprep.subr.mxu0 0.0
      %863 = vmatpush2.msra.mxu0 0.0
      %864 = vmatprep.subr.mxu0 0.0
      %865 = vmatpush2.msra.mxu0 0.0
      %866 = vmatprep.subr.mxu0 0.0
      %867 = vmatpush2.msra.mxu0 0.0
      %868 = vmatprep.subr.mxu0 0.0
      %869 = vmatpush2.msra.mxu0 0.0
      %870 = vmatprep.subr.mxu0 0.0
      %871 = vmatpush2.msra.mxu0 0.0
      %872 = vmatprep.subr.mxu0 0.0
      %873 = vmatpush2.msra.mxu0 0.0
      %874 = vmatprep.subr.mxu0 0.0
      %875 = vmatpush2.msra.mxu0 0.0
      %876 = vmatprep.subr.mxu0 0.0
      %877 = vmatpush2.msra.mxu0 0.0
      %878 = vmatprep.mubr.f32.mxu0 0.0
      %879 = vmatmul.mubr.f32.gmra.mxu0 %v789
      %v880 = vpop.f32.mrf.mxu0
      %v881 = vadd.f32 0.0, %v880
      %v882 = vpop.f32.mrf.mxu0
      %883 = vmatprep.mubr.f32.mxu0 0.0
      %884 = vmatmul.mubr.f32.gmra.mxu0 %v794
      %v885 = vpop.f32.mrf.mxu0
      %v886 = vadd.f32 0.0, %v885
      %v887 = vpop.f32.mrf.mxu0
      %888 = vdwg.mxu0
      %v889 = vadd.f32 %v705, %v881
      %v890 = vadd.f32 %v710, %v886
      %v891 = vld [vmem:[%s3] sm:$0x1]
      %v893 = vlaneseq
      %v894 = vshrl.u32 %v893, 7
      %v895 = vsub.s32 0, %v894
      %v896 = vrot.slane %v891, %v895
      %v898 = vadd.f32 %v889, %v896
      %v899 = vadd.f32 %v890, %v896
      %v900 = vmax.f32 %v898, 0.0
      %v901 = vmax.f32 %v899, 0.0
      %v902 = vld [vmem:[%s4] sm:$0xff]
      %v904 = vsel %vm364, %v902, 0
      %906 = vmatprep.subr.mxu0 0.0
      %907 = vmatpush1.msra.mxu0 0.0
      %908 = vmatprep.subr.mxu0 0.0
      %909 = vmatpush1.msra.mxu0 0.0
      %910 = vmatprep.subr.mxu0 0.0
      %911 = vmatpush1.msra.mxu0 0.0
      %912 = vmatprep.subr.mxu0 0.0
      %913 = vmatpush1.msra.mxu0 0.0
      %914 = vmatprep.subr.mxu0 0.0
      %915 = vmatpush1.msra.mxu0 0.0
      %916 = vmatprep.subr.mxu0 0.0
      %917 = vmatpush1.msra.mxu0 0.0
      %918 = vmatprep.subr.mxu0 0.0
      %919 = vmatpush1.msra.mxu0 0.0
      %920 = vmatprep.subr.mxu0 0.0
      %921 = vmatpush1.msra.mxu0 0.0
      %922 = vmatprep.subr.mxu0 0.0
      %923 = vmatpush1.msra.mxu0 0.0
      %924 = vmatprep.subr.mxu0 0.0
      %925 = vmatpush1.msra.mxu0 0.0
      %926 = vmatprep.subr.mxu0 0.0
      %927 = vmatpush1.msra.mxu0 0.0
      %928 = vmatprep.subr.mxu0 0.0
      %929 = vmatpush1.msra.mxu0 0.0
      %930 = vmatprep.subr.mxu0 0.0
      %931 = vmatpush1.msra.mxu0 0.0
      %932 = vmatprep.subr.mxu0 0.0
      %933 = vmatpush1.msra.mxu0 0.0
      %934 = vmatprep.subr.mxu0 0.0
      %935 = vmatpush1.msra.mxu0 %v901
      %936 = vmatprep.subr.mxu0 0.0
      %937 = vmatpush1.msra.mxu0 %v900
      %938 = vmatprep.subr.mxu0 0.0
      %939 = vmatpush2.msra.mxu0 0.0
      %940 = vmatprep.subr.mxu0 0.0
      %941 = vmatpush2.msra.mxu0 0.0
      %942 = vmatprep.subr.mxu0 0.0
      %943 = vmatpush2.msra.mxu0 0.0
      %944 = vmatprep.subr.mxu0 0.0
      %945 = vmatpush2.msra.mxu0 0.0
      %946 = vmatprep.subr.mxu0 0.0
      %947 = vmatpush2.msra.mxu0 0.0
      %948 = vmatprep.subr.mxu0 0.0
      %949 = vmatpush2.msra.mxu0 0.0
      %950 = vmatprep.subr.mxu0 0.0
      %951 = vmatpush2.msra.mxu0 0.0
      %952 = vmatprep.subr.mxu0 0.0
      %953 = vmatpush2.msra.mxu0 0.0
      %954 = vmatprep.subr.mxu0 0.0
      %955 = vmatpush2.msra.mxu0 0.0
      %956 = vmatprep.subr.mxu0 0.0
      %957 = vmatpush2.msra.mxu0 0.0
      %958 = vmatprep.subr.mxu0 0.0
      %959 = vmatpush2.msra.mxu0 0.0
      %960 = vmatprep.subr.mxu0 0.0
      %961 = vmatpush2.msra.mxu0 0.0
      %962 = vmatprep.subr.mxu0 0.0
      %963 = vmatpush2.msra.mxu0 0.0
      %964 = vmatprep.subr.mxu0 0.0
      %965 = vmatpush2.msra.mxu0 0.0
      %966 = vmatprep.subr.mxu0 0.0
      %967 = vmatpush2.msra.mxu0 0.0
      %968 = vmatprep.subr.mxu0 0.0
      %969 = vmatpush2.msra.mxu0 0.0
      %970 = vmatprep.mubr.f32.mxu0 0.0
      %971 = vmatmul.mubr.f32.gmra.mxu0 %v904
      %v972 = vpop.f32.mrf.mxu0
      %v973 = vadd.f32 0.0, %v972
      %v974 = vpop.f32.mrf.mxu0
      %975 = vdwg.mxu0
      %v976 = vld [vmem:[%s5] sm:$0xff]
      %v977 = vld [vmem:[%s5 + $0x8] sm:$0xff]
      %v978 = vld [vmem:[%s5 + $0x10] sm:$0xff]
      %v979 = vld [vmem:[%s5 + $0x18] sm:$0xff]
      %v980 = vld [vmem:[%s5 + $0x20] sm:$0xff]
      %v981 = vld [vmem:[%s5 + $0x28] sm:$0xff]
      %v982 = vld [vmem:[%s5 + $0x30] sm:$0xff]
      %v983 = vld [vmem:[%s5 + $0x38] sm:$0xff]
      %v984 = vld [vmem:[%s5 + $0x40] sm:$0xff]
      %v985 = vld [vmem:[%s5 + $0x48] sm:$0xff]
      %v986 = vld [vmem:[%s5 + $0x50] sm:$0xff]
      %v987 = vld [vmem:[%s5 + $0x58] sm:$0xff]
      %v988 = vld [vmem:[%s5 + $0x60] sm:$0xff]
      %v989 = vld [vmem:[%s5 + $0x68] sm:$0xff]
      %v990 = vld [vmem:[%s5 + $0x70] sm:$0xff]
      %v991 = vld [vmem:[%s5 + $0x78] sm:$0xff]
      %s992 = scalar_lea.vmem %s4, 8
      %v993 = vld [vmem:[%s992] sm:$0xff]
      %v995 = vsel %vm364, %v993, 0
      %997 = vmatprep.subr.mxu0 0.0
      %998 = vmatpush1.msra.mxu0 0.0
      %999 = vmatprep.subr.mxu0 0.0
      %1000 = vmatpush1.msra.mxu0 0.0
      %1001 = vmatprep.subr.mxu0 0.0
      %1002 = vmatpush1.msra.mxu0 0.0
      %1003 = vmatprep.subr.mxu0 0.0
      %1004 = vmatpush1.msra.mxu0 0.0
      %1005 = vmatprep.subr.mxu0 0.0
      %1006 = vmatpush1.msra.mxu0 0.0
      %1007 = vmatprep.subr.mxu0 0.0
      %1008 = vmatpush1.msra.mxu0 0.0
      %1009 = vmatprep.subr.mxu0 0.0
      %1010 = vmatpush1.msra.mxu0 0.0
      %1011 = vmatprep.subr.mxu0 0.0
      %1012 = vmatpush1.msra.mxu0 0.0
      %1013 = vmatprep.subr.mxu0 0.0
      %1014 = vmatpush1.msra.mxu0 0.0
      %1015 = vmatprep.subr.mxu0 0.0
      %1016 = vmatpush1.msra.mxu0 0.0
      %1017 = vmatprep.subr.mxu0 0.0
      %1018 = vmatpush1.msra.mxu0 0.0
      %1019 = vmatprep.subr.mxu0 0.0
      %1020 = vmatpush1.msra.mxu0 0.0
      %1021 = vmatprep.subr.mxu0 0.0
      %1022 = vmatpush1.msra.mxu0 0.0
      %1023 = vmatprep.subr.mxu0 0.0
      %1024 = vmatpush1.msra.mxu0 0.0
      %1025 = vmatprep.subr.mxu0 0.0
      %1026 = vmatpush1.msra.mxu0 %v901
      %1027 = vmatprep.subr.mxu0 0.0
      %1028 = vmatpush1.msra.mxu0 %v900
      %1029 = vmatprep.subr.mxu0 0.0
      %1030 = vmatpush2.msra.mxu0 0.0
      %1031 = vmatprep.subr.mxu0 0.0
      %1032 = vmatpush2.msra.mxu0 0.0
      %1033 = vmatprep.subr.mxu0 0.0
      %1034 = vmatpush2.msra.mxu0 0.0
      %1035 = vmatprep.subr.mxu0 0.0
      %1036 = vmatpush2.msra.mxu0 0.0
      %1037 = vmatprep.subr.mxu0 0.0
      %1038 = vmatpush2.msra.mxu0 0.0
      %1039 = vmatprep.subr.mxu0 0.0
      %1040 = vmatpush2.msra.mxu0 0.0
      %1041 = vmatprep.subr.mxu0 0.0
      %1042 = vmatpush2.msra.mxu0 0.0
      %1043 = vmatprep.subr.mxu0 0.0
      %1044 = vmatpush2.msra.mxu0 0.0
      %1045 = vmatprep.subr.mxu0 0.0
      %1046 = vmatpush2.msra.mxu0 0.0
      %1047 = vmatprep.subr.mxu0 0.0
      %1048 = vmatpush2.msra.mxu0 0.0
      %1049 = vmatprep.subr.mxu0 0.0
      %1050 = vmatpush2.msra.mxu0 0.0
      %1051 = vmatprep.subr.mxu0 0.0
      %1052 = vmatpush2.msra.mxu0 0.0
      %1053 = vmatprep.subr.mxu0 0.0
      %1054 = vmatpush2.msra.mxu0 0.0
      %1055 = vmatprep.subr.mxu0 0.0
      %1056 = vmatpush2.msra.mxu0 0.0
      %1057 = vmatprep.subr.mxu0 0.0
      %1058 = vmatpush2.msra.mxu0 0.0
      %1059 = vmatprep.subr.mxu0 0.0
      %1060 = vmatpush2.msra.mxu0 0.0
      %1061 = vmatprep.mubr.f32.mxu0 0.0
      %1062 = vmatmul.mubr.f32.gmra.mxu0 %v995
      %v1063 = vpop.f32.mrf.mxu0
      %v1064 = vadd.f32 0.0, %v1063
      %v1065 = vpop.f32.mrf.mxu0
      %1066 = vdwg.mxu0
      %s1067 = scalar_lea.vmem %s5, 128
      %v1068 = vld [vmem:[%s1067] sm:$0xff]
      %v1069 = vld [vmem:[%s1067 + $0x8] sm:$0xff]
      %v1070 = vld [vmem:[%s1067 + $0x10] sm:$0xff]
      %v1071 = vld [vmem:[%s1067 + $0x18] sm:$0xff]
      %v1072 = vld [vmem:[%s1067 + $0x20] sm:$0xff]
      %v1073 = vld [vmem:[%s1067 + $0x28] sm:$0xff]
      %v1074 = vld [vmem:[%s1067 + $0x30] sm:$0xff]
      %v1075 = vld [vmem:[%s1067 + $0x38] sm:$0xff]
      %v1076 = vld [vmem:[%s1067 + $0x40] sm:$0xff]
      %v1077 = vld [vmem:[%s1067 + $0x48] sm:$0xff]
      %v1078 = vld [vmem:[%s1067 + $0x50] sm:$0xff]
      %v1079 = vld [vmem:[%s1067 + $0x58] sm:$0xff]
      %v1080 = vld [vmem:[%s1067 + $0x60] sm:$0xff]
      %v1081 = vld [vmem:[%s1067 + $0x68] sm:$0xff]
      %v1082 = vld [vmem:[%s1067 + $0x70] sm:$0xff]
      %v1083 = vld [vmem:[%s1067 + $0x78] sm:$0xff]
      %1084 = vmatprep.subr.mxu0 0.0
      %1085 = vmatpush1.msra.mxu0 %v1083
      %1086 = vmatprep.subr.mxu0 0.0
      %1087 = vmatpush1.msra.mxu0 %v1082
      %1088 = vmatprep.subr.mxu0 0.0
      %1089 = vmatpush1.msra.mxu0 %v1081
      %1090 = vmatprep.subr.mxu0 0.0
      %1091 = vmatpush1.msra.mxu0 %v1080
      %1092 = vmatprep.subr.mxu0 0.0
      %1093 = vmatpush1.msra.mxu0 %v1079
      %1094 = vmatprep.subr.mxu0 0.0
      %1095 = vmatpush1.msra.mxu0 %v1078
      %1096 = vmatprep.subr.mxu0 0.0
      %1097 = vmatpush1.msra.mxu0 %v1077
      %1098 = vmatprep.subr.mxu0 0.0
      %1099 = vmatpush1.msra.mxu0 %v1076
      %1100 = vmatprep.subr.mxu0 0.0
      %1101 = vmatpush1.msra.mxu0 %v1075
      %1102 = vmatprep.subr.mxu0 0.0
      %1103 = vmatpush1.msra.mxu0 %v1074
      %1104 = vmatprep.subr.mxu0 0.0
      %1105 = vmatpush1.msra.mxu0 %v1073
      %1106 = vmatprep.subr.mxu0 0.0
      %1107 = vmatpush1.msra.mxu0 %v1072
      %1108 = vmatprep.subr.mxu0 0.0
      %1109 = vmatpush1.msra.mxu0 %v1071
      %1110 = vmatprep.subr.mxu0 0.0
      %1111 = vmatpush1.msra.mxu0 %v1070
      %1112 = vmatprep.subr.mxu0 0.0
      %1113 = vmatpush1.msra.mxu0 %v1069
      %1114 = vmatprep.subr.mxu0 0.0
      %1115 = vmatpush1.msra.mxu0 %v1068
      %1116 = vmatprep.subr.mxu0 0.0
      %1117 = vmatpush2.msra.mxu0 0.0
      %1118 = vmatprep.subr.mxu0 0.0
      %1119 = vmatpush2.msra.mxu0 0.0
      %1120 = vmatprep.subr.mxu0 0.0
      %1121 = vmatpush2.msra.mxu0 0.0
      %1122 = vmatprep.subr.mxu0 0.0
      %1123 = vmatpush2.msra.mxu0 0.0
      %1124 = vmatprep.subr.mxu0 0.0
      %1125 = vmatpush2.msra.mxu0 0.0
      %1126 = vmatprep.subr.mxu0 0.0
      %1127 = vmatpush2.msra.mxu0 0.0
      %1128 = vmatprep.subr.mxu0 0.0
      %1129 = vmatpush2.msra.mxu0 0.0
      %1130 = vmatprep.subr.mxu0 0.0
      %1131 = vmatpush2.msra.mxu0 0.0
      %1132 = vmatprep.subr.mxu0 0.0
      %1133 = vmatpush2.msra.mxu0 0.0
      %1134 = vmatprep.subr.mxu0 0.0
      %1135 = vmatpush2.msra.mxu0 0.0
      %1136 = vmatprep.subr.mxu0 0.0
      %1137 = vmatpush2.msra.mxu0 0.0
      %1138 = vmatprep.subr.mxu0 0.0
      %1139 = vmatpush2.msra.mxu0 0.0
      %1140 = vmatprep.subr.mxu0 0.0
      %1141 = vmatpush2.msra.mxu0 0.0
      %1142 = vmatprep.subr.mxu0 0.0
      %1143 = vmatpush2.msra.mxu0 0.0
      %1144 = vmatprep.subr.mxu0 0.0
      %1145 = vmatpush2.msra.mxu0 0.0
      %1146 = vmatprep.subr.mxu0 0.0
      %1147 = vmatpush2.msra.mxu0 0.0
      %1148 = vmatprep.mubr.f32.mxu0 0.0
      %1149 = vmatmul.mubr.f32.gmra.mxu0 %v1064
      %v1150 = vpop.f32.mrf.mxu0
      %v1151 = vadd.f32 0.0, %v1150
      %v1152 = vpop.f32.mrf.mxu0
      %1153 = vdwg.mxu0
      %1154 = vmatprep.subr.mxu0 0.0
      %1155 = vmatpush1.msra.mxu0 %v991
      %1156 = vmatprep.subr.mxu0 0.0
      %1157 = vmatpush1.msra.mxu0 %v990
      %1158 = vmatprep.subr.mxu0 0.0
      %1159 = vmatpush1.msra.mxu0 %v989
      %1160 = vmatprep.subr.mxu0 0.0
      %1161 = vmatpush1.msra.mxu0 %v988
      %1162 = vmatprep.subr.mxu0 0.0
      %1163 = vmatpush1.msra.mxu0 %v987
      %1164 = vmatprep.subr.mxu0 0.0
      %1165 = vmatpush1.msra.mxu0 %v986
      %1166 = vmatprep.subr.mxu0 0.0
      %1167 = vmatpush1.msra.mxu0 %v985
      %1168 = vmatprep.subr.mxu0 0.0
      %1169 = vmatpush1.msra.mxu0 %v984
      %1170 = vmatprep.subr.mxu0 0.0
      %1171 = vmatpush1.msra.mxu0 %v983
      %1172 = vmatprep.subr.mxu0 0.0
      %1173 = vmatpush1.msra.mxu0 %v982
      %1174 = vmatprep.subr.mxu0 0.0
      %1175 = vmatpush1.msra.mxu0 %v981
      %1176 = vmatprep.subr.mxu0 0.0
      %1177 = vmatpush1.msra.mxu0 %v980
      %1178 = vmatprep.subr.mxu0 0.0
      %1179 = vmatpush1.msra.mxu0 %v979
      %1180 = vmatprep.subr.mxu0 0.0
      %1181 = vmatpush1.msra.mxu0 %v978
      %1182 = vmatprep.subr.mxu0 0.0
      %1183 = vmatpush1.msra.mxu0 %v977
      %1184 = vmatprep.subr.mxu0 0.0
      %1185 = vmatpush1.msra.mxu0 %v976
      %1186 = vmatprep.subr.mxu0 0.0
      %1187 = vmatpush2.msra.mxu0 0.0
      %1188 = vmatprep.subr.mxu0 0.0
      %1189 = vmatpush2.msra.mxu0 0.0
      %1190 = vmatprep.subr.mxu0 0.0
      %1191 = vmatpush2.msra.mxu0 0.0
      %1192 = vmatprep.subr.mxu0 0.0
      %1193 = vmatpush2.msra.mxu0 0.0
      %1194 = vmatprep.subr.mxu0 0.0
      %1195 = vmatpush2.msra.mxu0 0.0
      %1196 = vmatprep.subr.mxu0 0.0
      %1197 = vmatpush2.msra.mxu0 0.0
      %1198 = vmatprep.subr.mxu0 0.0
      %1199 = vmatpush2.msra.mxu0 0.0
      %1200 = vmatprep.subr.mxu0 0.0
      %1201 = vmatpush2.msra.mxu0 0.0
      %1202 = vmatprep.subr.mxu0 0.0
      %1203 = vmatpush2.msra.mxu0 0.0
      %1204 = vmatprep.subr.mxu0 0.0
      %1205 = vmatpush2.msra.mxu0 0.0
      %1206 = vmatprep.subr.mxu0 0.0
      %1207 = vmatpush2.msra.mxu0 0.0
      %1208 = vmatprep.subr.mxu0 0.0
      %1209 = vmatpush2.msra.mxu0 0.0
      %1210 = vmatprep.subr.mxu0 0.0
      %1211 = vmatpush2.msra.mxu0 0.0
      %1212 = vmatprep.subr.mxu0 0.0
      %1213 = vmatpush2.msra.mxu0 0.0
      %1214 = vmatprep.subr.mxu0 0.0
      %1215 = vmatpush2.msra.mxu0 0.0
      %1216 = vmatprep.subr.mxu0 0.0
      %1217 = vmatpush2.msra.mxu0 0.0
      %1218 = vmatprep.mubr.f32.mxu0 0.0
      %1219 = vmatmul.mubr.f32.gmra.mxu0 %v973
      %v1220 = vpop.f32.mrf.mxu0
      %v1221 = vadd.f32 %v1151, %v1220
      %v1222 = vpop.f32.mrf.mxu0
      %1223 = vdwg.mxu0
      %s1224 = scalar_lea.vmem %s4, 16
      %v1225 = vld [vmem:[%s1224] sm:$0xff]
      %v1227 = vsel %vm364, %v1225, 0
      %1229 = vmatprep.subr.mxu0 0.0
      %1230 = vmatpush1.msra.mxu0 0.0
      %1231 = vmatprep.subr.mxu0 0.0
      %1232 = vmatpush1.msra.mxu0 0.0
      %1233 = vmatprep.subr.mxu0 0.0
      %1234 = vmatpush1.msra.mxu0 0.0
      %1235 = vmatprep.subr.mxu0 0.0
      %1236 = vmatpush1.msra.mxu0 0.0
      %1237 = vmatprep.subr.mxu0 0.0
      %1238 = vmatpush1.msra.mxu0 0.0
      %1239 = vmatprep.subr.mxu0 0.0
      %1240 = vmatpush1.msra.mxu0 0.0
      %1241 = vmatprep.subr.mxu0 0.0
      %1242 = vmatpush1.msra.mxu0 0.0
      %1243 = vmatprep.subr.mxu0 0.0
      %1244 = vmatpush1.msra.mxu0 0.0
      %1245 = vmatprep.subr.mxu0 0.0
      %1246 = vmatpush1.msra.mxu0 0.0
      %1247 = vmatprep.subr.mxu0 0.0
      %1248 = vmatpush1.msra.mxu0 0.0
      %1249 = vmatprep.subr.mxu0 0.0
      %1250 = vmatpush1.msra.mxu0 0.0
      %1251 = vmatprep.subr.mxu0 0.0
      %1252 = vmatpush1.msra.mxu0 0.0
      %1253 = vmatprep.subr.mxu0 0.0
      %1254 = vmatpush1.msra.mxu0 0.0
      %1255 = vmatprep.subr.mxu0 0.0
      %1256 = vmatpush1.msra.mxu0 0.0
      %1257 = vmatprep.subr.mxu0 0.0
      %1258 = vmatpush1.msra.mxu0 %v901
      %1259 = vmatprep.subr.mxu0 0.0
      %1260 = vmatpush1.msra.mxu0 %v900
      %1261 = vmatprep.subr.mxu0 0.0
      %1262 = vmatpush2.msra.mxu0 0.0
      %1263 = vmatprep.subr.mxu0 0.0
      %1264 = vmatpush2.msra.mxu0 0.0
      %1265 = vmatprep.subr.mxu0 0.0
      %1266 = vmatpush2.msra.mxu0 0.0
      %1267 = vmatprep.subr.mxu0 0.0
      %1268 = vmatpush2.msra.mxu0 0.0
      %1269 = vmatprep.subr.mxu0 0.0
      %1270 = vmatpush2.msra.mxu0 0.0
      %1271 = vmatprep.subr.mxu0 0.0
      %1272 = vmatpush2.msra.mxu0 0.0
      %1273 = vmatprep.subr.mxu0 0.0
      %1274 = vmatpush2.msra.mxu0 0.0
      %1275 = vmatprep.subr.mxu0 0.0
      %1276 = vmatpush2.msra.mxu0 0.0
      %1277 = vmatprep.subr.mxu0 0.0
      %1278 = vmatpush2.msra.mxu0 0.0
      %1279 = vmatprep.subr.mxu0 0.0
      %1280 = vmatpush2.msra.mxu0 0.0
      %1281 = vmatprep.subr.mxu0 0.0
      %1282 = vmatpush2.msra.mxu0 0.0
      %1283 = vmatprep.subr.mxu0 0.0
      %1284 = vmatpush2.msra.mxu0 0.0
      %1285 = vmatprep.subr.mxu0 0.0
      %1286 = vmatpush2.msra.mxu0 0.0
      %1287 = vmatprep.subr.mxu0 0.0
      %1288 = vmatpush2.msra.mxu0 0.0
      %1289 = vmatprep.subr.mxu0 0.0
      %1290 = vmatpush2.msra.mxu0 0.0
      %1291 = vmatprep.subr.mxu0 0.0
      %1292 = vmatpush2.msra.mxu0 0.0
      %1293 = vmatprep.mubr.f32.mxu0 0.0
      %1294 = vmatmul.mubr.f32.gmra.mxu0 %v1227
      %v1295 = vpop.f32.mrf.mxu0
      %v1296 = vadd.f32 0.0, %v1295
      %v1297 = vpop.f32.mrf.mxu0
      %1298 = vdwg.mxu0
      %s1299 = scalar_lea.vmem %s5, 256
      %v1300 = vld [vmem:[%s1299] sm:$0xff]
      %v1301 = vld [vmem:[%s1299 + $0x8] sm:$0xff]
      %v1302 = vld [vmem:[%s1299 + $0x10] sm:$0xff]
      %v1303 = vld [vmem:[%s1299 + $0x18] sm:$0xff]
      %v1304 = vld [vmem:[%s1299 + $0x20] sm:$0xff]
      %v1305 = vld [vmem:[%s1299 + $0x28] sm:$0xff]
      %v1306 = vld [vmem:[%s1299 + $0x30] sm:$0xff]
      %v1307 = vld [vmem:[%s1299 + $0x38] sm:$0xff]
      %v1308 = vld [vmem:[%s1299 + $0x40] sm:$0xff]
      %v1309 = vld [vmem:[%s1299 + $0x48] sm:$0xff]
      %v1310 = vld [vmem:[%s1299 + $0x50] sm:$0xff]
      %v1311 = vld [vmem:[%s1299 + $0x58] sm:$0xff]
      %v1312 = vld [vmem:[%s1299 + $0x60] sm:$0xff]
      %v1313 = vld [vmem:[%s1299 + $0x68] sm:$0xff]
      %v1314 = vld [vmem:[%s1299 + $0x70] sm:$0xff]
      %v1315 = vld [vmem:[%s1299 + $0x78] sm:$0xff]
      %1316 = vmatprep.subr.mxu0 0.0
      %1317 = vmatpush1.msra.mxu0 %v1315
      %1318 = vmatprep.subr.mxu0 0.0
      %1319 = vmatpush1.msra.mxu0 %v1314
      %1320 = vmatprep.subr.mxu0 0.0
      %1321 = vmatpush1.msra.mxu0 %v1313
      %1322 = vmatprep.subr.mxu0 0.0
      %1323 = vmatpush1.msra.mxu0 %v1312
      %1324 = vmatprep.subr.mxu0 0.0
      %1325 = vmatpush1.msra.mxu0 %v1311
      %1326 = vmatprep.subr.mxu0 0.0
      %1327 = vmatpush1.msra.mxu0 %v1310
      %1328 = vmatprep.subr.mxu0 0.0
      %1329 = vmatpush1.msra.mxu0 %v1309
      %1330 = vmatprep.subr.mxu0 0.0
      %1331 = vmatpush1.msra.mxu0 %v1308
      %1332 = vmatprep.subr.mxu0 0.0
      %1333 = vmatpush1.msra.mxu0 %v1307
      %1334 = vmatprep.subr.mxu0 0.0
      %1335 = vmatpush1.msra.mxu0 %v1306
      %1336 = vmatprep.subr.mxu0 0.0
      %1337 = vmatpush1.msra.mxu0 %v1305
      %1338 = vmatprep.subr.mxu0 0.0
      %1339 = vmatpush1.msra.mxu0 %v1304
      %1340 = vmatprep.subr.mxu0 0.0
      %1341 = vmatpush1.msra.mxu0 %v1303
      %1342 = vmatprep.subr.mxu0 0.0
      %1343 = vmatpush1.msra.mxu0 %v1302
      %1344 = vmatprep.subr.mxu0 0.0
      %1345 = vmatpush1.msra.mxu0 %v1301
      %1346 = vmatprep.subr.mxu0 0.0
      %1347 = vmatpush1.msra.mxu0 %v1300
      %1348 = vmatprep.subr.mxu0 0.0
      %1349 = vmatpush2.msra.mxu0 0.0
      %1350 = vmatprep.subr.mxu0 0.0
      %1351 = vmatpush2.msra.mxu0 0.0
      %1352 = vmatprep.subr.mxu0 0.0
      %1353 = vmatpush2.msra.mxu0 0.0
      %1354 = vmatprep.subr.mxu0 0.0
      %1355 = vmatpush2.msra.mxu0 0.0
      %1356 = vmatprep.subr.mxu0 0.0
      %1357 = vmatpush2.msra.mxu0 0.0
      %1358 = vmatprep.subr.mxu0 0.0
      %1359 = vmatpush2.msra.mxu0 0.0
      %1360 = vmatprep.subr.mxu0 0.0
      %1361 = vmatpush2.msra.mxu0 0.0
      %1362 = vmatprep.subr.mxu0 0.0
      %1363 = vmatpush2.msra.mxu0 0.0
      %1364 = vmatprep.subr.mxu0 0.0
      %1365 = vmatpush2.msra.mxu0 0.0
      %1366 = vmatprep.subr.mxu0 0.0
      %1367 = vmatpush2.msra.mxu0 0.0
      %1368 = vmatprep.subr.mxu0 0.0
      %1369 = vmatpush2.msra.mxu0 0.0
      %1370 = vmatprep.subr.mxu0 0.0
      %1371 = vmatpush2.msra.mxu0 0.0
      %1372 = vmatprep.subr.mxu0 0.0
      %1373 = vmatpush2.msra.mxu0 0.0
      %1374 = vmatprep.subr.mxu0 0.0
      %1375 = vmatpush2.msra.mxu0 0.0
      %1376 = vmatprep.subr.mxu0 0.0
      %1377 = vmatpush2.msra.mxu0 0.0
      %1378 = vmatprep.subr.mxu0 0.0
      %1379 = vmatpush2.msra.mxu0 0.0
      %1380 = vmatprep.mubr.f32.mxu0 0.0
      %1381 = vmatmul.mubr.f32.gmra.mxu0 %v1296
      %v1382 = vpop.f32.mrf.mxu0
      %v1383 = vadd.f32 0.0, %v1382
      %v1384 = vpop.f32.mrf.mxu0
      %1385 = vdwg.mxu0
      %v1386 = vadd.f32 %v1221, %v1383
      %s1387 = scalar_lea.vmem %s4, 24
      %v1388 = vld [vmem:[%s1387] sm:$0xff]
      %v1390 = vsel %vm364, %v1388, 0
      %1392 = vmatprep.subr.mxu0 0.0
      %1393 = vmatpush1.msra.mxu0 0.0
      %1394 = vmatprep.subr.mxu0 0.0
      %1395 = vmatpush1.msra.mxu0 0.0
      %1396 = vmatprep.subr.mxu0 0.0
      %1397 = vmatpush1.msra.mxu0 0.0
      %1398 = vmatprep.subr.mxu0 0.0
      %1399 = vmatpush1.msra.mxu0 0.0
      %1400 = vmatprep.subr.mxu0 0.0
      %1401 = vmatpush1.msra.mxu0 0.0
      %1402 = vmatprep.subr.mxu0 0.0
      %1403 = vmatpush1.msra.mxu0 0.0
      %1404 = vmatprep.subr.mxu0 0.0
      %1405 = vmatpush1.msra.mxu0 0.0
      %1406 = vmatprep.subr.mxu0 0.0
      %1407 = vmatpush1.msra.mxu0 0.0
      %1408 = vmatprep.subr.mxu0 0.0
      %1409 = vmatpush1.msra.mxu0 0.0
      %1410 = vmatprep.subr.mxu0 0.0
      %1411 = vmatpush1.msra.mxu0 0.0
      %1412 = vmatprep.subr.mxu0 0.0
      %1413 = vmatpush1.msra.mxu0 0.0
      %1414 = vmatprep.subr.mxu0 0.0
      %1415 = vmatpush1.msra.mxu0 0.0
      %1416 = vmatprep.subr.mxu0 0.0
      %1417 = vmatpush1.msra.mxu0 0.0
      %1418 = vmatprep.subr.mxu0 0.0
      %1419 = vmatpush1.msra.mxu0 0.0
      %1420 = vmatprep.subr.mxu0 0.0
      %1421 = vmatpush1.msra.mxu0 %v901
      %1422 = vmatprep.subr.mxu0 0.0
      %1423 = vmatpush1.msra.mxu0 %v900
      %1424 = vmatprep.subr.mxu0 0.0
      %1425 = vmatpush2.msra.mxu0 0.0
      %1426 = vmatprep.subr.mxu0 0.0
      %1427 = vmatpush2.msra.mxu0 0.0
      %1428 = vmatprep.subr.mxu0 0.0
      %1429 = vmatpush2.msra.mxu0 0.0
      %1430 = vmatprep.subr.mxu0 0.0
      %1431 = vmatpush2.msra.mxu0 0.0
      %1432 = vmatprep.subr.mxu0 0.0
      %1433 = vmatpush2.msra.mxu0 0.0
      %1434 = vmatprep.subr.mxu0 0.0
      %1435 = vmatpush2.msra.mxu0 0.0
      %1436 = vmatprep.subr.mxu0 0.0
      %1437 = vmatpush2.msra.mxu0 0.0
      %1438 = vmatprep.subr.mxu0 0.0
      %1439 = vmatpush2.msra.mxu0 0.0
      %1440 = vmatprep.subr.mxu0 0.0
      %1441 = vmatpush2.msra.mxu0 0.0
      %1442 = vmatprep.subr.mxu0 0.0
      %1443 = vmatpush2.msra.mxu0 0.0
      %1444 = vmatprep.subr.mxu0 0.0
      %1445 = vmatpush2.msra.mxu0 0.0
      %1446 = vmatprep.subr.mxu0 0.0
      %1447 = vmatpush2.msra.mxu0 0.0
      %1448 = vmatprep.subr.mxu0 0.0
      %1449 = vmatpush2.msra.mxu0 0.0
      %1450 = vmatprep.subr.mxu0 0.0
      %1451 = vmatpush2.msra.mxu0 0.0
      %1452 = vmatprep.subr.mxu0 0.0
      %1453 = vmatpush2.msra.mxu0 0.0
      %1454 = vmatprep.subr.mxu0 0.0
      %1455 = vmatpush2.msra.mxu0 0.0
      %1456 = vmatprep.mubr.f32.mxu0 0.0
      %1457 = vmatmul.mubr.f32.gmra.mxu0 %v1390
      %v1458 = vpop.f32.mrf.mxu0
      %v1459 = vadd.f32 0.0, %v1458
      %v1460 = vpop.f32.mrf.mxu0
      %1461 = vdwg.mxu0
      %s1462 = scalar_lea.vmem %s5, 384
      %v1463 = vld [vmem:[%s1462] sm:$0xff]
      %v1464 = vld [vmem:[%s1462 + $0x8] sm:$0xff]
      %v1465 = vld [vmem:[%s1462 + $0x10] sm:$0xff]
      %v1466 = vld [vmem:[%s1462 + $0x18] sm:$0xff]
      %v1467 = vld [vmem:[%s1462 + $0x20] sm:$0xff]
      %v1468 = vld [vmem:[%s1462 + $0x28] sm:$0xff]
      %v1469 = vld [vmem:[%s1462 + $0x30] sm:$0xff]
      %v1470 = vld [vmem:[%s1462 + $0x38] sm:$0xff]
      %v1471 = vld [vmem:[%s1462 + $0x40] sm:$0xff]
      %v1472 = vld [vmem:[%s1462 + $0x48] sm:$0xff]
      %v1473 = vld [vmem:[%s1462 + $0x50] sm:$0xff]
      %v1474 = vld [vmem:[%s1462 + $0x58] sm:$0xff]
      %v1475 = vld [vmem:[%s1462 + $0x60] sm:$0xff]
      %v1476 = vld [vmem:[%s1462 + $0x68] sm:$0xff]
      %v1477 = vld [vmem:[%s1462 + $0x70] sm:$0xff]
      %v1478 = vld [vmem:[%s1462 + $0x78] sm:$0xff]
      %1479 = vmatprep.subr.mxu0 0.0
      %1480 = vmatpush1.msra.mxu0 %v1478
      %1481 = vmatprep.subr.mxu0 0.0
      %1482 = vmatpush1.msra.mxu0 %v1477
      %1483 = vmatprep.subr.mxu0 0.0
      %1484 = vmatpush1.msra.mxu0 %v1476
      %1485 = vmatprep.subr.mxu0 0.0
      %1486 = vmatpush1.msra.mxu0 %v1475
      %1487 = vmatprep.subr.mxu0 0.0
      %1488 = vmatpush1.msra.mxu0 %v1474
      %1489 = vmatprep.subr.mxu0 0.0
      %1490 = vmatpush1.msra.mxu0 %v1473
      %1491 = vmatprep.subr.mxu0 0.0
      %1492 = vmatpush1.msra.mxu0 %v1472
      %1493 = vmatprep.subr.mxu0 0.0
      %1494 = vmatpush1.msra.mxu0 %v1471
      %1495 = vmatprep.subr.mxu0 0.0
      %1496 = vmatpush1.msra.mxu0 %v1470
      %1497 = vmatprep.subr.mxu0 0.0
      %1498 = vmatpush1.msra.mxu0 %v1469
      %1499 = vmatprep.subr.mxu0 0.0
      %1500 = vmatpush1.msra.mxu0 %v1468
      %1501 = vmatprep.subr.mxu0 0.0
      %1502 = vmatpush1.msra.mxu0 %v1467
      %1503 = vmatprep.subr.mxu0 0.0
      %1504 = vmatpush1.msra.mxu0 %v1466
      %1505 = vmatprep.subr.mxu0 0.0
      %1506 = vmatpush1.msra.mxu0 %v1465
      %1507 = vmatprep.subr.mxu0 0.0
      %1508 = vmatpush1.msra.mxu0 %v1464
      %1509 = vmatprep.subr.mxu0 0.0
      %1510 = vmatpush1.msra.mxu0 %v1463
      %1511 = vmatprep.subr.mxu0 0.0
      %1512 = vmatpush2.msra.mxu0 0.0
      %1513 = vmatprep.subr.mxu0 0.0
      %1514 = vmatpush2.msra.mxu0 0.0
      %1515 = vmatprep.subr.mxu0 0.0
      %1516 = vmatpush2.msra.mxu0 0.0
      %1517 = vmatprep.subr.mxu0 0.0
      %1518 = vmatpush2.msra.mxu0 0.0
      %1519 = vmatprep.subr.mxu0 0.0
      %1520 = vmatpush2.msra.mxu0 0.0
      %1521 = vmatprep.subr.mxu0 0.0
      %1522 = vmatpush2.msra.mxu0 0.0
      %1523 = vmatprep.subr.mxu0 0.0
      %1524 = vmatpush2.msra.mxu0 0.0
      %1525 = vmatprep.subr.mxu0 0.0
      %1526 = vmatpush2.msra.mxu0 0.0
      %1527 = vmatprep.subr.mxu0 0.0
      %1528 = vmatpush2.msra.mxu0 0.0
      %1529 = vmatprep.subr.mxu0 0.0
      %1530 = vmatpush2.msra.mxu0 0.0
      %1531 = vmatprep.subr.mxu0 0.0
      %1532 = vmatpush2.msra.mxu0 0.0
      %1533 = vmatprep.subr.mxu0 0.0
      %1534 = vmatpush2.msra.mxu0 0.0
      %1535 = vmatprep.subr.mxu0 0.0
      %1536 = vmatpush2.msra.mxu0 0.0
      %1537 = vmatprep.subr.mxu0 0.0
      %1538 = vmatpush2.msra.mxu0 0.0
      %1539 = vmatprep.subr.mxu0 0.0
      %1540 = vmatpush2.msra.mxu0 0.0
      %1541 = vmatprep.subr.mxu0 0.0
      %1542 = vmatpush2.msra.mxu0 0.0
      %1543 = vmatprep.mubr.f32.mxu0 0.0
      %1544 = vmatmul.mubr.f32.gmra.mxu0 %v1459
      %v1545 = vpop.f32.mrf.mxu0
      %v1546 = vadd.f32 0.0, %v1545
      %v1547 = vpop.f32.mrf.mxu0
      %1548 = vdwg.mxu0
      %v1549 = vadd.f32 %v1386, %v1546
      %s1550 = scalar_lea.vmem %s4, 32
      %v1551 = vld [vmem:[%s1550] sm:$0xff]
      %v1553 = vsel %vm364, %v1551, 0
      %1555 = vmatprep.subr.mxu0 0.0
      %1556 = vmatpush1.msra.mxu0 0.0
      %1557 = vmatprep.subr.mxu0 0.0
      %1558 = vmatpush1.msra.mxu0 0.0
      %1559 = vmatprep.subr.mxu0 0.0
      %1560 = vmatpush1.msra.mxu0 0.0
      %1561 = vmatprep.subr.mxu0 0.0
      %1562 = vmatpush1.msra.mxu0 0.0
      %1563 = vmatprep.subr.mxu0 0.0
      %1564 = vmatpush1.msra.mxu0 0.0
      %1565 = vmatprep.subr.mxu0 0.0
      %1566 = vmatpush1.msra.mxu0 0.0
      %1567 = vmatprep.subr.mxu0 0.0
      %1568 = vmatpush1.msra.mxu0 0.0
      %1569 = vmatprep.subr.mxu0 0.0
      %1570 = vmatpush1.msra.mxu0 0.0
      %1571 = vmatprep.subr.mxu0 0.0
      %1572 = vmatpush1.msra.mxu0 0.0
      %1573 = vmatprep.subr.mxu0 0.0
      %1574 = vmatpush1.msra.mxu0 0.0
      %1575 = vmatprep.subr.mxu0 0.0
      %1576 = vmatpush1.msra.mxu0 0.0
      %1577 = vmatprep.subr.mxu0 0.0
      %1578 = vmatpush1.msra.mxu0 0.0
      %1579 = vmatprep.subr.mxu0 0.0
      %1580 = vmatpush1.msra.mxu0 0.0
      %1581 = vmatprep.subr.mxu0 0.0
      %1582 = vmatpush1.msra.mxu0 0.0
      %1583 = vmatprep.subr.mxu0 0.0
      %1584 = vmatpush1.msra.mxu0 %v901
      %1585 = vmatprep.subr.mxu0 0.0
      %1586 = vmatpush1.msra.mxu0 %v900
      %1587 = vmatprep.subr.mxu0 0.0
      %1588 = vmatpush2.msra.mxu0 0.0
      %1589 = vmatprep.subr.mxu0 0.0
      %1590 = vmatpush2.msra.mxu0 0.0
      %1591 = vmatprep.subr.mxu0 0.0
      %1592 = vmatpush2.msra.mxu0 0.0
      %1593 = vmatprep.subr.mxu0 0.0
      %1594 = vmatpush2.msra.mxu0 0.0
      %1595 = vmatprep.subr.mxu0 0.0
      %1596 = vmatpush2.msra.mxu0 0.0
      %1597 = vmatprep.subr.mxu0 0.0
      %1598 = vmatpush2.msra.mxu0 0.0
      %1599 = vmatprep.subr.mxu0 0.0
      %1600 = vmatpush2.msra.mxu0 0.0
      %1601 = vmatprep.subr.mxu0 0.0
      %1602 = vmatpush2.msra.mxu0 0.0
      %1603 = vmatprep.subr.mxu0 0.0
      %1604 = vmatpush2.msra.mxu0 0.0
      %1605 = vmatprep.subr.mxu0 0.0
      %1606 = vmatpush2.msra.mxu0 0.0
      %1607 = vmatprep.subr.mxu0 0.0
      %1608 = vmatpush2.msra.mxu0 0.0
      %1609 = vmatprep.subr.mxu0 0.0
      %1610 = vmatpush2.msra.mxu0 0.0
      %1611 = vmatprep.subr.mxu0 0.0
      %1612 = vmatpush2.msra.mxu0 0.0
      %1613 = vmatprep.subr.mxu0 0.0
      %1614 = vmatpush2.msra.mxu0 0.0
      %1615 = vmatprep.subr.mxu0 0.0
      %1616 = vmatpush2.msra.mxu0 0.0
      %1617 = vmatprep.subr.mxu0 0.0
      %1618 = vmatpush2.msra.mxu0 0.0
      %1619 = vmatprep.mubr.f32.mxu0 0.0
      %1620 = vmatmul.mubr.f32.gmra.mxu0 %v1553
      %v1621 = vpop.f32.mrf.mxu0
      %v1622 = vadd.f32 0.0, %v1621
      %v1623 = vpop.f32.mrf.mxu0
      %1624 = vdwg.mxu0
      %s1625 = scalar_lea.vmem %s5, 512
      %v1626 = vld [vmem:[%s1625] sm:$0xff]
      %v1627 = vld [vmem:[%s1625 + $0x8] sm:$0xff]
      %v1628 = vld [vmem:[%s1625 + $0x10] sm:$0xff]
      %v1629 = vld [vmem:[%s1625 + $0x18] sm:$0xff]
      %v1630 = vld [vmem:[%s1625 + $0x20] sm:$0xff]
      %v1631 = vld [vmem:[%s1625 + $0x28] sm:$0xff]
      %v1632 = vld [vmem:[%s1625 + $0x30] sm:$0xff]
      %v1633 = vld [vmem:[%s1625 + $0x38] sm:$0xff]
      %v1634 = vld [vmem:[%s1625 + $0x40] sm:$0xff]
      %v1635 = vld [vmem:[%s1625 + $0x48] sm:$0xff]
      %v1636 = vld [vmem:[%s1625 + $0x50] sm:$0xff]
      %v1637 = vld [vmem:[%s1625 + $0x58] sm:$0xff]
      %v1638 = vld [vmem:[%s1625 + $0x60] sm:$0xff]
      %v1639 = vld [vmem:[%s1625 + $0x68] sm:$0xff]
      %v1640 = vld [vmem:[%s1625 + $0x70] sm:$0xff]
      %v1641 = vld [vmem:[%s1625 + $0x78] sm:$0xff]
      %1642 = vmatprep.subr.mxu0 0.0
      %1643 = vmatpush1.msra.mxu0 %v1641
      %1644 = vmatprep.subr.mxu0 0.0
      %1645 = vmatpush1.msra.mxu0 %v1640
      %1646 = vmatprep.subr.mxu0 0.0
      %1647 = vmatpush1.msra.mxu0 %v1639
      %1648 = vmatprep.subr.mxu0 0.0
      %1649 = vmatpush1.msra.mxu0 %v1638
      %1650 = vmatprep.subr.mxu0 0.0
      %1651 = vmatpush1.msra.mxu0 %v1637
      %1652 = vmatprep.subr.mxu0 0.0
      %1653 = vmatpush1.msra.mxu0 %v1636
      %1654 = vmatprep.subr.mxu0 0.0
      %1655 = vmatpush1.msra.mxu0 %v1635
      %1656 = vmatprep.subr.mxu0 0.0
      %1657 = vmatpush1.msra.mxu0 %v1634
      %1658 = vmatprep.subr.mxu0 0.0
      %1659 = vmatpush1.msra.mxu0 %v1633
      %1660 = vmatprep.subr.mxu0 0.0
      %1661 = vmatpush1.msra.mxu0 %v1632
      %1662 = vmatprep.subr.mxu0 0.0
      %1663 = vmatpush1.msra.mxu0 %v1631
      %1664 = vmatprep.subr.mxu0 0.0
      %1665 = vmatpush1.msra.mxu0 %v1630
      %1666 = vmatprep.subr.mxu0 0.0
      %1667 = vmatpush1.msra.mxu0 %v1629
      %1668 = vmatprep.subr.mxu0 0.0
      %1669 = vmatpush1.msra.mxu0 %v1628
      %1670 = vmatprep.subr.mxu0 0.0
      %1671 = vmatpush1.msra.mxu0 %v1627
      %1672 = vmatprep.subr.mxu0 0.0
      %1673 = vmatpush1.msra.mxu0 %v1626
      %1674 = vmatprep.subr.mxu0 0.0
      %1675 = vmatpush2.msra.mxu0 0.0
      %1676 = vmatprep.subr.mxu0 0.0
      %1677 = vmatpush2.msra.mxu0 0.0
      %1678 = vmatprep.subr.mxu0 0.0
      %1679 = vmatpush2.msra.mxu0 0.0
      %1680 = vmatprep.subr.mxu0 0.0
      %1681 = vmatpush2.msra.mxu0 0.0
      %1682 = vmatprep.subr.mxu0 0.0
      %1683 = vmatpush2.msra.mxu0 0.0
      %1684 = vmatprep.subr.mxu0 0.0
      %1685 = vmatpush2.msra.mxu0 0.0
      %1686 = vmatprep.subr.mxu0 0.0
      %1687 = vmatpush2.msra.mxu0 0.0
      %1688 = vmatprep.subr.mxu0 0.0
      %1689 = vmatpush2.msra.mxu0 0.0
      %1690 = vmatprep.subr.mxu0 0.0
      %1691 = vmatpush2.msra.mxu0 0.0
      %1692 = vmatprep.subr.mxu0 0.0
      %1693 = vmatpush2.msra.mxu0 0.0
      %1694 = vmatprep.subr.mxu0 0.0
      %1695 = vmatpush2.msra.mxu0 0.0
      %1696 = vmatprep.subr.mxu0 0.0
      %1697 = vmatpush2.msra.mxu0 0.0
      %1698 = vmatprep.subr.mxu0 0.0
      %1699 = vmatpush2.msra.mxu0 0.0
      %1700 = vmatprep.subr.mxu0 0.0
      %1701 = vmatpush2.msra.mxu0 0.0
      %1702 = vmatprep.subr.mxu0 0.0
      %1703 = vmatpush2.msra.mxu0 0.0
      %1704 = vmatprep.subr.mxu0 0.0
      %1705 = vmatpush2.msra.mxu0 0.0
      %1706 = vmatprep.mubr.f32.mxu0 0.0
      %1707 = vmatmul.mubr.f32.gmra.mxu0 %v1622
      %v1708 = vpop.f32.mrf.mxu0
      %v1709 = vadd.f32 0.0, %v1708
      %v1710 = vpop.f32.mrf.mxu0
      %1711 = vdwg.mxu0
      %v1712 = vadd.f32 %v1549, %v1709
      %v1713 = vld [vmem:[%s6] sm:$0x1]
      %v1715 = vlaneseq
      %v1716 = vshrl.u32 %v1715, 7
      %v1717 = vsub.s32 0, %v1716
      %v1718 = vrot.slane %v1713, %v1717
      %v1720 = vadd.f32 %v1712, %v1718
      %v1721 = vmax.f32 %v1720, 0.0
      %v1722 = vld [vmem:[%s7] sm:$0xf]
      %vm1723 = vcmask 64512
      %v1725 = vsel %vm1723, %v1722, 0
      %1727 = vmatprep.subr.mxu0 0.0
      %1728 = vmatpush1.msra.mxu0 0.0
      %1729 = vmatprep.subr.mxu0 0.0
      %1730 = vmatpush1.msra.mxu0 0.0
      %1731 = vmatprep.subr.mxu0 0.0
      %1732 = vmatpush1.msra.mxu0 0.0
      %1733 = vmatprep.subr.mxu0 0.0
      %1734 = vmatpush1.msra.mxu0 0.0
      %1735 = vmatprep.subr.mxu0 0.0
      %1736 = vmatpush1.msra.mxu0 0.0
      %1737 = vmatprep.subr.mxu0 0.0
      %1738 = vmatpush1.msra.mxu0 0.0
      %1739 = vmatprep.subr.mxu0 0.0
      %1740 = vmatpush1.msra.mxu0 0.0
      %1741 = vmatprep.subr.mxu0 0.0
      %1742 = vmatpush1.msra.mxu0 0.0
      %1743 = vmatprep.subr.mxu0 0.0
      %1744 = vmatpush1.msra.mxu0 0.0
      %1745 = vmatprep.subr.mxu0 0.0
      %1746 = vmatpush1.msra.mxu0 0.0
      %1747 = vmatprep.subr.mxu0 0.0
      %1748 = vmatpush1.msra.mxu0 0.0
      %1749 = vmatprep.subr.mxu0 0.0
      %1750 = vmatpush1.msra.mxu0 0.0
      %1751 = vmatprep.subr.mxu0 0.0
      %1752 = vmatpush1.msra.mxu0 0.0
      %1753 = vmatprep.subr.mxu0 0.0
      %1754 = vmatpush1.msra.mxu0 0.0
      %1755 = vmatprep.subr.mxu0 0.0
      %1756 = vmatpush1.msra.mxu0 0.0
      %1757 = vmatprep.subr.mxu0 0.0
      %1758 = vmatpush1.msra.mxu0 %v1721
      %1759 = vmatprep.subr.mxu0 0.0
      %1760 = vmatpush2.msra.mxu0 0.0
      %1761 = vmatprep.subr.mxu0 0.0
      %1762 = vmatpush2.msra.mxu0 0.0
      %1763 = vmatprep.subr.mxu0 0.0
      %1764 = vmatpush2.msra.mxu0 0.0
      %1765 = vmatprep.subr.mxu0 0.0
      %1766 = vmatpush2.msra.mxu0 0.0
      %1767 = vmatprep.subr.mxu0 0.0
      %1768 = vmatpush2.msra.mxu0 0.0
      %1769 = vmatprep.subr.mxu0 0.0
      %1770 = vmatpush2.msra.mxu0 0.0
      %1771 = vmatprep.subr.mxu0 0.0
      %1772 = vmatpush2.msra.mxu0 0.0
      %1773 = vmatprep.subr.mxu0 0.0
      %1774 = vmatpush2.msra.mxu0 0.0
      %1775 = vmatprep.subr.mxu0 0.0
      %1776 = vmatpush2.msra.mxu0 0.0
      %1777 = vmatprep.subr.mxu0 0.0
      %1778 = vmatpush2.msra.mxu0 0.0
      %1779 = vmatprep.subr.mxu0 0.0
      %1780 = vmatpush2.msra.mxu0 0.0
      %1781 = vmatprep.subr.mxu0 0.0
      %1782 = vmatpush2.msra.mxu0 0.0
      %1783 = vmatprep.subr.mxu0 0.0
      %1784 = vmatpush2.msra.mxu0 0.0
      %1785 = vmatprep.subr.mxu0 0.0
      %1786 = vmatpush2.msra.mxu0 0.0
      %1787 = vmatprep.subr.mxu0 0.0
      %1788 = vmatpush2.msra.mxu0 0.0
      %1789 = vmatprep.subr.mxu0 0.0
      %1790 = vmatpush2.msra.mxu0 0.0
      %1791 = vmatprep.mubr.f32.mxu0 0.0
      %1792 = vmatmul.mubr.f32.gmra.mxu0 %v1725
      %v1793 = vpop.f32.mrf.mxu0
      %v1794 = vadd.f32 0.0, %v1793
      %v1795 = vpop.f32.mrf.mxu0
      %1796 = vdwg.mxu0
      %v1797 = vld [vmem:[%s8] sm:$0xff]
      %v1798 = vld [vmem:[%s8 + $0x8] sm:$0xff]
      %v1799 = vld [vmem:[%s8 + $0x10] sm:$0xff]
      %v1800 = vld [vmem:[%s8 + $0x18] sm:$0xff]
      %v1801 = vld [vmem:[%s8 + $0x20] sm:$0xff]
      %v1802 = vld [vmem:[%s8 + $0x28] sm:$0xff]
      %v1803 = vld [vmem:[%s8 + $0x30] sm:$0xff]
      %v1804 = vld [vmem:[%s8 + $0x38] sm:$0xff]
      %s1805 = scalar_lea.vmem %s7, 4
      %v1806 = vld [vmem:[%s1805] sm:$0xf]
      %v1808 = vsel %vm1723, %v1806, 0
      %1810 = vmatprep.subr.mxu0 0.0
      %1811 = vmatpush1.msra.mxu0 0.0
      %1812 = vmatprep.subr.mxu0 0.0
      %1813 = vmatpush1.msra.mxu0 0.0
      %1814 = vmatprep.subr.mxu0 0.0
      %1815 = vmatpush1.msra.mxu0 0.0
      %1816 = vmatprep.subr.mxu0 0.0
      %1817 = vmatpush1.msra.mxu0 0.0
      %1818 = vmatprep.subr.mxu0 0.0
      %1819 = vmatpush1.msra.mxu0 0.0
      %1820 = vmatprep.subr.mxu0 0.0
      %1821 = vmatpush1.msra.mxu0 0.0
      %1822 = vmatprep.subr.mxu0 0.0
      %1823 = vmatpush1.msra.mxu0 0.0
      %1824 = vmatprep.subr.mxu0 0.0
      %1825 = vmatpush1.msra.mxu0 0.0
      %1826 = vmatprep.subr.mxu0 0.0
      %1827 = vmatpush1.msra.mxu0 0.0
      %1828 = vmatprep.subr.mxu0 0.0
      %1829 = vmatpush1.msra.mxu0 0.0
      %1830 = vmatprep.subr.mxu0 0.0
      %1831 = vmatpush1.msra.mxu0 0.0
      %1832 = vmatprep.subr.mxu0 0.0
      %1833 = vmatpush1.msra.mxu0 0.0
      %1834 = vmatprep.subr.mxu0 0.0
      %1835 = vmatpush1.msra.mxu0 0.0
      %1836 = vmatprep.subr.mxu0 0.0
      %1837 = vmatpush1.msra.mxu0 0.0
      %1838 = vmatprep.subr.mxu0 0.0
      %1839 = vmatpush1.msra.mxu0 0.0
      %1840 = vmatprep.subr.mxu0 0.0
      %1841 = vmatpush1.msra.mxu0 %v1721
      %1842 = vmatprep.subr.mxu0 0.0
      %1843 = vmatpush2.msra.mxu0 0.0
      %1844 = vmatprep.subr.mxu0 0.0
      %1845 = vmatpush2.msra.mxu0 0.0
      %1846 = vmatprep.subr.mxu0 0.0
      %1847 = vmatpush2.msra.mxu0 0.0
      %1848 = vmatprep.subr.mxu0 0.0
      %1849 = vmatpush2.msra.mxu0 0.0
      %1850 = vmatprep.subr.mxu0 0.0
      %1851 = vmatpush2.msra.mxu0 0.0
      %1852 = vmatprep.subr.mxu0 0.0
      %1853 = vmatpush2.msra.mxu0 0.0
      %1854 = vmatprep.subr.mxu0 0.0
      %1855 = vmatpush2.msra.mxu0 0.0
      %1856 = vmatprep.subr.mxu0 0.0
      %1857 = vmatpush2.msra.mxu0 0.0
      %1858 = vmatprep.subr.mxu0 0.0
      %1859 = vmatpush2.msra.mxu0 0.0
      %1860 = vmatprep.subr.mxu0 0.0
      %1861 = vmatpush2.msra.mxu0 0.0
      %1862 = vmatprep.subr.mxu0 0.0
      %1863 = vmatpush2.msra.mxu0 0.0
      %1864 = vmatprep.subr.mxu0 0.0
      %1865 = vmatpush2.msra.mxu0 0.0
      %1866 = vmatprep.subr.mxu0 0.0
      %1867 = vmatpush2.msra.mxu0 0.0
      %1868 = vmatprep.subr.mxu0 0.0
      %1869 = vmatpush2.msra.mxu0 0.0
      %1870 = vmatprep.subr.mxu0 0.0
      %1871 = vmatpush2.msra.mxu0 0.0
      %1872 = vmatprep.subr.mxu0 0.0
      %1873 = vmatpush2.msra.mxu0 0.0
      %1874 = vmatprep.mubr.f32.mxu0 0.0
      %1875 = vmatmul.mubr.f32.gmra.mxu0 %v1808
      %v1876 = vpop.f32.mrf.mxu0
      %v1877 = vadd.f32 0.0, %v1876
      %v1878 = vpop.f32.mrf.mxu0
      %1879 = vdwg.mxu0
      %s1880 = scalar_lea.vmem %s8, 64
      %v1881 = vld [vmem:[%s1880] sm:$0xff]
      %v1882 = vld [vmem:[%s1880 + $0x8] sm:$0xff]
      %v1883 = vld [vmem:[%s1880 + $0x10] sm:$0xff]
      %v1884 = vld [vmem:[%s1880 + $0x18] sm:$0xff]
      %v1885 = vld [vmem:[%s1880 + $0x20] sm:$0xff]
      %v1886 = vld [vmem:[%s1880 + $0x28] sm:$0xff]
      %v1887 = vld [vmem:[%s1880 + $0x30] sm:$0xff]
      %v1888 = vld [vmem:[%s1880 + $0x38] sm:$0xff]
      %vm1889 = vcmask 523264
      %v1891 = vsel %vm1889, %v1877, 0
      %1893 = vmatprep.subr.mxu0 0.0
      %1894 = vmatpush1.msra.mxu0 0.0
      %1895 = vmatprep.subr.mxu0 0.0
      %1896 = vmatpush1.msra.mxu0 0.0
      %1897 = vmatprep.subr.mxu0 0.0
      %1898 = vmatpush1.msra.mxu0 0.0
      %1899 = vmatprep.subr.mxu0 0.0
      %1900 = vmatpush1.msra.mxu0 0.0
      %1901 = vmatprep.subr.mxu0 0.0
      %1902 = vmatpush1.msra.mxu0 0.0
      %1903 = vmatprep.subr.mxu0 0.0
      %1904 = vmatpush1.msra.mxu0 0.0
      %1905 = vmatprep.subr.mxu0 0.0
      %1906 = vmatpush1.msra.mxu0 0.0
      %1907 = vmatprep.subr.mxu0 0.0
      %1908 = vmatpush1.msra.mxu0 0.0
      %1909 = vmatprep.subr.mxu0 0.0
      %1910 = vmatpush1.msra.mxu0 %v1888
      %1911 = vmatprep.subr.mxu0 0.0
      %1912 = vmatpush1.msra.mxu0 %v1887
      %1913 = vmatprep.subr.mxu0 0.0
      %1914 = vmatpush1.msra.mxu0 %v1886
      %1915 = vmatprep.subr.mxu0 0.0
      %1916 = vmatpush1.msra.mxu0 %v1885
      %1917 = vmatprep.subr.mxu0 0.0
      %1918 = vmatpush1.msra.mxu0 %v1884
      %1919 = vmatprep.subr.mxu0 0.0
      %1920 = vmatpush1.msra.mxu0 %v1883
      %1921 = vmatprep.subr.mxu0 0.0
      %1922 = vmatpush1.msra.mxu0 %v1882
      %1923 = vmatprep.subr.mxu0 0.0
      %1924 = vmatpush1.msra.mxu0 %v1881
      %1925 = vmatprep.subr.mxu0 0.0
      %1926 = vmatpush2.msra.mxu0 0.0
      %1927 = vmatprep.subr.mxu0 0.0
      %1928 = vmatpush2.msra.mxu0 0.0
      %1929 = vmatprep.subr.mxu0 0.0
      %1930 = vmatpush2.msra.mxu0 0.0
      %1931 = vmatprep.subr.mxu0 0.0
      %1932 = vmatpush2.msra.mxu0 0.0
      %1933 = vmatprep.subr.mxu0 0.0
      %1934 = vmatpush2.msra.mxu0 0.0
      %1935 = vmatprep.subr.mxu0 0.0
      %1936 = vmatpush2.msra.mxu0 0.0
      %1937 = vmatprep.subr.mxu0 0.0
      %1938 = vmatpush2.msra.mxu0 0.0
      %1939 = vmatprep.subr.mxu0 0.0
      %1940 = vmatpush2.msra.mxu0 0.0
      %1941 = vmatprep.subr.mxu0 0.0
      %1942 = vmatpush2.msra.mxu0 0.0
      %1943 = vmatprep.subr.mxu0 0.0
      %1944 = vmatpush2.msra.mxu0 0.0
      %1945 = vmatprep.subr.mxu0 0.0
      %1946 = vmatpush2.msra.mxu0 0.0
      %1947 = vmatprep.subr.mxu0 0.0
      %1948 = vmatpush2.msra.mxu0 0.0
      %1949 = vmatprep.subr.mxu0 0.0
      %1950 = vmatpush2.msra.mxu0 0.0
      %1951 = vmatprep.subr.mxu0 0.0
      %1952 = vmatpush2.msra.mxu0 0.0
      %1953 = vmatprep.subr.mxu0 0.0
      %1954 = vmatpush2.msra.mxu0 0.0
      %1955 = vmatprep.subr.mxu0 0.0
      %1956 = vmatpush2.msra.mxu0 0.0
      %1957 = vmatprep.mubr.f32.mxu0 0.0
      %1958 = vmatmul.mubr.f32.gmra.mxu0 %v1891
      %v1959 = vpop.f32.mrf.mxu0
      %v1960 = vadd.f32 0.0, %v1959
      %v1961 = vpop.f32.mrf.mxu0
      %1962 = vdwg.mxu0
      %v1964 = vsel %vm1889, %v1794, 0
      %1966 = vmatprep.subr.mxu0 0.0
      %1967 = vmatpush1.msra.mxu0 0.0
      %1968 = vmatprep.subr.mxu0 0.0
      %1969 = vmatpush1.msra.mxu0 0.0
      %1970 = vmatprep.subr.mxu0 0.0
      %1971 = vmatpush1.msra.mxu0 0.0
      %1972 = vmatprep.subr.mxu0 0.0
      %1973 = vmatpush1.msra.mxu0 0.0
      %1974 = vmatprep.subr.mxu0 0.0
      %1975 = vmatpush1.msra.mxu0 0.0
      %1976 = vmatprep.subr.mxu0 0.0
      %1977 = vmatpush1.msra.mxu0 0.0
      %1978 = vmatprep.subr.mxu0 0.0
      %1979 = vmatpush1.msra.mxu0 0.0
      %1980 = vmatprep.subr.mxu0 0.0
      %1981 = vmatpush1.msra.mxu0 0.0
      %1982 = vmatprep.subr.mxu0 0.0
      %1983 = vmatpush1.msra.mxu0 %v1804
      %1984 = vmatprep.subr.mxu0 0.0
      %1985 = vmatpush1.msra.mxu0 %v1803
      %1986 = vmatprep.subr.mxu0 0.0
      %1987 = vmatpush1.msra.mxu0 %v1802
      %1988 = vmatprep.subr.mxu0 0.0
      %1989 = vmatpush1.msra.mxu0 %v1801
      %1990 = vmatprep.subr.mxu0 0.0
      %1991 = vmatpush1.msra.mxu0 %v1800
      %1992 = vmatprep.subr.mxu0 0.0
      %1993 = vmatpush1.msra.mxu0 %v1799
      %1994 = vmatprep.subr.mxu0 0.0
      %1995 = vmatpush1.msra.mxu0 %v1798
      %1996 = vmatprep.subr.mxu0 0.0
      %1997 = vmatpush1.msra.mxu0 %v1797
      %1998 = vmatprep.subr.mxu0 0.0
      %1999 = vmatpush2.msra.mxu0 0.0
      %2000 = vmatprep.subr.mxu0 0.0
      %2001 = vmatpush2.msra.mxu0 0.0
      %2002 = vmatprep.subr.mxu0 0.0
      %2003 = vmatpush2.msra.mxu0 0.0
      %2004 = vmatprep.subr.mxu0 0.0
      %2005 = vmatpush2.msra.mxu0 0.0
      %2006 = vmatprep.subr.mxu0 0.0
      %2007 = vmatpush2.msra.mxu0 0.0
      %2008 = vmatprep.subr.mxu0 0.0
      %2009 = vmatpush2.msra.mxu0 0.0
      %2010 = vmatprep.subr.mxu0 0.0
      %2011 = vmatpush2.msra.mxu0 0.0
      %2012 = vmatprep.subr.mxu0 0.0
      %2013 = vmatpush2.msra.mxu0 0.0
      %2014 = vmatprep.subr.mxu0 0.0
      %2015 = vmatpush2.msra.mxu0 0.0
      %2016 = vmatprep.subr.mxu0 0.0
      %2017 = vmatpush2.msra.mxu0 0.0
      %2018 = vmatprep.subr.mxu0 0.0
      %2019 = vmatpush2.msra.mxu0 0.0
      %2020 = vmatprep.subr.mxu0 0.0
      %2021 = vmatpush2.msra.mxu0 0.0
      %2022 = vmatprep.subr.mxu0 0.0
      %2023 = vmatpush2.msra.mxu0 0.0
      %2024 = vmatprep.subr.mxu0 0.0
      %2025 = vmatpush2.msra.mxu0 0.0
      %2026 = vmatprep.subr.mxu0 0.0
      %2027 = vmatpush2.msra.mxu0 0.0
      %2028 = vmatprep.subr.mxu0 0.0
      %2029 = vmatpush2.msra.mxu0 0.0
      %2030 = vmatprep.mubr.f32.mxu0 0.0
      %2031 = vmatmul.mubr.f32.gmra.mxu0 %v1964
      %v2032 = vpop.f32.mrf.mxu0
      %v2033 = vadd.f32 %v1960, %v2032
      %v2034 = vpop.f32.mrf.mxu0
      %2035 = vdwg.mxu0
      %s2036 = scalar_lea.vmem %s7, 8
      %v2037 = vld [vmem:[%s2036] sm:$0xf]
      %v2039 = vsel %vm1723, %v2037, 0
      %2041 = vmatprep.subr.mxu0 0.0
      %2042 = vmatpush1.msra.mxu0 0.0
      %2043 = vmatprep.subr.mxu0 0.0
      %2044 = vmatpush1.msra.mxu0 0.0
      %2045 = vmatprep.subr.mxu0 0.0
      %2046 = vmatpush1.msra.mxu0 0.0
      %2047 = vmatprep.subr.mxu0 0.0
      %2048 = vmatpush1.msra.mxu0 0.0
      %2049 = vmatprep.subr.mxu0 0.0
      %2050 = vmatpush1.msra.mxu0 0.0
      %2051 = vmatprep.subr.mxu0 0.0
      %2052 = vmatpush1.msra.mxu0 0.0
      %2053 = vmatprep.subr.mxu0 0.0
      %2054 = vmatpush1.msra.mxu0 0.0
      %2055 = vmatprep.subr.mxu0 0.0
      %2056 = vmatpush1.msra.mxu0 0.0
      %2057 = vmatprep.subr.mxu0 0.0
      %2058 = vmatpush1.msra.mxu0 0.0
      %2059 = vmatprep.subr.mxu0 0.0
      %2060 = vmatpush1.msra.mxu0 0.0
      %2061 = vmatprep.subr.mxu0 0.0
      %2062 = vmatpush1.msra.mxu0 0.0
      %2063 = vmatprep.subr.mxu0 0.0
      %2064 = vmatpush1.msra.mxu0 0.0
      %2065 = vmatprep.subr.mxu0 0.0
      %2066 = vmatpush1.msra.mxu0 0.0
      %2067 = vmatprep.subr.mxu0 0.0
      %2068 = vmatpush1.msra.mxu0 0.0
      %2069 = vmatprep.subr.mxu0 0.0
      %2070 = vmatpush1.msra.mxu0 0.0
      %2071 = vmatprep.subr.mxu0 0.0
      %2072 = vmatpush1.msra.mxu0 %v1721
      %2073 = vmatprep.subr.mxu0 0.0
      %2074 = vmatpush2.msra.mxu0 0.0
      %2075 = vmatprep.subr.mxu0 0.0
      %2076 = vmatpush2.msra.mxu0 0.0
      %2077 = vmatprep.subr.mxu0 0.0
      %2078 = vmatpush2.msra.mxu0 0.0
      %2079 = vmatprep.subr.mxu0 0.0
      %2080 = vmatpush2.msra.mxu0 0.0
      %2081 = vmatprep.subr.mxu0 0.0
      %2082 = vmatpush2.msra.mxu0 0.0
      %2083 = vmatprep.subr.mxu0 0.0
      %2084 = vmatpush2.msra.mxu0 0.0
      %2085 = vmatprep.subr.mxu0 0.0
      %2086 = vmatpush2.msra.mxu0 0.0
      %2087 = vmatprep.subr.mxu0 0.0
      %2088 = vmatpush2.msra.mxu0 0.0
      %2089 = vmatprep.subr.mxu0 0.0
      %2090 = vmatpush2.msra.mxu0 0.0
      %2091 = vmatprep.subr.mxu0 0.0
      %2092 = vmatpush2.msra.mxu0 0.0
      %2093 = vmatprep.subr.mxu0 0.0
      %2094 = vmatpush2.msra.mxu0 0.0
      %2095 = vmatprep.subr.mxu0 0.0
      %2096 = vmatpush2.msra.mxu0 0.0
      %2097 = vmatprep.subr.mxu0 0.0
      %2098 = vmatpush2.msra.mxu0 0.0
      %2099 = vmatprep.subr.mxu0 0.0
      %2100 = vmatpush2.msra.mxu0 0.0
      %2101 = vmatprep.subr.mxu0 0.0
      %2102 = vmatpush2.msra.mxu0 0.0
      %2103 = vmatprep.subr.mxu0 0.0
      %2104 = vmatpush2.msra.mxu0 0.0
      %2105 = vmatprep.mubr.f32.mxu0 0.0
      %2106 = vmatmul.mubr.f32.gmra.mxu0 %v2039
      %v2107 = vpop.f32.mrf.mxu0
      %v2108 = vadd.f32 0.0, %v2107
      %v2109 = vpop.f32.mrf.mxu0
      %2110 = vdwg.mxu0
      %s2111 = scalar_lea.vmem %s8, 128
      %v2112 = vld [vmem:[%s2111] sm:$0xff]
      %v2113 = vld [vmem:[%s2111 + $0x8] sm:$0xff]
      %v2114 = vld [vmem:[%s2111 + $0x10] sm:$0xff]
      %v2115 = vld [vmem:[%s2111 + $0x18] sm:$0xff]
      %v2116 = vld [vmem:[%s2111 + $0x20] sm:$0xff]
      %v2117 = vld [vmem:[%s2111 + $0x28] sm:$0xff]
      %v2118 = vld [vmem:[%s2111 + $0x30] sm:$0xff]
      %v2119 = vld [vmem:[%s2111 + $0x38] sm:$0xff]
      %v2121 = vsel %vm1889, %v2108, 0
      %2123 = vmatprep.subr.mxu0 0.0
      %2124 = vmatpush1.msra.mxu0 0.0
      %2125 = vmatprep.subr.mxu0 0.0
      %2126 = vmatpush1.msra.mxu0 0.0
      %2127 = vmatprep.subr.mxu0 0.0
      %2128 = vmatpush1.msra.mxu0 0.0
      %2129 = vmatprep.subr.mxu0 0.0
      %2130 = vmatpush1.msra.mxu0 0.0
      %2131 = vmatprep.subr.mxu0 0.0
      %2132 = vmatpush1.msra.mxu0 0.0
      %2133 = vmatprep.subr.mxu0 0.0
      %2134 = vmatpush1.msra.mxu0 0.0
      %2135 = vmatprep.subr.mxu0 0.0
      %2136 = vmatpush1.msra.mxu0 0.0
      %2137 = vmatprep.subr.mxu0 0.0
      %2138 = vmatpush1.msra.mxu0 0.0
      %2139 = vmatprep.subr.mxu0 0.0
      %2140 = vmatpush1.msra.mxu0 %v2119
      %2141 = vmatprep.subr.mxu0 0.0
      %2142 = vmatpush1.msra.mxu0 %v2118
      %2143 = vmatprep.subr.mxu0 0.0
      %2144 = vmatpush1.msra.mxu0 %v2117
      %2145 = vmatprep.subr.mxu0 0.0
      %2146 = vmatpush1.msra.mxu0 %v2116
      %2147 = vmatprep.subr.mxu0 0.0
      %2148 = vmatpush1.msra.mxu0 %v2115
      %2149 = vmatprep.subr.mxu0 0.0
      %2150 = vmatpush1.msra.mxu0 %v2114
      %2151 = vmatprep.subr.mxu0 0.0
      %2152 = vmatpush1.msra.mxu0 %v2113
      %2153 = vmatprep.subr.mxu0 0.0
      %2154 = vmatpush1.msra.mxu0 %v2112
      %2155 = vmatprep.subr.mxu0 0.0
      %2156 = vmatpush2.msra.mxu0 0.0
      %2157 = vmatprep.subr.mxu0 0.0
      %2158 = vmatpush2.msra.mxu0 0.0
      %2159 = vmatprep.subr.mxu0 0.0
      %2160 = vmatpush2.msra.mxu0 0.0
      %2161 = vmatprep.subr.mxu0 0.0
      %2162 = vmatpush2.msra.mxu0 0.0
      %2163 = vmatprep.subr.mxu0 0.0
      %2164 = vmatpush2.msra.mxu0 0.0
      %2165 = vmatprep.subr.mxu0 0.0
      %2166 = vmatpush2.msra.mxu0 0.0
      %2167 = vmatprep.subr.mxu0 0.0
      %2168 = vmatpush2.msra.mxu0 0.0
      %2169 = vmatprep.subr.mxu0 0.0
      %2170 = vmatpush2.msra.mxu0 0.0
      %2171 = vmatprep.subr.mxu0 0.0
      %2172 = vmatpush2.msra.mxu0 0.0
      %2173 = vmatprep.subr.mxu0 0.0
      %2174 = vmatpush2.msra.mxu0 0.0
      %2175 = vmatprep.subr.mxu0 0.0
      %2176 = vmatpush2.msra.mxu0 0.0
      %2177 = vmatprep.subr.mxu0 0.0
      %2178 = vmatpush2.msra.mxu0 0.0
      %2179 = vmatprep.subr.mxu0 0.0
      %2180 = vmatpush2.msra.mxu0 0.0
      %2181 = vmatprep.subr.mxu0 0.0
      %2182 = vmatpush2.msra.mxu0 0.0
      %2183 = vmatprep.subr.mxu0 0.0
      %2184 = vmatpush2.msra.mxu0 0.0
      %2185 = vmatprep.subr.mxu0 0.0
      %2186 = vmatpush2.msra.mxu0 0.0
      %2187 = vmatprep.mubr.f32.mxu0 0.0
      %2188 = vmatmul.mubr.f32.gmra.mxu0 %v2121
      %v2189 = vpop.f32.mrf.mxu0
      %v2190 = vadd.f32 0.0, %v2189
      %v2191 = vpop.f32.mrf.mxu0
      %2192 = vdwg.mxu0
      %v2193 = vadd.f32 %v2033, %v2190
      %s2194 = scalar_lea.vmem %s7, 12
      %v2195 = vld [vmem:[%s2194] sm:$0xf]
      %v2197 = vsel %vm1723, %v2195, 0
      %2199 = vmatprep.subr.mxu0 0.0
      %2200 = vmatpush1.msra.mxu0 0.0
      %2201 = vmatprep.subr.mxu0 0.0
      %2202 = vmatpush1.msra.mxu0 0.0
      %2203 = vmatprep.subr.mxu0 0.0
      %2204 = vmatpush1.msra.mxu0 0.0
      %2205 = vmatprep.subr.mxu0 0.0
      %2206 = vmatpush1.msra.mxu0 0.0
      %2207 = vmatprep.subr.mxu0 0.0
      %2208 = vmatpush1.msra.mxu0 0.0
      %2209 = vmatprep.subr.mxu0 0.0
      %2210 = vmatpush1.msra.mxu0 0.0
      %2211 = vmatprep.subr.mxu0 0.0
      %2212 = vmatpush1.msra.mxu0 0.0
      %2213 = vmatprep.subr.mxu0 0.0
      %2214 = vmatpush1.msra.mxu0 0.0
      %2215 = vmatprep.subr.mxu0 0.0
      %2216 = vmatpush1.msra.mxu0 0.0
      %2217 = vmatprep.subr.mxu0 0.0
      %2218 = vmatpush1.msra.mxu0 0.0
      %2219 = vmatprep.subr.mxu0 0.0
      %2220 = vmatpush1.msra.mxu0 0.0
      %2221 = vmatprep.subr.mxu0 0.0
      %2222 = vmatpush1.msra.mxu0 0.0
      %2223 = vmatprep.subr.mxu0 0.0
      %2224 = vmatpush1.msra.mxu0 0.0
      %2225 = vmatprep.subr.mxu0 0.0
      %2226 = vmatpush1.msra.mxu0 0.0
      %2227 = vmatprep.subr.mxu0 0.0
      %2228 = vmatpush1.msra.mxu0 0.0
      %2229 = vmatprep.subr.mxu0 0.0
      %2230 = vmatpush1.msra.mxu0 %v1721
      %2231 = vmatprep.subr.mxu0 0.0
      %2232 = vmatpush2.msra.mxu0 0.0
      %2233 = vmatprep.subr.mxu0 0.0
      %2234 = vmatpush2.msra.mxu0 0.0
      %2235 = vmatprep.subr.mxu0 0.0
      %2236 = vmatpush2.msra.mxu0 0.0
      %2237 = vmatprep.subr.mxu0 0.0
      %2238 = vmatpush2.msra.mxu0 0.0
      %2239 = vmatprep.subr.mxu0 0.0
      %2240 = vmatpush2.msra.mxu0 0.0
      %2241 = vmatprep.subr.mxu0 0.0
      %2242 = vmatpush2.msra.mxu0 0.0
      %2243 = vmatprep.subr.mxu0 0.0
      %2244 = vmatpush2.msra.mxu0 0.0
      %2245 = vmatprep.subr.mxu0 0.0
      %2246 = vmatpush2.msra.mxu0 0.0
      %2247 = vmatprep.subr.mxu0 0.0
      %2248 = vmatpush2.msra.mxu0 0.0
      %2249 = vmatprep.subr.mxu0 0.0
      %2250 = vmatpush2.msra.mxu0 0.0
      %2251 = vmatprep.subr.mxu0 0.0
      %2252 = vmatpush2.msra.mxu0 0.0
      %2253 = vmatprep.subr.mxu0 0.0
      %2254 = vmatpush2.msra.mxu0 0.0
      %2255 = vmatprep.subr.mxu0 0.0
      %2256 = vmatpush2.msra.mxu0 0.0
      %2257 = vmatprep.subr.mxu0 0.0
      %2258 = vmatpush2.msra.mxu0 0.0
      %2259 = vmatprep.subr.mxu0 0.0
      %2260 = vmatpush2.msra.mxu0 0.0
      %2261 = vmatprep.subr.mxu0 0.0
      %2262 = vmatpush2.msra.mxu0 0.0
      %2263 = vmatprep.mubr.f32.mxu0 0.0
      %2264 = vmatmul.mubr.f32.gmra.mxu0 %v2197
      %v2265 = vpop.f32.mrf.mxu0
      %v2266 = vadd.f32 0.0, %v2265
      %v2267 = vpop.f32.mrf.mxu0
      %2268 = vdwg.mxu0
      %s2269 = scalar_lea.vmem %s8, 192
      %v2270 = vld [vmem:[%s2269] sm:$0xff]
      %v2271 = vld [vmem:[%s2269 + $0x8] sm:$0xff]
      %v2272 = vld [vmem:[%s2269 + $0x10] sm:$0xff]
      %v2273 = vld [vmem:[%s2269 + $0x18] sm:$0xff]
      %v2274 = vld [vmem:[%s2269 + $0x20] sm:$0xff]
      %v2275 = vld [vmem:[%s2269 + $0x28] sm:$0xff]
      %v2276 = vld [vmem:[%s2269 + $0x30] sm:$0xff]
      %v2277 = vld [vmem:[%s2269 + $0x38] sm:$0xff]
      %v2279 = vsel %vm1889, %v2266, 0
      %2281 = vmatprep.subr.mxu0 0.0
      %2282 = vmatpush1.msra.mxu0 0.0
      %2283 = vmatprep.subr.mxu0 0.0
      %2284 = vmatpush1.msra.mxu0 0.0
      %2285 = vmatprep.subr.mxu0 0.0
      %2286 = vmatpush1.msra.mxu0 0.0
      %2287 = vmatprep.subr.mxu0 0.0
      %2288 = vmatpush1.msra.mxu0 0.0
      %2289 = vmatprep.subr.mxu0 0.0
      %2290 = vmatpush1.msra.mxu0 0.0
      %2291 = vmatprep.subr.mxu0 0.0
      %2292 = vmatpush1.msra.mxu0 0.0
      %2293 = vmatprep.subr.mxu0 0.0
      %2294 = vmatpush1.msra.mxu0 0.0
      %2295 = vmatprep.subr.mxu0 0.0
      %2296 = vmatpush1.msra.mxu0 0.0
      %2297 = vmatprep.subr.mxu0 0.0
      %2298 = vmatpush1.msra.mxu0 %v2277
      %2299 = vmatprep.subr.mxu0 0.0
      %2300 = vmatpush1.msra.mxu0 %v2276
      %2301 = vmatprep.subr.mxu0 0.0
      %2302 = vmatpush1.msra.mxu0 %v2275
      %2303 = vmatprep.subr.mxu0 0.0
      %2304 = vmatpush1.msra.mxu0 %v2274
      %2305 = vmatprep.subr.mxu0 0.0
      %2306 = vmatpush1.msra.mxu0 %v2273
      %2307 = vmatprep.subr.mxu0 0.0
      %2308 = vmatpush1.msra.mxu0 %v2272
      %2309 = vmatprep.subr.mxu0 0.0
      %2310 = vmatpush1.msra.mxu0 %v2271
      %2311 = vmatprep.subr.mxu0 0.0
      %2312 = vmatpush1.msra.mxu0 %v2270
      %2313 = vmatprep.subr.mxu0 0.0
      %2314 = vmatpush2.msra.mxu0 0.0
      %2315 = vmatprep.subr.mxu0 0.0
      %2316 = vmatpush2.msra.mxu0 0.0
      %2317 = vmatprep.subr.mxu0 0.0
      %2318 = vmatpush2.msra.mxu0 0.0
      %2319 = vmatprep.subr.mxu0 0.0
      %2320 = vmatpush2.msra.mxu0 0.0
      %2321 = vmatprep.subr.mxu0 0.0
      %2322 = vmatpush2.msra.mxu0 0.0
      %2323 = vmatprep.subr.mxu0 0.0
      %2324 = vmatpush2.msra.mxu0 0.0
      %2325 = vmatprep.subr.mxu0 0.0
      %2326 = vmatpush2.msra.mxu0 0.0
      %2327 = vmatprep.subr.mxu0 0.0
      %2328 = vmatpush2.msra.mxu0 0.0
      %2329 = vmatprep.subr.mxu0 0.0
      %2330 = vmatpush2.msra.mxu0 0.0
      %2331 = vmatprep.subr.mxu0 0.0
      %2332 = vmatpush2.msra.mxu0 0.0
      %2333 = vmatprep.subr.mxu0 0.0
      %2334 = vmatpush2.msra.mxu0 0.0
      %2335 = vmatprep.subr.mxu0 0.0
      %2336 = vmatpush2.msra.mxu0 0.0
      %2337 = vmatprep.subr.mxu0 0.0
      %2338 = vmatpush2.msra.mxu0 0.0
      %2339 = vmatprep.subr.mxu0 0.0
      %2340 = vmatpush2.msra.mxu0 0.0
      %2341 = vmatprep.subr.mxu0 0.0
      %2342 = vmatpush2.msra.mxu0 0.0
      %2343 = vmatprep.subr.mxu0 0.0
      %2344 = vmatpush2.msra.mxu0 0.0
      %2345 = vmatprep.mubr.f32.mxu0 0.0
      %2346 = vmatmul.mubr.f32.gmra.mxu0 %v2279
      %v2347 = vpop.f32.mrf.mxu0
      %v2348 = vadd.f32 0.0, %v2347
      %v2349 = vpop.f32.mrf.mxu0
      %2350 = vdwg.mxu0
      %v2351 = vadd.f32 %v2193, %v2348
      %s2352 = scalar_lea.vmem %s7, 16
      %v2353 = vld [vmem:[%s2352] sm:$0xf]
      %v2355 = vsel %vm1723, %v2353, 0
      %2357 = vmatprep.subr.mxu0 0.0
      %2358 = vmatpush1.msra.mxu0 0.0
      %2359 = vmatprep.subr.mxu0 0.0
      %2360 = vmatpush1.msra.mxu0 0.0
      %2361 = vmatprep.subr.mxu0 0.0
      %2362 = vmatpush1.msra.mxu0 0.0
      %2363 = vmatprep.subr.mxu0 0.0
      %2364 = vmatpush1.msra.mxu0 0.0
      %2365 = vmatprep.subr.mxu0 0.0
      %2366 = vmatpush1.msra.mxu0 0.0
      %2367 = vmatprep.subr.mxu0 0.0
      %2368 = vmatpush1.msra.mxu0 0.0
      %2369 = vmatprep.subr.mxu0 0.0
      %2370 = vmatpush1.msra.mxu0 0.0
      %2371 = vmatprep.subr.mxu0 0.0
      %2372 = vmatpush1.msra.mxu0 0.0
      %2373 = vmatprep.subr.mxu0 0.0
      %2374 = vmatpush1.msra.mxu0 0.0
      %2375 = vmatprep.subr.mxu0 0.0
      %2376 = vmatpush1.msra.mxu0 0.0
      %2377 = vmatprep.subr.mxu0 0.0
      %2378 = vmatpush1.msra.mxu0 0.0
      %2379 = vmatprep.subr.mxu0 0.0
      %2380 = vmatpush1.msra.mxu0 0.0
      %2381 = vmatprep.subr.mxu0 0.0
      %2382 = vmatpush1.msra.mxu0 0.0
      %2383 = vmatprep.subr.mxu0 0.0
      %2384 = vmatpush1.msra.mxu0 0.0
      %2385 = vmatprep.subr.mxu0 0.0
      %2386 = vmatpush1.msra.mxu0 0.0
      %2387 = vmatprep.subr.mxu0 0.0
      %2388 = vmatpush1.msra.mxu0 %v1721
      %2389 = vmatprep.subr.mxu0 0.0
      %2390 = vmatpush2.msra.mxu0 0.0
      %2391 = vmatprep.subr.mxu0 0.0
      %2392 = vmatpush2.msra.mxu0 0.0
      %2393 = vmatprep.subr.mxu0 0.0
      %2394 = vmatpush2.msra.mxu0 0.0
      %2395 = vmatprep.subr.mxu0 0.0
      %2396 = vmatpush2.msra.mxu0 0.0
      %2397 = vmatprep.subr.mxu0 0.0
      %2398 = vmatpush2.msra.mxu0 0.0
      %2399 = vmatprep.subr.mxu0 0.0
      %2400 = vmatpush2.msra.mxu0 0.0
      %2401 = vmatprep.subr.mxu0 0.0
      %2402 = vmatpush2.msra.mxu0 0.0
      %2403 = vmatprep.subr.mxu0 0.0
      %2404 = vmatpush2.msra.mxu0 0.0
      %2405 = vmatprep.subr.mxu0 0.0
      %2406 = vmatpush2.msra.mxu0 0.0
      %2407 = vmatprep.subr.mxu0 0.0
      %2408 = vmatpush2.msra.mxu0 0.0
      %2409 = vmatprep.subr.mxu0 0.0
      %2410 = vmatpush2.msra.mxu0 0.0
      %2411 = vmatprep.subr.mxu0 0.0
      %2412 = vmatpush2.msra.mxu0 0.0
      %2413 = vmatprep.subr.mxu0 0.0
      %2414 = vmatpush2.msra.mxu0 0.0
      %2415 = vmatprep.subr.mxu0 0.0
      %2416 = vmatpush2.msra.mxu0 0.0
      %2417 = vmatprep.subr.mxu0 0.0
      %2418 = vmatpush2.msra.mxu0 0.0
      %2419 = vmatprep.subr.mxu0 0.0
      %2420 = vmatpush2.msra.mxu0 0.0
      %2421 = vmatprep.mubr.f32.mxu0 0.0
      %2422 = vmatmul.mubr.f32.gmra.mxu0 %v2355
      %v2423 = vpop.f32.mrf.mxu0
      %v2424 = vadd.f32 0.0, %v2423
      %v2425 = vpop.f32.mrf.mxu0
      %2426 = vdwg.mxu0
      %s2427 = scalar_lea.vmem %s8, 256
      %v2428 = vld [vmem:[%s2427] sm:$0xff]
      %v2429 = vld [vmem:[%s2427 + $0x8] sm:$0xff]
      %v2430 = vld [vmem:[%s2427 + $0x10] sm:$0xff]
      %v2431 = vld [vmem:[%s2427 + $0x18] sm:$0xff]
      %v2432 = vld [vmem:[%s2427 + $0x20] sm:$0xff]
      %v2433 = vld [vmem:[%s2427 + $0x28] sm:$0xff]
      %v2434 = vld [vmem:[%s2427 + $0x30] sm:$0xff]
      %v2435 = vld [vmem:[%s2427 + $0x38] sm:$0xff]
      %v2437 = vsel %vm1889, %v2424, 0
      %2439 = vmatprep.subr.mxu0 0.0
      %2440 = vmatpush1.msra.mxu0 0.0
      %2441 = vmatprep.subr.mxu0 0.0
      %2442 = vmatpush1.msra.mxu0 0.0
      %2443 = vmatprep.subr.mxu0 0.0
      %2444 = vmatpush1.msra.mxu0 0.0
      %2445 = vmatprep.subr.mxu0 0.0
      %2446 = vmatpush1.msra.mxu0 0.0
      %2447 = vmatprep.subr.mxu0 0.0
      %2448 = vmatpush1.msra.mxu0 0.0
      %2449 = vmatprep.subr.mxu0 0.0
      %2450 = vmatpush1.msra.mxu0 0.0
      %2451 = vmatprep.subr.mxu0 0.0
      %2452 = vmatpush1.msra.mxu0 0.0
      %2453 = vmatprep.subr.mxu0 0.0
      %2454 = vmatpush1.msra.mxu0 0.0
      %2455 = vmatprep.subr.mxu0 0.0
      %2456 = vmatpush1.msra.mxu0 %v2435
      %2457 = vmatprep.subr.mxu0 0.0
      %2458 = vmatpush1.msra.mxu0 %v2434
      %2459 = vmatprep.subr.mxu0 0.0
      %2460 = vmatpush1.msra.mxu0 %v2433
      %2461 = vmatprep.subr.mxu0 0.0
      %2462 = vmatpush1.msra.mxu0 %v2432
      %2463 = vmatprep.subr.mxu0 0.0
      %2464 = vmatpush1.msra.mxu0 %v2431
      %2465 = vmatprep.subr.mxu0 0.0
      %2466 = vmatpush1.msra.mxu0 %v2430
      %2467 = vmatprep.subr.mxu0 0.0
      %2468 = vmatpush1.msra.mxu0 %v2429
      %2469 = vmatprep.subr.mxu0 0.0
      %2470 = vmatpush1.msra.mxu0 %v2428
      %2471 = vmatprep.subr.mxu0 0.0
      %2472 = vmatpush2.msra.mxu0 0.0
      %2473 = vmatprep.subr.mxu0 0.0
      %2474 = vmatpush2.msra.mxu0 0.0
      %2475 = vmatprep.subr.mxu0 0.0
      %2476 = vmatpush2.msra.mxu0 0.0
      %2477 = vmatprep.subr.mxu0 0.0
      %2478 = vmatpush2.msra.mxu0 0.0
      %2479 = vmatprep.subr.mxu0 0.0
      %2480 = vmatpush2.msra.mxu0 0.0
      %2481 = vmatprep.subr.mxu0 0.0
      %2482 = vmatpush2.msra.mxu0 0.0
      %2483 = vmatprep.subr.mxu0 0.0
      %2484 = vmatpush2.msra.mxu0 0.0
      %2485 = vmatprep.subr.mxu0 0.0
      %2486 = vmatpush2.msra.mxu0 0.0
      %2487 = vmatprep.subr.mxu0 0.0
      %2488 = vmatpush2.msra.mxu0 0.0
      %2489 = vmatprep.subr.mxu0 0.0
      %2490 = vmatpush2.msra.mxu0 0.0
      %2491 = vmatprep.subr.mxu0 0.0
      %2492 = vmatpush2.msra.mxu0 0.0
      %2493 = vmatprep.subr.mxu0 0.0
      %2494 = vmatpush2.msra.mxu0 0.0
      %2495 = vmatprep.subr.mxu0 0.0
      %2496 = vmatpush2.msra.mxu0 0.0
      %2497 = vmatprep.subr.mxu0 0.0
      %2498 = vmatpush2.msra.mxu0 0.0
      %2499 = vmatprep.subr.mxu0 0.0
      %2500 = vmatpush2.msra.mxu0 0.0
      %2501 = vmatprep.subr.mxu0 0.0
      %2502 = vmatpush2.msra.mxu0 0.0
      %2503 = vmatprep.mubr.f32.mxu0 0.0
      %2504 = vmatmul.mubr.f32.gmra.mxu0 %v2437
      %v2505 = vpop.f32.mrf.mxu0
      %v2506 = vadd.f32 0.0, %v2505
      %v2507 = vpop.f32.mrf.mxu0
      %2508 = vdwg.mxu0
      %v2509 = vadd.f32 %v2351, %v2506
      %v2510 = vld [vmem:[%s9] sm:$0x1]
      %v2512 = vlaneseq
      %v2513 = vshrl.u32 %v2512, 7
      %v2514 = vsub.s32 0, %v2513
      %v2515 = vrot.slane %v2510, %v2514
      %v2517 = vadd.f32 %v2509, %v2515
      %vm2518 = vcmask 257024
      %2519 = vst.msk [vmem:[%s357] sm:$0xf] %vm2518, %v2517
      %p2520 = scmp.lt.s32.totalorder %s21, 1
      %s2521 = scalar_select %p2520, %s21, 1
      %s2522 = smul.addr %s2521, 4
      %s2523 = scalar_lea.vmem %s10, %s2522
      // Predicated region
      $region61: #{analysis_hyper_net.1} parent=59 // pred_check
        %p2524 = pneg %p254
      $region62: #{analysis_hyper_net.1} parent=59 // pred_check_branch
        %2526 = sbr.rel (%p2524) target = $region64
      $region63: #{analysis_hyper_net.1} parent=59 // pred_region
        _
      $region64: #{analysis_hyper_net.1} parent=59 // pred_fallthru
        _
    $region60: #{analysis_hyper_net.1} parent=5 // pred_fallthru
      _
    %p2527 = scmp.le.s32.totalorder 2, %s16
    // Predicated region
    $region65: #{analysis_hyper_net.1} parent=5 // pred_check
      %p2528 = pneg %p2527
    $region66: #{analysis_hyper_net.1} parent=5 // pred_check_branch
      %2530 = sbr.rel (%p2528) target = $region68
    $region67: #{analysis_hyper_net.1} parent=5 // pred_region
      %s2531 = ssub.s32 %s16, 2
      // Predicated region
      $region69: #{analysis_hyper_net.1} parent=67 // pred_check
        %p2532 = pneg %p260
      $region70: #{analysis_hyper_net.1} parent=67 // pred_check_branch
        %2534 = sbr.rel (%p2532) target = $region72
      $region71: #{analysis_hyper_net.1} parent=67 // pred_region
        %p2535 = scmp.lt.s32.totalorder %s22, 1
        %s2536 = scalar_select %p2535, %s22, 1
        %s2537 = smul.addr %s2536, 4
        %s2538 = scalar_lea.vmem %s10, %s2537
      $region72: #{analysis_hyper_net.1} parent=67 // pred_fallthru
        _
    $region68: #{analysis_hyper_net.1} parent=5 // pred_fallthru
      _
  $region6: #{analysis_hyper_net.1} parent=0 // loop_footer
    %s20 = sadd.s32 1, %s16
  $region7: #{analysis_hyper_net.1} parent=0 // loop_footer_branch
    %15 = sbr.rel target = $region3
  $region8: #{analysis_hyper_net.1} parent=0 // loop_exit
    _

</llo_original>
